<compile_context>
chip_gen: v7x
topology: tpu7x:2x2x1
jax: 0.10.0
libtpu: 0.0.40
codegen_flags: <defaults>
</compile_context>

<pallas_src>
import functools

import jax
import jax.numpy as jnp
from jax.experimental import pallas as pl
from jax.experimental.pallas import tpu as pltpu


# ---------------------------------------------------------------------------
# helpers
# ---------------------------------------------------------------------------
def _round_up(x, m):
    return ((x + m - 1) // m) * m


_VMEM_LIMIT = 32 * 1024 * 1024  # safe on v5e/v6e/v7x


# ---------------------------------------------------------------------------
# Pallas kernels
# ---------------------------------------------------------------------------
def _bmm_kernel(a_ref, w_ref, b_ref, o_ref, *, act):
    """One-pass matmul + bias + activation.  Grid = (G, Mt); K/N not tiled."""
    r = jnp.dot(a_ref[...], w_ref[...], preferred_element_type=jnp.float32)
    r = r + b_ref[0:1, :]                      # f32 epilogue
    if act == "relu":
        r = jnp.maximum(r, 0.0)
    elif act == "sigmoid":
        r = jax.nn.sigmoid(r)
    o_ref[...] = r.astype(o_ref.dtype)


def _proj_sum_kernel(a_ref, w_ref, b_ref, o_ref):
    """sum_s relu(A_s @ W_s + b_s) with the whole weight stack VMEM-resident.

    a_ref : (S, tm, 128) bf16   w_ref : (S, 128, 128) bf16   b_ref : (S, 8, 128) f32
    """
    s_total = a_ref.shape[0]
    acc = jnp.zeros(o_ref.shape, jnp.float32)
    for s in range(s_total):                   # static unroll, S = 8
        r = jnp.dot(a_ref[s], w_ref[s], preferred_element_type=jnp.float32)
        r = r + b_ref[s][0:1, :]
        acc = acc + jnp.maximum(r, 0.0)
    o_ref[...] = acc.astype(o_ref.dtype)


# ---------------------------------------------------------------------------
# Pallas wrappers
# ---------------------------------------------------------------------------
def batched_matmul_bias_act(a, w_p, b_p, act="none", out_dtype=jnp.bfloat16):
    """act((a @ w_p) + b_p) per leading batch slice.

    a   : (G, M, Kp)  bf16 (already K-padded by the caller / im2col)
    w_p : (G, Kp, Np) bf16, pre-padded at init
    b_p : (G, 8, Np)  f32,  pre-padded at init
    ->    (G, M, Np)  out_dtype (bf16 by default)
    """
    a = a.astype(jnp.bfloat16)
    G, M, Kp = a.shape
    _, Kp_w, Np = w_p.shape
    assert Kp == Kp_w, (Kp, Kp_w)

    tm = min(512, _round_up(M, 16))            # bf16 sublane pack, floor 16
    Mp = _round_up(M, tm)
    if Mp != M:
        a = jnp.pad(a, ((0, 0), (0, Mp - M), (0, 0)))

    out = pl.pallas_call(
        functools.partial(_bmm_kernel, act=act),
        out_shape=jax.ShapeDtypeStruct((G, Mp, Np), out_dtype),
        grid_spec=pltpu.PrefetchScalarGridSpec(
            num_scalar_prefetch=0,
            grid=(G, Mp // tm),
            in_specs=[
                pl.BlockSpec((None, tm, Kp), lambda g, i: (g, i, 0)),
                pl.BlockSpec((None, Kp, Np), lambda g, i: (g, 0, 0)),
                pl.BlockSpec((None, 8, Np), lambda g, i: (g, 0, 0)),
            ],
            out_specs=pl.BlockSpec((None, tm, Np), lambda g, i: (g, i, 0)),
        ),
        compiler_params=pltpu.CompilerParams(
            dimension_semantics=("parallel", "parallel"),
            vmem_limit_bytes=_VMEM_LIMIT),
    )(a, w_p, b_p)
    return out[:, :M, :]


def mri_proj_sum(a, w_p, b_p):
    """Fused 8-way 1x1 projection + per-slice ReLU + sum.

    a   : (S, M, 128)   bf16
    w_p : (S, 128, 128) bf16 (whole stack kept resident in VMEM)
    b_p : (S, 8, 128)   f32
    ->    (M, 128)      bf16
    """
    S, M, Kp = a.shape
    _, _, Np = w_p.shape
    tm = min(512, _round_up(M, 16))
    Mp = _round_up(M, tm)
    if Mp != M:
        a = jnp.pad(a, ((0, 0), (0, Mp - M), (0, 0)))

    out = pl.pallas_call(
        _proj_sum_kernel,
        out_shape=jax.ShapeDtypeStruct((Mp, Np), jnp.bfloat16),
        grid_spec=pltpu.PrefetchScalarGridSpec(
            num_scalar_prefetch=0,
            grid=(Mp // tm,),
            in_specs=[
                pl.BlockSpec((S, tm, Kp), lambda i: (0, i, 0)),
                pl.BlockSpec((S, Kp, Np), lambda i: (0, 0, 0)),   # resident
                pl.BlockSpec((S, 8, Np), lambda i: (0, 0, 0)),    # resident
            ],
            out_specs=pl.BlockSpec((tm, Np), lambda i: (i, 0)),
        ),
        compiler_params=pltpu.CompilerParams(
            dimension_semantics=("parallel",),
            vmem_limit_bytes=_VMEM_LIMIT),
    )(a, w_p, b_p)
    return out[:M]


# ---------------------------------------------------------------------------
# Convolution = im2col (XLA glue) + Pallas matmul (hot path)
# ---------------------------------------------------------------------------
def _im2col(x, kh, kw, stride, pad, Kp=None):
    """Patch extraction; folds the bf16 cast and the K-pad into the concat."""
    B, H, W, C = x.shape
    xp = jnp.pad(x, ((0, 0), (pad, pad), (pad, pad), (0, 0))).astype(jnp.bfloat16)
    Ho = (H + 2 * pad - kh) // stride + 1
    Wo = (W + 2 * pad - kw) // stride + 1
    cols = []
    for i in range(kh):
        for j in range(kw):
            cols.append(xp[:, i:i + (Ho - 1) * stride + 1:stride,
                           j:j + (Wo - 1) * stride + 1:stride, :])
    K = kh * kw * C
    if Kp is not None and Kp > K:
        cols.append(jnp.zeros((B, Ho, Wo, Kp - K), jnp.bfloat16))
    patches = jnp.concatenate(cols, axis=-1)       # (B, Ho, Wo, Kp)
    return patches.reshape(B * Ho * Wo, patches.shape[-1]), Ho, Wo


def conv2d(x_nhwc, w_packed, b_packed, kh, kw, stride, pad, cout,
           act="none", out_dtype=jnp.bfloat16):
    """Single conv via im2col + one batched (G=1) Pallas matmul."""
    Kp = w_packed.shape[0]
    patches, Ho, Wo = _im2col(x_nhwc, kh, kw, stride, pad, Kp=Kp)
    out = batched_matmul_bias_act(patches[None], w_packed[None],
                                  b_packed[None], act=act,
                                  out_dtype=out_dtype)[0]
    B = x_nhwc.shape[0]
    M = B * Ho * Wo
    return out[:M, :cout].reshape(B, Ho, Wo, cout)


# ---------------------------------------------------------------------------
# Network definition (deterministic synthetic parameters, packed at init)
# ---------------------------------------------------------------------------
_SFE_CHANS = [8, 16, 32, 64]
_MRI_CH = 16


def init_params(seed=0):
    key = jax.random.PRNGKey(seed)

    def nxt():
        nonlocal key
        key, sub = jax.random.split(key)
        return sub

    def conv_raw(cout, cin, k):
        scale = (cin * k * k) ** -0.5
        w = jax.random.normal(nxt(), (cout, cin, k, k), jnp.float32) * scale
        b = jax.random.normal(nxt(), (cout,), jnp.float32) * 0.01
        return w, b

    def fc_raw(din, dout):
        scale = din ** -0.5
        w = jax.random.normal(nxt(), (din, dout), jnp.float32) * scale
        b = jax.random.normal(nxt(), (dout,), jnp.float32) * 0.01
        return w, b

    def pack_conv(w, b, kp=None, np_=None):
        cout, cin, kh, kw = w.shape
        K = kh * kw * cin
        Kp = kp if kp is not None else _round_up(K, 128)
        Np = np_ if np_ is not None else _round_up(cout, 128)
        # im2col channel ordering is (ki, kj, Cin) -> reorder weights to match.
        w2 = jnp.transpose(w, (2, 3, 1, 0)).reshape(K, cout)
        wp = jnp.zeros((Kp, Np), jnp.bfloat16).at[:K, :cout].set(
            w2.astype(jnp.bfloat16))
        bp = jnp.zeros((8, Np), jnp.float32).at[0, :cout].set(b)
        return wp, bp

    params = {}

    # SFE: three branches (st, sv, g) stacked per stage for one batched call.
    cin = 3
    for i, cout in enumerate(_SFE_CHANS, 1):
        ws, bs = [], []
        for _ in range(3):
            w, b = conv_raw(cout, cin, 3)
            wp, bp = pack_conv(w, b)
            ws.append(wp)
            bs.append(bp)
        params[f"sfe_conv{i}_w"] = jnp.stack(ws)   # (3, Kp, 128) bf16
        params[f"sfe_conv{i}_b"] = jnp.stack(bs)   # (3, 8, 128) f32
        cin = cout

    # HFAF: the 3 per-scale 1x1 fuse convs are stacked for one batched call;
    # the tiny attention FCs stay unpacked (computed in plain jnp).
    ws, bs = [], []
    for i in range(1, 4):
        c = _SFE_CHANS[i - 1]
        w, b = conv_raw(c, 2 * c, 1)
        wp, bp = pack_conv(w, b, kp=128, np_=128)
        ws.append(wp)
        bs.append(bp)
        w, b = fc_raw(c, c)
        params[f"hfaf_att{i}_w"] = w               # (C, C) f32
        params[f"hfaf_att{i}_b"] = b               # (C,)   f32
    params["hfaf_fuse_w"] = jnp.stack(ws)          # (3, 128, 128) bf16
    params["hfaf_fuse_b"] = jnp.stack(bs)          # (3, 8, 128)   f32

    # MRI: eight 1x1 projections stacked (st4, F1, F2, F3, g1..g4)
    proj_cins = [_SFE_CHANS[3], _SFE_CHANS[0], _SFE_CHANS[1],
                 _SFE_CHANS[2]] + list(_SFE_CHANS)
    ws, bs = [], []
    for cin_p in proj_cins:
        w, b = conv_raw(_MRI_CH, cin_p, 1)
        wp, bp = pack_conv(w, b, kp=128, np_=128)
        ws.append(wp)
        bs.append(bp)
    params["mri_proj_w"] = jnp.stack(ws)           # (8, 128, 128) bf16
    params["mri_proj_b"] = jnp.stack(bs)           # (8, 8, 128)   f32

    w, b = conv_raw(_MRI_CH, _MRI_CH, 3)
    params["mri_refine_w"], params["mri_refine_b"] = pack_conv(w, b)
    w, b = conv_raw(1, _MRI_CH, 1)
    params["mri_head_w"], params["mri_head_b"] = pack_conv(w, b)
    return params


# ---------------------------------------------------------------------------
# Forward
# ---------------------------------------------------------------------------
def msfe_forward(params, st, sv, g):
    """Three SFE branches; one im2col + one Pallas call per stage."""
    feats = {"st": [], "sv": [], "g": []}
    B = st.shape[0]
    cur = jnp.stack([st, sv, g], axis=0)                 # (3, B, H, W, C)
    for i in range(1, 5):
        cout = _SFE_CHANS[i - 1]
        G_, B_, H, W, C = cur.shape
        Kp = params[f"sfe_conv{i}_w"].shape[1]
        patches, Ho, Wo = _im2col(cur.reshape(G_ * B_, H, W, C),
                                  3, 3, 2, 1, Kp=Kp)
        A = patches.reshape(3, B * Ho * Wo, Kp)           # bf16, K-padded
        out = batched_matmul_bias_act(A, params[f"sfe_conv{i}_w"],
                                      params[f"sfe_conv{i}_b"], act="relu")
        M = B * Ho * Wo
        nxt = out[:, :M, :cout].reshape(3, B, Ho, Wo, cout)
        for bi, pref in enumerate(("st", "sv", "g")):
            feats[pref].append(nxt[bi])
        cur = nxt
    return feats["st"], feats["sv"], feats["g"]


def hfaf_forward_all(params, st_f, sv_f):
    """All three HFAF scales: ONE batched fuse-conv call; attention + gating
    (tiny, zero/near-zero FLOP) stay in plain jnp so XLA fuses them."""
    slabs, Ms, shapes = [], [], []
    for i in range(3):
        x = jnp.concatenate([st_f[i], sv_f[i]], axis=-1)  # (B,H,W,2C) bf16
        B, H, W, C2 = x.shape
        M = B * H * W
        fl = x.reshape(M, C2)
        Ms.append(M)
        shapes.append((B, H, W, C2 // 2))
        slabs.append(fl)
    Mmax = max(Ms)
    A = jnp.stack(
        [jnp.pad(s.astype(jnp.bfloat16),
                 ((0, Mmax - s.shape[0]), (0, 128 - s.shape[1])))
         for s in slabs], axis=0)                         # (3, Mmax, 128)

    out = batched_matmul_bias_act(A, params["hfaf_fuse_w"],
                                  params["hfaf_fuse_b"], act="relu")

    fused_list = []
    for i in range(3):
        B, H, W, C = shapes[i]
        fused = out[i, :Ms[i], :C].reshape(B, H, W, C)    # bf16
        gap = jnp.mean(fused.astype(jnp.float32), axis=(1, 2))      # (B, C)
        att = jax.nn.sigmoid(gap @ params[f"hfaf_att{i + 1}_w"]
                             + params[f"hfaf_att{i + 1}_b"])         # (B, C)
        fused_list.append(fused * att[:, None, None, :].astype(fused.dtype))
    return fused_list


def _upsample_to(x, Ht, Wt):
    B, H, W, C = x.shape
    rh, rw = Ht // H, Wt // W
    x = jnp.broadcast_to(x[:, :, None, :, None, :], (B, H, rh, W, rw, C))
    return x.reshape(B, Ht, Wt, C)


def mri_forward(params, st4, F1, F2, F3, g_list):
    B, Ht, Wt = F1.shape[0], F1.shape[1], F1.shape[2]
    M = B * Ht * Wt
    feats = [st4, F1, F2, F3] + list(g_list)
    slices = []
    for f in feats:
        fu = _upsample_to(f.astype(jnp.bfloat16), Ht, Wt)
        C = fu.shape[-1]
        fl = fu.reshape(M, C)
        slices.append(jnp.pad(fl, ((0, 0), (0, 128 - C))))
    A = jnp.stack(slices, axis=0)                         # (8, M, 128) bf16

    summed = mri_proj_sum(A, params["mri_proj_w"], params["mri_proj_b"])
    h = summed[:, :_MRI_CH].reshape(B, Ht, Wt, _MRI_CH)   # bf16

    h = conv2d(h, params["mri_refine_w"], params["mri_refine_b"],
               3, 3, 1, 1, _MRI_CH, act="relu")
    return conv2d(h, params["mri_head_w"], params["mri_head_b"],
                  1, 1, 1, 0, 1, act="sigmoid", out_dtype=jnp.float32)


def arfaf_net_forward(params, ST_img, G_ST_img, SV_img):
    """Inputs are NCHW (PyTorch convention); output Risk_map is NCHW."""
    to_nhwc = lambda x: jnp.transpose(x, (0, 2, 3, 1)).astype(jnp.float32)
    st, sv, g = to_nhwc(ST_img), to_nhwc(SV_img), to_nhwc(G_ST_img)

    # MSFE
    st_f, sv_f, g_f = msfe_forward(params, st, sv, g)

    # HFAF on scales 1..3 of the (ST, SV) pairs
    F1, F2, F3 = hfaf_forward_all(params, st_f, sv_f)

    # MRI: risk map from st_4 + fused features + G_ST_list
    risk_nhwc = mri_forward(params, st_f[3], F1, F2, F3, g_f)
    return jnp.transpose(risk_nhwc, (0, 3, 1, 2))


if __name__ == "__main__":
    params = init_params(seed=0)

    key = jax.random.PRNGKey(0)
    k1, k2, k3 = jax.random.split(key, 3)
    B, C, H, W = 2, 3, 16, 16
    ST_img = jax.random.normal(k1, (B, C, H, W), jnp.float32)
    G_ST_img = jax.random.normal(k2, (B, C, H, W), jnp.float32)
    SV_img = jax.random.normal(k3, (B, C, H, W), jnp.float32)

    fwd = jax.jit(arfaf_net_forward)
    risk_map = fwd(params, ST_img, G_ST_img, SV_img)
    jax.block_until_ready(risk_map)

    assert risk_map.shape == (B, 1, 8, 8), risk_map.shape
    assert bool(jnp.all(jnp.isfinite(risk_map)))
    print("KERNEL_OK")
</pallas_src>

<mosaic_0001>
module attributes {stable_mosaic.version = 11 : i64} {
  func.func @_bmm_kernel(%arg0: i32, %arg1: i32, %arg2: memref<1x128x128xbf16, #tpu.memory_space<vmem>>, %arg3: memref<1x128x128xbf16, #tpu.memory_space<vmem>>, %arg4: memref<1x8x128xf32, #tpu.memory_space<vmem>>, %arg5: memref<1x128x128xbf16, #tpu.memory_space<vmem>>) attributes {dimension_semantics = [#tpu.dimension_semantics<parallel>, #tpu.dimension_semantics<parallel>], iteration_bounds = array<i64: 3, 1>, scalar_prefetch = 0 : i64, scratch_operands = 0 : i64, tpu.core_type = #tpu.core_type<tc>, window_params = [{transform_indices = @transform_0, window_bounds = array<i64: 1, 128, 128>}, {transform_indices = @transform_1, window_bounds = array<i64: 1, 128, 128>}, {transform_indices = @transform_2, window_bounds = array<i64: 1, 8, 128>}, {transform_indices = @transform_3, window_bounds = array<i64: 1, 128, 128>}]} {
    %c0 = arith.constant 0 : index
    %c0_0 = arith.constant 0 : index
    %c0_1 = arith.constant 0 : index
    %0 = vector.load %arg2[%c0, %c0_0, %c0_1] : memref<1x128x128xbf16, #tpu.memory_space<vmem>>, vector<1x128x128xbf16>
    %1 = vector.shape_cast %0 : vector<1x128x128xbf16> to vector<128x128xbf16>
    %c0_2 = arith.constant 0 : index
    %c0_3 = arith.constant 0 : index
    %c0_4 = arith.constant 0 : index
    %2 = vector.load %arg3[%c0_2, %c0_3, %c0_4] : memref<1x128x128xbf16, #tpu.memory_space<vmem>>, vector<1x128x128xbf16>
    %3 = vector.shape_cast %2 : vector<1x128x128xbf16> to vector<128x128xbf16>
    %cst = arith.constant dense<0.000000e+00> : vector<128x128xf32>
    %4 = tpu.matmul %1, %3, %cst {dimension_numbers = #tpu.dot_dimension_numbers<[1], [0], [0], [1], [0, 0, 1, 1], [], []>} : vector<128x128xbf16>, vector<128x128xbf16>, vector<128x128xf32> -> vector<128x128xf32>
    %c0_5 = arith.constant 0 : index
    %c0_6 = arith.constant 0 : index
    %c0_7 = arith.constant 0 : index
    %5 = vector.load %arg4[%c0_5, %c0_6, %c0_7] : memref<1x8x128xf32, #tpu.memory_space<vmem>>, vector<1x1x128xf32>
    %6 = vector.shape_cast %5 : vector<1x1x128xf32> to vector<1x128xf32>
    %7 = vector.broadcast %6 : vector<1x128xf32> to vector<128x128xf32>
    %8 = arith.addf %4, %7 : vector<128x128xf32>
    %cst_8 = arith.constant 0.000000e+00 : f32
    %9 = vector.broadcast %cst_8 : f32 to vector<128x128xf32>
    %10 = arith.maximumf %8, %9 : vector<128x128xf32>
    %11 = arith.truncf %10 : vector<128x128xf32> to vector<128x128xbf16>
    %c0_9 = arith.constant 0 : index
    %c0_10 = arith.constant 0 : index
    %c0_11 = arith.constant 0 : index
    %12 = vector.load %arg5[%c0_9, %c0_10, %c0_11] : memref<1x128x128xbf16, #tpu.memory_space<vmem>>, vector<1x128x128xbf16>
    %13 = vector.shape_cast %12 : vector<1x128x128xbf16> to vector<128x128xbf16>
    %14 = vector.shape_cast %11 : vector<128x128xbf16> to vector<1x128x128xbf16>
    tpu.vector_store %arg5[%c0_9, %c0_10, %c0_11], %14 {strides = array<i32>} : memref<1x128x128xbf16, #tpu.memory_space<vmem>>, vector<1x128x128xbf16>,
    return
  }
  func.func @transform_0(%arg0: i32, %arg1: i32) -> (i32, i32, i32) {
    %c0_i32 = arith.constant 0 : i32
    %c0_i32_0 = arith.constant 0 : i32
    return %arg0, %arg1, %c0_i32 : i32, i32, i32
  }
  func.func @transform_1(%arg0: i32, %arg1: i32) -> (i32, i32, i32) {
    %c0_i32 = arith.constant 0 : i32
    %c0_i32_0 = arith.constant 0 : i32
    %c0_i32_1 = arith.constant 0 : i32
    return %arg0, %c0_i32, %c0_i32_0 : i32, i32, i32
  }
  func.func @transform_2(%arg0: i32, %arg1: i32) -> (i32, i32, i32) {
    %c0_i32 = arith.constant 0 : i32
    %c0_i32_0 = arith.constant 0 : i32
    %c0_i32_1 = arith.constant 0 : i32
    return %arg0, %c0_i32, %c0_i32_0 : i32, i32, i32
  }
  func.func @transform_3(%arg0: i32, %arg1: i32) -> (i32, i32, i32) {
    %c0_i32 = arith.constant 0 : i32
    %c0_i32_0 = arith.constant 0 : i32
    return %arg0, %arg1, %c0_i32 : i32, i32, i32
  }
}

module attributes {stable_mosaic.version = 11 : i64} {
  func.func @_bmm_kernel(%arg0: i32, %arg1: i32, %arg2: memref<1x32x128xbf16, #tpu.memory_space<vmem>>, %arg3: memref<1x128x128xbf16, #tpu.memory_space<vmem>>, %arg4: memref<1x8x128xf32, #tpu.memory_space<vmem>>, %arg5: memref<1x32x128xbf16, #tpu.memory_space<vmem>>) attributes {dimension_semantics = [#tpu.dimension_semantics<parallel>, #tpu.dimension_semantics<parallel>], iteration_bounds = array<i64: 3, 1>, scalar_prefetch = 0 : i64, scratch_operands = 0 : i64, tpu.core_type = #tpu.core_type<tc>, window_params = [{transform_indices = @transform_0, window_bounds = array<i64: 1, 32, 128>}, {transform_indices = @transform_1, window_bounds = array<i64: 1, 128, 128>}, {transform_indices = @transform_2, window_bounds = array<i64: 1, 8, 128>}, {transform_indices = @transform_3, window_bounds = array<i64: 1, 32, 128>}]} {
    %c0 = arith.constant 0 : index
    %c0_0 = arith.constant 0 : index
    %c0_1 = arith.constant 0 : index
    %0 = vector.load %arg2[%c0, %c0_0, %c0_1] : memref<1x32x128xbf16, #tpu.memory_space<vmem>>, vector<1x32x128xbf16>
    %1 = vector.shape_cast %0 : vector<1x32x128xbf16> to vector<32x128xbf16>
    %c0_2 = arith.constant 0 : index
    %c0_3 = arith.constant 0 : index
    %c0_4 = arith.constant 0 : index
    %2 = vector.load %arg3[%c0_2, %c0_3, %c0_4] : memref<1x128x128xbf16, #tpu.memory_space<vmem>>, vector<1x128x128xbf16>
    %3 = vector.shape_cast %2 : vector<1x128x128xbf16> to vector<128x128xbf16>
    %cst = arith.constant dense<0.000000e+00> : vector<32x128xf32>
    %4 = tpu.matmul %1, %3, %cst {dimension_numbers = #tpu.dot_dimension_numbers<[1], [0], [0], [1], [0, 0, 1, 1], [], []>} : vector<32x128xbf16>, vector<128x128xbf16>, vector<32x128xf32> -> vector<32x128xf32>
    %c0_5 = arith.constant 0 : index
    %c0_6 = arith.constant 0 : index
    %c0_7 = arith.constant 0 : index
    %5 = vector.load %arg4[%c0_5, %c0_6, %c0_7] : memref<1x8x128xf32, #tpu.memory_space<vmem>>, vector<1x1x128xf32>
    %6 = vector.shape_cast %5 : vector<1x1x128xf32> to vector<1x128xf32>
    %7 = vector.broadcast %6 : vector<1x128xf32> to vector<32x128xf32>
    %8 = arith.addf %4, %7 : vector<32x128xf32>
    %cst_8 = arith.constant 0.000000e+00 : f32
    %9 = vector.broadcast %cst_8 : f32 to vector<32x128xf32>
    %10 = arith.maximumf %8, %9 : vector<32x128xf32>
    %11 = arith.truncf %10 : vector<32x128xf32> to vector<32x128xbf16>
    %c0_9 = arith.constant 0 : index
    %c0_10 = arith.constant 0 : index
    %c0_11 = arith.constant 0 : index
    %12 = vector.load %arg5[%c0_9, %c0_10, %c0_11] : memref<1x32x128xbf16, #tpu.memory_space<vmem>>, vector<1x32x128xbf16>
    %13 = vector.shape_cast %12 : vector<1x32x128xbf16> to vector<32x128xbf16>
    %14 = vector.shape_cast %11 : vector<32x128xbf16> to vector<1x32x128xbf16>
    tpu.vector_store %arg5[%c0_9, %c0_10, %c0_11], %14 {strides = array<i32>} : memref<1x32x128xbf16, #tpu.memory_space<vmem>>, vector<1x32x128xbf16>,
    return
  }
  func.func @transform_0(%arg0: i32, %arg1: i32) -> (i32, i32, i32) {
    %c0_i32 = arith.constant 0 : i32
    %c0_i32_0 = arith.constant 0 : i32
    return %arg0, %arg1, %c0_i32 : i32, i32, i32
  }
  func.func @transform_1(%arg0: i32, %arg1: i32) -> (i32, i32, i32) {
    %c0_i32 = arith.constant 0 : i32
    %c0_i32_0 = arith.constant 0 : i32
    %c0_i32_1 = arith.constant 0 : i32
    return %arg0, %c0_i32, %c0_i32_0 : i32, i32, i32
  }
  func.func @transform_2(%arg0: i32, %arg1: i32) -> (i32, i32, i32) {
    %c0_i32 = arith.constant 0 : i32
    %c0_i32_0 = arith.constant 0 : i32
    %c0_i32_1 = arith.constant 0 : i32
    return %arg0, %c0_i32, %c0_i32_0 : i32, i32, i32
  }
  func.func @transform_3(%arg0: i32, %arg1: i32) -> (i32, i32, i32) {
    %c0_i32 = arith.constant 0 : i32
    %c0_i32_0 = arith.constant 0 : i32
    return %arg0, %arg1, %c0_i32 : i32, i32, i32
  }
}

module attributes {stable_mosaic.version = 11 : i64} {
  func.func @_bmm_kernel(%arg0: i32, %arg1: i32, %arg2: memref<1x16x256xbf16, #tpu.memory_space<vmem>>, %arg3: memref<1x256x128xbf16, #tpu.memory_space<vmem>>, %arg4: memref<1x8x128xf32, #tpu.memory_space<vmem>>, %arg5: memref<1x16x128xbf16, #tpu.memory_space<vmem>>) attributes {dimension_semantics = [#tpu.dimension_semantics<parallel>, #tpu.dimension_semantics<parallel>], iteration_bounds = array<i64: 3, 1>, scalar_prefetch = 0 : i64, scratch_operands = 0 : i64, tpu.core_type = #tpu.core_type<tc>, window_params = [{transform_indices = @transform_0, window_bounds = array<i64: 1, 16, 256>}, {transform_indices = @transform_1, window_bounds = array<i64: 1, 256, 128>}, {transform_indices = @transform_2, window_bounds = array<i64: 1, 8, 128>}, {transform_indices = @transform_3, window_bounds = array<i64: 1, 16, 128>}]} {
    %c0 = arith.constant 0 : index
    %c0_0 = arith.constant 0 : index
    %c0_1 = arith.constant 0 : index
    %0 = vector.load %arg2[%c0, %c0_0, %c0_1] : memref<1x16x256xbf16, #tpu.memory_space<vmem>>, vector<1x16x256xbf16>
    %1 = vector.shape_cast %0 : vector<1x16x256xbf16> to vector<16x256xbf16>
    %c0_2 = arith.constant 0 : index
    %c0_3 = arith.constant 0 : index
    %c0_4 = arith.constant 0 : index
    %2 = vector.load %arg3[%c0_2, %c0_3, %c0_4] : memref<1x256x128xbf16, #tpu.memory_space<vmem>>, vector<1x256x128xbf16>
    %3 = vector.shape_cast %2 : vector<1x256x128xbf16> to vector<256x128xbf16>
    %cst = arith.constant dense<0.000000e+00> : vector<16x128xf32>
    %4 = tpu.matmul %1, %3, %cst {dimension_numbers = #tpu.dot_dimension_numbers<[1], [0], [0], [1], [0, 0, 1, 1], [], []>} : vector<16x256xbf16>, vector<256x128xbf16>, vector<16x128xf32> -> vector<16x128xf32>
    %c0_5 = arith.constant 0 : index
    %c0_6 = arith.constant 0 : index
    %c0_7 = arith.constant 0 : index
    %5 = vector.load %arg4[%c0_5, %c0_6, %c0_7] : memref<1x8x128xf32, #tpu.memory_space<vmem>>, vector<1x1x128xf32>
    %6 = vector.shape_cast %5 : vector<1x1x128xf32> to vector<1x128xf32>
    %7 = vector.broadcast %6 : vector<1x128xf32> to vector<16x128xf32>
    %8 = arith.addf %4, %7 : vector<16x128xf32>
    %cst_8 = arith.constant 0.000000e+00 : f32
    %9 = vector.broadcast %cst_8 : f32 to vector<16x128xf32>
    %10 = arith.maximumf %8, %9 : vector<16x128xf32>
    %11 = arith.truncf %10 : vector<16x128xf32> to vector<16x128xbf16>
    %c0_9 = arith.constant 0 : index
    %c0_10 = arith.constant 0 : index
    %c0_11 = arith.constant 0 : index
    %12 = vector.load %arg5[%c0_9, %c0_10, %c0_11] : memref<1x16x128xbf16, #tpu.memory_space<vmem>>, vector<1x16x128xbf16>
    %13 = vector.shape_cast %12 : vector<1x16x128xbf16> to vector<16x128xbf16>
    %14 = vector.shape_cast %11 : vector<16x128xbf16> to vector<1x16x128xbf16>
    tpu.vector_store %arg5[%c0_9, %c0_10, %c0_11], %14 {strides = array<i32>} : memref<1x16x128xbf16, #tpu.memory_space<vmem>>, vector<1x16x128xbf16>,
    return
  }
  func.func @transform_0(%arg0: i32, %arg1: i32) -> (i32, i32, i32) {
    %c0_i32 = arith.constant 0 : i32
    %c0_i32_0 = arith.constant 0 : i32
    return %arg0, %arg1, %c0_i32 : i32, i32, i32
  }
  func.func @transform_1(%arg0: i32, %arg1: i32) -> (i32, i32, i32) {
    %c0_i32 = arith.constant 0 : i32
    %c0_i32_0 = arith.constant 0 : i32
    %c0_i32_1 = arith.constant 0 : i32
    return %arg0, %c0_i32, %c0_i32_0 : i32, i32, i32
  }
  func.func @transform_2(%arg0: i32, %arg1: i32) -> (i32, i32, i32) {
    %c0_i32 = arith.constant 0 : i32
    %c0_i32_0 = arith.constant 0 : i32
    %c0_i32_1 = arith.constant 0 : i32
    return %arg0, %c0_i32, %c0_i32_0 : i32, i32, i32
  }
  func.func @transform_3(%arg0: i32, %arg1: i32) -> (i32, i32, i32) {
    %c0_i32 = arith.constant 0 : i32
    %c0_i32_0 = arith.constant 0 : i32
    return %arg0, %arg1, %c0_i32 : i32, i32, i32
  }
}

module attributes {stable_mosaic.version = 11 : i64} {
  func.func @_bmm_kernel(%arg0: i32, %arg1: i32, %arg2: memref<1x16x384xbf16, #tpu.memory_space<vmem>>, %arg3: memref<1x384x128xbf16, #tpu.memory_space<vmem>>, %arg4: memref<1x8x128xf32, #tpu.memory_space<vmem>>, %arg5: memref<1x16x128xbf16, #tpu.memory_space<vmem>>) attributes {dimension_semantics = [#tpu.dimension_semantics<parallel>, #tpu.dimension_semantics<parallel>], iteration_bounds = array<i64: 3, 1>, scalar_prefetch = 0 : i64, scratch_operands = 0 : i64, tpu.core_type = #tpu.core_type<tc>, window_params = [{transform_indices = @transform_0, window_bounds = array<i64: 1, 16, 384>}, {transform_indices = @transform_1, window_bounds = array<i64: 1, 384, 128>}, {transform_indices = @transform_2, window_bounds = array<i64: 1, 8, 128>}, {transform_indices = @transform_3, window_bounds = array<i64: 1, 16, 128>}]} {
    %c0 = arith.constant 0 : index
    %c0_0 = arith.constant 0 : index
    %c0_1 = arith.constant 0 : index
    %0 = vector.load %arg2[%c0, %c0_0, %c0_1] : memref<1x16x384xbf16, #tpu.memory_space<vmem>>, vector<1x16x384xbf16>
    %1 = vector.shape_cast %0 : vector<1x16x384xbf16> to vector<16x384xbf16>
    %c0_2 = arith.constant 0 : index
    %c0_3 = arith.constant 0 : index
    %c0_4 = arith.constant 0 : index
    %2 = vector.load %arg3[%c0_2, %c0_3, %c0_4] : memref<1x384x128xbf16, #tpu.memory_space<vmem>>, vector<1x384x128xbf16>
    %3 = vector.shape_cast %2 : vector<1x384x128xbf16> to vector<384x128xbf16>
    %cst = arith.constant dense<0.000000e+00> : vector<16x128xf32>
    %4 = tpu.matmul %1, %3, %cst {dimension_numbers = #tpu.dot_dimension_numbers<[1], [0], [0], [1], [0, 0, 1, 1], [], []>} : vector<16x384xbf16>, vector<384x128xbf16>, vector<16x128xf32> -> vector<16x128xf32>
    %c0_5 = arith.constant 0 : index
    %c0_6 = arith.constant 0 : index
    %c0_7 = arith.constant 0 : index
    %5 = vector.load %arg4[%c0_5, %c0_6, %c0_7] : memref<1x8x128xf32, #tpu.memory_space<vmem>>, vector<1x1x128xf32>
    %6 = vector.shape_cast %5 : vector<1x1x128xf32> to vector<1x128xf32>
    %7 = vector.broadcast %6 : vector<1x128xf32> to vector<16x128xf32>
    %8 = arith.addf %4, %7 : vector<16x128xf32>
    %cst_8 = arith.constant 0.000000e+00 : f32
    %9 = vector.broadcast %cst_8 : f32 to vector<16x128xf32>
    %10 = arith.maximumf %8, %9 : vector<16x128xf32>
    %11 = arith.truncf %10 : vector<16x128xf32> to vector<16x128xbf16>
    %c0_9 = arith.constant 0 : index
    %c0_10 = arith.constant 0 : index
    %c0_11 = arith.constant 0 : index
    %12 = vector.load %arg5[%c0_9, %c0_10, %c0_11] : memref<1x16x128xbf16, #tpu.memory_space<vmem>>, vector<1x16x128xbf16>
    %13 = vector.shape_cast %12 : vector<1x16x128xbf16> to vector<16x128xbf16>
    %14 = vector.shape_cast %11 : vector<16x128xbf16> to vector<1x16x128xbf16>
    tpu.vector_store %arg5[%c0_9, %c0_10, %c0_11], %14 {strides = array<i32>} : memref<1x16x128xbf16, #tpu.memory_space<vmem>>, vector<1x16x128xbf16>,
    return
  }
  func.func @transform_0(%arg0: i32, %arg1: i32) -> (i32, i32, i32) {
    %c0_i32 = arith.constant 0 : i32
    %c0_i32_0 = arith.constant 0 : i32
    return %arg0, %arg1, %c0_i32 : i32, i32, i32
  }
  func.func @transform_1(%arg0: i32, %arg1: i32) -> (i32, i32, i32) {
    %c0_i32 = arith.constant 0 : i32
    %c0_i32_0 = arith.constant 0 : i32
    %c0_i32_1 = arith.constant 0 : i32
    return %arg0, %c0_i32, %c0_i32_0 : i32, i32, i32
  }
  func.func @transform_2(%arg0: i32, %arg1: i32) -> (i32, i32, i32) {
    %c0_i32 = arith.constant 0 : i32
    %c0_i32_0 = arith.constant 0 : i32
    %c0_i32_1 = arith.constant 0 : i32
    return %arg0, %c0_i32, %c0_i32_0 : i32, i32, i32
  }
  func.func @transform_3(%arg0: i32, %arg1: i32) -> (i32, i32, i32) {
    %c0_i32 = arith.constant 0 : i32
    %c0_i32_0 = arith.constant 0 : i32
    return %arg0, %arg1, %c0_i32 : i32, i32, i32
  }
}

module attributes {stable_mosaic.version = 11 : i64} {
  func.func @_proj_sum_kernel(%arg0: i32, %arg1: memref<8x128x128xbf16, #tpu.memory_space<vmem>>, %arg2: memref<8x128x128xbf16, #tpu.memory_space<vmem>>, %arg3: memref<8x8x128xf32, #tpu.memory_space<vmem>>, %arg4: memref<128x128xbf16, #tpu.memory_space<vmem>>) attributes {dimension_semantics = [#tpu.dimension_semantics<parallel>], iteration_bounds = array<i64: 1>, scalar_prefetch = 0 : i64, scratch_operands = 0 : i64, tpu.core_type = #tpu.core_type<tc>, window_params = [{transform_indices = @transform_0, window_bounds = array<i64: 8, 128, 128>}, {pipeline_mode = #tpu.pipeline_mode<synchronous>, transform_indices = @transform_1, window_bounds = array<i64: 8, 128, 128>}, {pipeline_mode = #tpu.pipeline_mode<synchronous>, transform_indices = @transform_2, window_bounds = array<i64: 8, 8, 128>}, {transform_indices = @transform_3, window_bounds = array<i64: 128, 128>}]} {
    %cst = arith.constant 0.000000e+00 : f32
    %0 = vector.broadcast %cst : f32 to vector<128x128xf32>
    %c0 = arith.constant 0 : index
    %c0_0 = arith.constant 0 : index
    %c0_1 = arith.constant 0 : index
    %1 = vector.load %arg1[%c0, %c0_0, %c0_1] : memref<8x128x128xbf16, #tpu.memory_space<vmem>>, vector<1x128x128xbf16>
    %2 = vector.shape_cast %1 : vector<1x128x128xbf16> to vector<128x128xbf16>
    %c0_2 = arith.constant 0 : index
    %c0_3 = arith.constant 0 : index
    %c0_4 = arith.constant 0 : index
    %3 = vector.load %arg2[%c0_2, %c0_3, %c0_4] : memref<8x128x128xbf16, #tpu.memory_space<vmem>>, vector<1x128x128xbf16>
    %4 = vector.shape_cast %3 : vector<1x128x128xbf16> to vector<128x128xbf16>
    %cst_5 = arith.constant dense<0.000000e+00> : vector<128x128xf32>
    %5 = tpu.matmul %2, %4, %cst_5 {dimension_numbers = #tpu.dot_dimension_numbers<[1], [0], [0], [1], [0, 0, 1, 1], [], []>} : vector<128x128xbf16>, vector<128x128xbf16>, vector<128x128xf32> -> vector<128x128xf32>
    %c0_6 = arith.constant 0 : index
    %c0_7 = arith.constant 0 : index
    %c0_8 = arith.constant 0 : index
    %6 = vector.load %arg3[%c0_6, %c0_7, %c0_8] : memref<8x8x128xf32, #tpu.memory_space<vmem>>, vector<1x8x128xf32>
    %7 = vector.shape_cast %6 : vector<1x8x128xf32> to vector<8x128xf32>
    %8 = vector.extract_strided_slice %7 {offsets = [0, 0], sizes = [1, 128], strides = [1, 1]} : vector<8x128xf32> to vector<1x128xf32>
    %9 = vector.broadcast %8 : vector<1x128xf32> to vector<128x128xf32>
    %10 = arith.addf %5, %9 : vector<128x128xf32>
    %cst_9 = arith.constant 0.000000e+00 : f32
    %11 = vector.broadcast %cst_9 : f32 to vector<128x128xf32>
    %12 = arith.maximumf %10, %11 : vector<128x128xf32>
    %13 = arith.addf %0, %12 : vector<128x128xf32>
    %c1 = arith.constant 1 : index
    %c0_10 = arith.constant 0 : index
    %c0_11 = arith.constant 0 : index
    %14 = vector.load %arg1[%c1, %c0_10, %c0_11] : memref<8x128x128xbf16, #tpu.memory_space<vmem>>, vector<1x128x128xbf16>
    %15 = vector.shape_cast %14 : vector<1x128x128xbf16> to vector<128x128xbf16>
    %c1_12 = arith.constant 1 : index
    %c0_13 = arith.constant 0 : index
    %c0_14 = arith.constant 0 : index
    %16 = vector.load %arg2[%c1_12, %c0_13, %c0_14] : memref<8x128x128xbf16, #tpu.memory_space<vmem>>, vector<1x128x128xbf16>
    %17 = vector.shape_cast %16 : vector<1x128x128xbf16> to vector<128x128xbf16>
    %cst_15 = arith.constant dense<0.000000e+00> : vector<128x128xf32>
    %18 = tpu.matmul %15, %17, %cst_15 {dimension_numbers = #tpu.dot_dimension_numbers<[1], [0], [0], [1], [0, 0, 1, 1], [], []>} : vector<128x128xbf16>, vector<128x128xbf16>, vector<128x128xf32> -> vector<128x128xf32>
    %c1_16 = arith.constant 1 : index
    %c0_17 = arith.constant 0 : index
    %c0_18 = arith.constant 0 : index
    %19 = vector.load %arg3[%c1_16, %c0_17, %c0_18] : memref<8x8x128xf32, #tpu.memory_space<vmem>>, vector<1x8x128xf32>
    %20 = vector.shape_cast %19 : vector<1x8x128xf32> to vector<8x128xf32>
    %21 = vector.extract_strided_slice %20 {offsets = [0, 0], sizes = [1, 128], strides = [1, 1]} : vector<8x128xf32> to vector<1x128xf32>
    %22 = vector.broadcast %21 : vector<1x128xf32> to vector<128x128xf32>
    %23 = arith.addf %18, %22 : vector<128x128xf32>
    %cst_19 = arith.constant 0.000000e+00 : f32
    %24 = vector.broadcast %cst_19 : f32 to vector<128x128xf32>
    %25 = arith.maximumf %23, %24 : vector<128x128xf32>
    %26 = arith.addf %13, %25 : vector<128x128xf32>
    %c2 = arith.constant 2 : index
    %c0_20 = arith.constant 0 : index
    %c0_21 = arith.constant 0 : index
    %27 = vector.load %arg1[%c2, %c0_20, %c0_21] : memref<8x128x128xbf16, #tpu.memory_space<vmem>>, vector<1x128x128xbf16>
    %28 = vector.shape_cast %27 : vector<1x128x128xbf16> to vector<128x128xbf16>
    %c2_22 = arith.constant 2 : index
    %c0_23 = arith.constant 0 : index
    %c0_24 = arith.constant 0 : index
    %29 = vector.load %arg2[%c2_22, %c0_23, %c0_24] : memref<8x128x128xbf16, #tpu.memory_space<vmem>>, vector<1x128x128xbf16>
    %30 = vector.shape_cast %29 : vector<1x128x128xbf16> to vector<128x128xbf16>
    %cst_25 = arith.constant dense<0.000000e+00> : vector<128x128xf32>
    %31 = tpu.matmul %28, %30, %cst_25 {dimension_numbers = #tpu.dot_dimension_numbers<[1], [0], [0], [1], [0, 0, 1, 1], [], []>} : vector<128x128xbf16>, vector<128x128xbf16>, vector<128x128xf32> -> vector<128x128xf32>
    %c2_26 = arith.constant 2 : index
    %c0_27 = arith.constant 0 : index
    %c0_28 = arith.constant 0 : index
    %32 = vector.load %arg3[%c2_26, %c0_27, %c0_28] : memref<8x8x128xf32, #tpu.memory_space<vmem>>, vector<1x8x128xf32>
    %33 = vector.shape_cast %32 : vector<1x8x128xf32> to vector<8x128xf32>
    %34 = vector.extract_strided_slice %33 {offsets = [0, 0], sizes = [1, 128], strides = [1, 1]} : vector<8x128xf32> to vector<1x128xf32>
    %35 = vector.broadcast %34 : vector<1x128xf32> to vector<128x128xf32>
    %36 = arith.addf %31, %35 : vector<128x128xf32>
    %cst_29 = arith.constant 0.000000e+00 : f32
    %37 = vector.broadcast %cst_29 : f32 to vector<128x128xf32>
    %38 = arith.maximumf %36, %37 : vector<128x128xf32>
    %39 = arith.addf %26, %38 : vector<128x128xf32>
    %c3 = arith.constant 3 : index
    %c0_30 = arith.constant 0 : index
    %c0_31 = arith.constant 0 : index
    %40 = vector.load %arg1[%c3, %c0_30, %c0_31] : memref<8x128x128xbf16, #tpu.memory_space<vmem>>, vector<1x128x128xbf16>
    %41 = vector.shape_cast %40 : vector<1x128x128xbf16> to vector<128x128xbf16>
    %c3_32 = arith.constant 3 : index
    %c0_33 = arith.constant 0 : index
    %c0_34 = arith.constant 0 : index
    %42 = vector.load %arg2[%c3_32, %c0_33, %c0_34] : memref<8x128x128xbf16, #tpu.memory_space<vmem>>, vector<1x128x128xbf16>
    %43 = vector.shape_cast %42 : vector<1x128x128xbf16> to vector<128x128xbf16>
    %cst_35 = arith.constant dense<0.000000e+00> : vector<128x128xf32>
    %44 = tpu.matmul %41, %43, %cst_35 {dimension_numbers = #tpu.dot_dimension_numbers<[1], [0], [0], [1], [0, 0, 1, 1], [], []>} : vector<128x128xbf16>, vector<128x128xbf16>, vector<128x128xf32> -> vector<128x128xf32>
    %c3_36 = arith.constant 3 : index
    %c0_37 = arith.constant 0 : index
    %c0_38 = arith.constant 0 : index
    %45 = vector.load %arg3[%c3_36, %c0_37, %c0_38] : memref<8x8x128xf32, #tpu.memory_space<vmem>>, vector<1x8x128xf32>
    %46 = vector.shape_cast %45 : vector<1x8x128xf32> to vector<8x128xf32>
    %47 = vector.extract_strided_slice %46 {offsets = [0, 0], sizes = [1, 128], strides = [1, 1]} : vector<8x128xf32> to vector<1x128xf32>
    %48 = vector.broadcast %47 : vector<1x128xf32> to vector<128x128xf32>
    %49 = arith.addf %44, %48 : vector<128x128xf32>
    %cst_39 = arith.constant 0.000000e+00 : f32
    %50 = vector.broadcast %cst_39 : f32 to vector<128x128xf32>
    %51 = arith.maximumf %49, %50 : vector<128x128xf32>
    %52 = arith.addf %39, %51 : vector<128x128xf32>
    %c4 = arith.constant 4 : index
    %c0_40 = arith.constant 0 : index
    %c0_41 = arith.constant 0 : index
    %53 = vector.load %arg1[%c4, %c0_40, %c0_41] : memref<8x128x128xbf16, #tpu.memory_space<vmem>>, vector<1x128x128xbf16>
    %54 = vector.shape_cast %53 : vector<1x128x128xbf16> to vector<128x128xbf16>
    %c4_42 = arith.constant 4 : index
    %c0_43 = arith.constant 0 : index
    %c0_44 = arith.constant 0 : index
    %55 = vector.load %arg2[%c4_42, %c0_43, %c0_44] : memref<8x128x128xbf16, #tpu.memory_space<vmem>>, vector<1x128x128xbf16>
    %56 = vector.shape_cast %55 : vector<1x128x128xbf16> to vector<128x128xbf16>
    %cst_45 = arith.constant dense<0.000000e+00> : vector<128x128xf32>
    %57 = tpu.matmul %54, %56, %cst_45 {dimension_numbers = #tpu.dot_dimension_numbers<[1], [0], [0], [1], [0, 0, 1, 1], [], []>} : vector<128x128xbf16>, vector<128x128xbf16>, vector<128x128xf32> -> vector<128x128xf32>
    %c4_46 = arith.constant 4 : index
    %c0_47 = arith.constant 0 : index
    %c0_48 = arith.constant 0 : index
    %58 = vector.load %arg3[%c4_46, %c0_47, %c0_48] : memref<8x8x128xf32, #tpu.memory_space<vmem>>, vector<1x8x128xf32>
    %59 = vector.shape_cast %58 : vector<1x8x128xf32> to vector<8x128xf32>
    %60 = vector.extract_strided_slice %59 {offsets = [0, 0], sizes = [1, 128], strides = [1, 1]} : vector<8x128xf32> to vector<1x128xf32>
    %61 = vector.broadcast %60 : vector<1x128xf32> to vector<128x128xf32>
    %62 = arith.addf %57, %61 : vector<128x128xf32>
    %cst_49 = arith.constant 0.000000e+00 : f32
    %63 = vector.broadcast %cst_49 : f32 to vector<128x128xf32>
    %64 = arith.maximumf %62, %63 : vector<128x128xf32>
    %65 = arith.addf %52, %64 : vector<128x128xf32>
    %c5 = arith.constant 5 : index
    %c0_50 = arith.constant 0 : index
    %c0_51 = arith.constant 0 : index
    %66 = vector.load %arg1[%c5, %c0_50, %c0_51] : memref<8x128x128xbf16, #tpu.memory_space<vmem>>, vector<1x128x128xbf16>
    %67 = vector.shape_cast %66 : vector<1x128x128xbf16> to vector<128x128xbf16>
    %c5_52 = arith.constant 5 : index
    %c0_53 = arith.constant 0 : index
    %c0_54 = arith.constant 0 : index
    %68 = vector.load %arg2[%c5_52, %c0_53, %c0_54] : memref<8x128x128xbf16, #tpu.memory_space<vmem>>, vector<1x128x128xbf16>
    %69 = vector.shape_cast %68 : vector<1x128x128xbf16> to vector<128x128xbf16>
    %cst_55 = arith.constant dense<0.000000e+00> : vector<128x128xf32>
    %70 = tpu.matmul %67, %69, %cst_55 {dimension_numbers = #tpu.dot_dimension_numbers<[1], [0], [0], [1], [0, 0, 1, 1], [], []>} : vector<128x128xbf16>, vector<128x128xbf16>, vector<128x128xf32> -> vector<128x128xf32>
    %c5_56 = arith.constant 5 : index
    %c0_57 = arith.constant 0 : index
    %c0_58 = arith.constant 0 : index
    %71 = vector.load %arg3[%c5_56, %c0_57, %c0_58] : memref<8x8x128xf32, #tpu.memory_space<vmem>>, vector<1x8x128xf32>
    %72 = vector.shape_cast %71 : vector<1x8x128xf32> to vector<8x128xf32>
    %73 = vector.extract_strided_slice %72 {offsets = [0, 0], sizes = [1, 128], strides = [1, 1]} : vector<8x128xf32> to vector<1x128xf32>
    %74 = vector.broadcast %73 : vector<1x128xf32> to vector<128x128xf32>
    %75 = arith.addf %70, %74 : vector<128x128xf32>
    %cst_59 = arith.constant 0.000000e+00 : f32
    %76 = vector.broadcast %cst_59 : f32 to vector<128x128xf32>
    %77 = arith.maximumf %75, %76 : vector<128x128xf32>
    %78 = arith.addf %65, %77 : vector<128x128xf32>
    %c6 = arith.constant 6 : index
    %c0_60 = arith.constant 0 : index
    %c0_61 = arith.constant 0 : index
    %79 = vector.load %arg1[%c6, %c0_60, %c0_61] : memref<8x128x128xbf16, #tpu.memory_space<vmem>>, vector<1x128x128xbf16>
    %80 = vector.shape_cast %79 : vector<1x128x128xbf16> to vector<128x128xbf16>
    %c6_62 = arith.constant 6 : index
    %c0_63 = arith.constant 0 : index
    %c0_64 = arith.constant 0 : index
    %81 = vector.load %arg2[%c6_62, %c0_63, %c0_64] : memref<8x128x128xbf16, #tpu.memory_space<vmem>>, vector<1x128x128xbf16>
    %82 = vector.shape_cast %81 : vector<1x128x128xbf16> to vector<128x128xbf16>
    %cst_65 = arith.constant dense<0.000000e+00> : vector<128x128xf32>
    %83 = tpu.matmul %80, %82, %cst_65 {dimension_numbers = #tpu.dot_dimension_numbers<[1], [0], [0], [1], [0, 0, 1, 1], [], []>} : vector<128x128xbf16>, vector<128x128xbf16>, vector<128x128xf32> -> vector<128x128xf32>
    %c6_66 = arith.constant 6 : index
    %c0_67 = arith.constant 0 : index
    %c0_68 = arith.constant 0 : index
    %84 = vector.load %arg3[%c6_66, %c0_67, %c0_68] : memref<8x8x128xf32, #tpu.memory_space<vmem>>, vector<1x8x128xf32>
    %85 = vector.shape_cast %84 : vector<1x8x128xf32> to vector<8x128xf32>
    %86 = vector.extract_strided_slice %85 {offsets = [0, 0], sizes = [1, 128], strides = [1, 1]} : vector<8x128xf32> to vector<1x128xf32>
    %87 = vector.broadcast %86 : vector<1x128xf32> to vector<128x128xf32>
    %88 = arith.addf %83, %87 : vector<128x128xf32>
    %cst_69 = arith.constant 0.000000e+00 : f32
    %89 = vector.broadcast %cst_69 : f32 to vector<128x128xf32>
    %90 = arith.maximumf %88, %89 : vector<128x128xf32>
    %91 = arith.addf %78, %90 : vector<128x128xf32>
    %c7 = arith.constant 7 : index
    %c0_70 = arith.constant 0 : index
    %c0_71 = arith.constant 0 : index
    %92 = vector.load %arg1[%c7, %c0_70, %c0_71] : memref<8x128x128xbf16, #tpu.memory_space<vmem>>, vector<1x128x128xbf16>
    %93 = vector.shape_cast %92 : vector<1x128x128xbf16> to vector<128x128xbf16>
    %c7_72 = arith.constant 7 : index
    %c0_73 = arith.constant 0 : index
    %c0_74 = arith.constant 0 : index
    %94 = vector.load %arg2[%c7_72, %c0_73, %c0_74] : memref<8x128x128xbf16, #tpu.memory_space<vmem>>, vector<1x128x128xbf16>
    %95 = vector.shape_cast %94 : vector<1x128x128xbf16> to vector<128x128xbf16>
    %cst_75 = arith.constant dense<0.000000e+00> : vector<128x128xf32>
    %96 = tpu.matmul %93, %95, %cst_75 {dimension_numbers = #tpu.dot_dimension_numbers<[1], [0], [0], [1], [0, 0, 1, 1], [], []>} : vector<128x128xbf16>, vector<128x128xbf16>, vector<128x128xf32> -> vector<128x128xf32>
    %c7_76 = arith.constant 7 : index
    %c0_77 = arith.constant 0 : index
    %c0_78 = arith.constant 0 : index
    %97 = vector.load %arg3[%c7_76, %c0_77, %c0_78] : memref<8x8x128xf32, #tpu.memory_space<vmem>>, vector<1x8x128xf32>
    %98 = vector.shape_cast %97 : vector<1x8x128xf32> to vector<8x128xf32>
    %99 = vector.extract_strided_slice %98 {offsets = [0, 0], sizes = [1, 128], strides = [1, 1]} : vector<8x128xf32> to vector<1x128xf32>
    %100 = vector.broadcast %99 : vector<1x128xf32> to vector<128x128xf32>
    %101 = arith.addf %96, %100 : vector<128x128xf32>
    %cst_79 = arith.constant 0.000000e+00 : f32
    %102 = vector.broadcast %cst_79 : f32 to vector<128x128xf32>
    %103 = arith.maximumf %101, %102 : vector<128x128xf32>
    %104 = arith.addf %91, %103 : vector<128x128xf32>
    %105 = arith.truncf %104 : vector<128x128xf32> to vector<128x128xbf16>
    %c0_80 = arith.constant 0 : index
    %c0_81 = arith.constant 0 : index
    %106 = vector.load %arg4[%c0_80, %c0_81] : memref<128x128xbf16, #tpu.memory_space<vmem>>, vector<128x128xbf16>
    tpu.vector_store %arg4[%c0_80, %c0_81], %105 {strides = array<i32>} : memref<128x128xbf16, #tpu.memory_space<vmem>>, vector<128x128xbf16>,
    return
  }
  func.func @transform_0(%arg0: i32) -> (i32, i32, i32) {
    %c0_i32 = arith.constant 0 : i32
    %c0_i32_0 = arith.constant 0 : i32
    %c0_i32_1 = arith.constant 0 : i32
    return %c0_i32, %arg0, %c0_i32_0 : i32, i32, i32
  }
  func.func @transform_1(%arg0: i32) -> (i32, i32, i32) {
    %c0_i32 = arith.constant 0 : i32
    %c0_i32_0 = arith.constant 0 : i32
    %c0_i32_1 = arith.constant 0 : i32
    %c0_i32_2 = arith.constant 0 : i32
    return %c0_i32, %c0_i32_0, %c0_i32_1 : i32, i32, i32
  }
  func.func @transform_2(%arg0: i32) -> (i32, i32, i32) {
    %c0_i32 = arith.constant 0 : i32
    %c0_i32_0 = arith.constant 0 : i32
    %c0_i32_1 = arith.constant 0 : i32
    %c0_i32_2 = arith.constant 0 : i32
    return %c0_i32, %c0_i32_0, %c0_i32_1 : i32, i32, i32
  }
  func.func @transform_3(%arg0: i32) -> (i32, i32) {
    %c0_i32 = arith.constant 0 : i32
    %c0_i32_0 = arith.constant 0 : i32
    return %arg0, %c0_i32 : i32, i32
  }
}

module attributes {stable_mosaic.version = 11 : i64} {
  func.func @_bmm_kernel(%arg0: i32, %arg1: i32, %arg2: memref<1x128x256xbf16, #tpu.memory_space<vmem>>, %arg3: memref<1x256x128xbf16, #tpu.memory_space<vmem>>, %arg4: memref<1x8x128xf32, #tpu.memory_space<vmem>>, %arg5: memref<1x128x128xbf16, #tpu.memory_space<vmem>>) attributes {dimension_semantics = [#tpu.dimension_semantics<parallel>, #tpu.dimension_semantics<parallel>], iteration_bounds = array<i64: 1, 1>, scalar_prefetch = 0 : i64, scratch_operands = 0 : i64, tpu.core_type = #tpu.core_type<tc>, window_params = [{transform_indices = @transform_0, window_bounds = array<i64: 1, 128, 256>}, {transform_indices = @transform_1, window_bounds = array<i64: 1, 256, 128>}, {transform_indices = @transform_2, window_bounds = array<i64: 1, 8, 128>}, {transform_indices = @transform_3, window_bounds = array<i64: 1, 128, 128>}]} {
    %c0 = arith.constant 0 : index
    %c0_0 = arith.constant 0 : index
    %c0_1 = arith.constant 0 : index
    %0 = vector.load %arg2[%c0, %c0_0, %c0_1] : memref<1x128x256xbf16, #tpu.memory_space<vmem>>, vector<1x128x256xbf16>
    %1 = vector.shape_cast %0 : vector<1x128x256xbf16> to vector<128x256xbf16>
    %c0_2 = arith.constant 0 : index
    %c0_3 = arith.constant 0 : index
    %c0_4 = arith.constant 0 : index
    %2 = vector.load %arg3[%c0_2, %c0_3, %c0_4] : memref<1x256x128xbf16, #tpu.memory_space<vmem>>, vector<1x256x128xbf16>
    %3 = vector.shape_cast %2 : vector<1x256x128xbf16> to vector<256x128xbf16>
    %cst = arith.constant dense<0.000000e+00> : vector<128x128xf32>
    %4 = tpu.matmul %1, %3, %cst {dimension_numbers = #tpu.dot_dimension_numbers<[1], [0], [0], [1], [0, 0, 1, 1], [], []>} : vector<128x256xbf16>, vector<256x128xbf16>, vector<128x128xf32> -> vector<128x128xf32>
    %c0_5 = arith.constant 0 : index
    %c0_6 = arith.constant 0 : index
    %c0_7 = arith.constant 0 : index
    %5 = vector.load %arg4[%c0_5, %c0_6, %c0_7] : memref<1x8x128xf32, #tpu.memory_space<vmem>>, vector<1x1x128xf32>
    %6 = vector.shape_cast %5 : vector<1x1x128xf32> to vector<1x128xf32>
    %7 = vector.broadcast %6 : vector<1x128xf32> to vector<128x128xf32>
    %8 = arith.addf %4, %7 : vector<128x128xf32>
    %cst_8 = arith.constant 0.000000e+00 : f32
    %9 = vector.broadcast %cst_8 : f32 to vector<128x128xf32>
    %10 = arith.maximumf %8, %9 : vector<128x128xf32>
    %11 = arith.truncf %10 : vector<128x128xf32> to vector<128x128xbf16>
    %c0_9 = arith.constant 0 : index
    %c0_10 = arith.constant 0 : index
    %c0_11 = arith.constant 0 : index
    %12 = vector.load %arg5[%c0_9, %c0_10, %c0_11] : memref<1x128x128xbf16, #tpu.memory_space<vmem>>, vector<1x128x128xbf16>
    %13 = vector.shape_cast %12 : vector<1x128x128xbf16> to vector<128x128xbf16>
    %14 = vector.shape_cast %11 : vector<128x128xbf16> to vector<1x128x128xbf16>
    tpu.vector_store %arg5[%c0_9, %c0_10, %c0_11], %14 {strides = array<i32>} : memref<1x128x128xbf16, #tpu.memory_space<vmem>>, vector<1x128x128xbf16>,
    return
  }
  func.func @transform_0(%arg0: i32, %arg1: i32) -> (i32, i32, i32) {
    %c0_i32 = arith.constant 0 : i32
    %c0_i32_0 = arith.constant 0 : i32
    return %arg0, %arg1, %c0_i32 : i32, i32, i32
  }
  func.func @transform_1(%arg0: i32, %arg1: i32) -> (i32, i32, i32) {
    %c0_i32 = arith.constant 0 : i32
    %c0_i32_0 = arith.constant 0 : i32
    %c0_i32_1 = arith.constant 0 : i32
    return %arg0, %c0_i32, %c0_i32_0 : i32, i32, i32
  }
  func.func @transform_2(%arg0: i32, %arg1: i32) -> (i32, i32, i32) {
    %c0_i32 = arith.constant 0 : i32
    %c0_i32_0 = arith.constant 0 : i32
    %c0_i32_1 = arith.constant 0 : i32
    return %arg0, %c0_i32, %c0_i32_0 : i32, i32, i32
  }
  func.func @transform_3(%arg0: i32, %arg1: i32) -> (i32, i32, i32) {
    %c0_i32 = arith.constant 0 : i32
    %c0_i32_0 = arith.constant 0 : i32
    return %arg0, %arg1, %c0_i32 : i32, i32, i32
  }
}

module attributes {stable_mosaic.version = 11 : i64} {
  func.func @_bmm_kernel(%arg0: i32, %arg1: i32, %arg2: memref<1x128x128xbf16, #tpu.memory_space<vmem>>, %arg3: memref<1x128x128xbf16, #tpu.memory_space<vmem>>, %arg4: memref<1x8x128xf32, #tpu.memory_space<vmem>>, %arg5: memref<1x128x128xf32, #tpu.memory_space<vmem>>) attributes {dimension_semantics = [#tpu.dimension_semantics<parallel>, #tpu.dimension_semantics<parallel>], iteration_bounds = array<i64: 1, 1>, scalar_prefetch = 0 : i64, scratch_operands = 0 : i64, tpu.core_type = #tpu.core_type<tc>, window_params = [{transform_indices = @transform_0, window_bounds = array<i64: 1, 128, 128>}, {transform_indices = @transform_1, window_bounds = array<i64: 1, 128, 128>}, {transform_indices = @transform_2, window_bounds = array<i64: 1, 8, 128>}, {transform_indices = @transform_3, window_bounds = array<i64: 1, 128, 128>}]} {
    %c0 = arith.constant 0 : index
    %c0_0 = arith.constant 0 : index
    %c0_1 = arith.constant 0 : index
    %0 = vector.load %arg2[%c0, %c0_0, %c0_1] : memref<1x128x128xbf16, #tpu.memory_space<vmem>>, vector<1x128x128xbf16>
    %1 = vector.shape_cast %0 : vector<1x128x128xbf16> to vector<128x128xbf16>
    %c0_2 = arith.constant 0 : index
    %c0_3 = arith.constant 0 : index
    %c0_4 = arith.constant 0 : index
    %2 = vector.load %arg3[%c0_2, %c0_3, %c0_4] : memref<1x128x128xbf16, #tpu.memory_space<vmem>>, vector<1x128x128xbf16>
    %3 = vector.shape_cast %2 : vector<1x128x128xbf16> to vector<128x128xbf16>
    %cst = arith.constant dense<0.000000e+00> : vector<128x128xf32>
    %4 = tpu.matmul %1, %3, %cst {dimension_numbers = #tpu.dot_dimension_numbers<[1], [0], [0], [1], [0, 0, 1, 1], [], []>} : vector<128x128xbf16>, vector<128x128xbf16>, vector<128x128xf32> -> vector<128x128xf32>
    %c0_5 = arith.constant 0 : index
    %c0_6 = arith.constant 0 : index
    %c0_7 = arith.constant 0 : index
    %5 = vector.load %arg4[%c0_5, %c0_6, %c0_7] : memref<1x8x128xf32, #tpu.memory_space<vmem>>, vector<1x1x128xf32>
    %6 = vector.shape_cast %5 : vector<1x1x128xf32> to vector<1x128xf32>
    %7 = vector.broadcast %6 : vector<1x128xf32> to vector<128x128xf32>
    %8 = arith.addf %4, %7 : vector<128x128xf32>
    %9 = arith.negf %8 : vector<128x128xf32>
    %10 = math.exp %9 : vector<128x128xf32>
    %cst_8 = arith.constant 1.000000e+00 : f32
    %11 = vector.broadcast %cst_8 : f32 to vector<128x128xf32>
    %12 = arith.addf %11, %10 : vector<128x128xf32>
    %13 = arith.divf %11, %12 : vector<128x128xf32>
    %c0_9 = arith.constant 0 : index
    %c0_10 = arith.constant 0 : index
    %c0_11 = arith.constant 0 : index
    %14 = vector.load %arg5[%c0_9, %c0_10, %c0_11] : memref<1x128x128xf32, #tpu.memory_space<vmem>>, vector<1x128x128xf32>
    %15 = vector.shape_cast %14 : vector<1x128x128xf32> to vector<128x128xf32>
    %16 = vector.shape_cast %13 : vector<128x128xf32> to vector<1x128x128xf32>
    tpu.vector_store %arg5[%c0_9, %c0_10, %c0_11], %16 {strides = array<i32>} : memref<1x128x128xf32, #tpu.memory_space<vmem>>, vector<1x128x128xf32>,
    return
  }
  func.func @transform_0(%arg0: i32, %arg1: i32) -> (i32, i32, i32) {
    %c0_i32 = arith.constant 0 : i32
    %c0_i32_0 = arith.constant 0 : i32
    return %arg0, %arg1, %c0_i32 : i32, i32, i32
  }
  func.func @transform_1(%arg0: i32, %arg1: i32) -> (i32, i32, i32) {
    %c0_i32 = arith.constant 0 : i32
    %c0_i32_0 = arith.constant 0 : i32
    %c0_i32_1 = arith.constant 0 : i32
    return %arg0, %c0_i32, %c0_i32_0 : i32, i32, i32
  }
  func.func @transform_2(%arg0: i32, %arg1: i32) -> (i32, i32, i32) {
    %c0_i32 = arith.constant 0 : i32
    %c0_i32_0 = arith.constant 0 : i32
    %c0_i32_1 = arith.constant 0 : i32
    return %arg0, %c0_i32, %c0_i32_0 : i32, i32, i32
  }
  func.func @transform_3(%arg0: i32, %arg1: i32) -> (i32, i32, i32) {
    %c0_i32 = arith.constant 0 : i32
    %c0_i32_0 = arith.constant 0 : i32
    return %arg0, %arg1, %c0_i32 : i32, i32, i32
  }
}

</mosaic_0001>

<llo_original>
// kernel: arfaf_net_forward.8
$region0: #{arfaf_net_forward.8}
  #allocation0 [shape = 'u32[]', space=smem, size = 0x4, offset = 0x4, fixed_abs, tag = 'smem constant byte address 0x4 - core index']
  #allocation1 [shape = 'u32[144,128]{1,0:T(1,128)}', space=vmem, size = 0x12000, scoped, tag = 'internal scratch']
  %s0 = inlined_call_operand.vmem [shape: bf16[3,128,128], index: 0, kind: input, shape index: {}]
  %s1 = inlined_call_operand.vmem [shape: bf16[3,128,128], index: 1, kind: input, shape index: {}]
  %s2 = inlined_call_operand.vmem [shape: f32[3,8,128], index: 2, kind: input, shape index: {}]
  %s3 = inlined_call_operand.vmem [shape: bf16[3,128,128], index: 3, kind: output, shape index: {}]
  %s4 = sld [smem:[#allocation0]]
  $region45: #{arfaf_net_forward.8} parent=0
    _
  %s6 = ssub.s32 1, %s4
  %s7 = scalar_select 0, %s6, %s4
  loop: start=0, step=1, limit=5
  $region2: #{arfaf_net_forward.8} parent=0 // loop_pre_header
    _
  $region3: #{arfaf_net_forward.8} parent=0 // loop_header
    %s9 = sphi 0, %s13
    %p10 = scmp.ge.s32.totalorder %s9, 5
    %s16 = sphi 0, %s28
    %s17 = sphi 0, %s24
    %s18 = sphi 0, %s16
    %s19 = sphi 0, %s17
    %s20 = sphi 0, %s18
    %s21 = sphi 0, %s19
    %s33 = sphi 0, %s35
    %s36 = sphi 0, %s33
    %s37 = sphi 0, %s36
    %s53 = sphi 0, %s37
    %s59 = sphi 0, %s61
    %s62 = sphi 0, %s59
    %s63 = sphi 0, %s62
    %s79 = sphi 0, %s63
    %s85 = sphi 0, %s87
    %s88 = sphi 0, %s85
    %s89 = sphi 0, %s88
    %s105 = sphi 0, %s89
    %s113 = sphi 0, %s115
    %s116 = sphi 0, %s113
    %s117 = sphi 0, %s116
    %s133 = sphi 0, %s117
  $region4: #{arfaf_net_forward.8} parent=0 // loop_header_branch
    %12 = sbr.rel (%p10) target = $region8
  $region5: #{arfaf_net_forward.8} parent=0 // loop_body
    %s14 = ssub.s32 %s9, 1
    %s15 = ssub.s32 %s9, 2
    %s22 = sadd.s32 1, %s17
    %p23 = scmp.ge.s32.totalorder %s22, 1
    %s24 = scalar_select %p23, 0, %s22
    %s25 = sadd.s32 1, %s16
    %s26 = scalar_select %p23, %s25, %s16
    %p27 = scmp.ge.s32.totalorder %s26, 3
    %s28 = scalar_select %p27, 0, %s26
    %s29 = ssub.s32 %s16, %s28
    %s30 = ssub.s32 %s17, %s24
    %s31 = sor.u32 %s29, %s30
    %p32 = scmp.eq.s32.totalorder %s31, 0
    %s34 = sadd.s32 %s33, 1
    %s35 = scalar_select %p32, %s33, %s34
    %p38 = pneg %p32
    %p39 = scmp.eq.s32.totalorder %s9, 2
    %p40 = por %p38, %p39
    %p41 = scmp.ne.s32.totalorder %s33, %s36
    %p42 = scmp.eq.s32.totalorder %s9, 0
    %p43 = por %p41, %p42
    %p44 = scmp.ne.s32.totalorder %s33, %s36
    %p45 = scmp.eq.s32.totalorder %s14, 2
    %p46 = por %p44, %p45
    %p47 = scmp.ne.s32.totalorder %s36, %s37
    %p48 = scmp.eq.s32.totalorder %s14, 0
    %p49 = por %p47, %p48
    %p50 = scmp.ne.s32.totalorder %s36, %s37
    %p51 = scmp.eq.s32.totalorder %s15, 2
    %p52 = por %p50, %p51
    %p54 = scmp.ne.s32.totalorder %s37, %s53
    %p55 = scmp.eq.s32.totalorder %s15, 0
    %p56 = por %p54, %p55
    %s57 = ssub.s32 %s16, %s28
    %p58 = scmp.eq.s32.totalorder %s57, 0
    %s60 = sadd.s32 %s59, 1
    %s61 = scalar_select %p58, %s59, %s60
    %p64 = pneg %p58
    %p65 = scmp.eq.s32.totalorder %s9, 2
    %p66 = por %p64, %p65
    %p67 = scmp.ne.s32.totalorder %s59, %s62
    %p68 = scmp.eq.s32.totalorder %s9, 0
    %p69 = por %p67, %p68
    %p70 = scmp.ne.s32.totalorder %s59, %s62
    %p71 = scmp.eq.s32.totalorder %s14, 2
    %p72 = por %p70, %p71
    %p73 = scmp.ne.s32.totalorder %s62, %s63
    %p74 = scmp.eq.s32.totalorder %s14, 0
    %p75 = por %p73, %p74
    %p76 = scmp.ne.s32.totalorder %s62, %s63
    %p77 = scmp.eq.s32.totalorder %s15, 2
    %p78 = por %p76, %p77
    %p80 = scmp.ne.s32.totalorder %s63, %s79
    %p81 = scmp.eq.s32.totalorder %s15, 0
    %p82 = por %p80, %p81
    %s83 = ssub.s32 %s16, %s28
    %p84 = scmp.eq.s32.totalorder %s83, 0
    %s86 = sadd.s32 %s85, 1
    %s87 = scalar_select %p84, %s85, %s86
    %p90 = pneg %p84
    %p91 = scmp.eq.s32.totalorder %s9, 2
    %p92 = por %p90, %p91
    %p93 = scmp.ne.s32.totalorder %s85, %s88
    %p94 = scmp.eq.s32.totalorder %s9, 0
    %p95 = por %p93, %p94
    %p96 = scmp.ne.s32.totalorder %s85, %s88
    %p97 = scmp.eq.s32.totalorder %s14, 2
    %p98 = por %p96, %p97
    %p99 = scmp.ne.s32.totalorder %s88, %s89
    %p100 = scmp.eq.s32.totalorder %s14, 0
    %p101 = por %p99, %p100
    %p102 = scmp.ne.s32.totalorder %s88, %s89
    %p103 = scmp.eq.s32.totalorder %s15, 2
    %p104 = por %p102, %p103
    %p106 = scmp.ne.s32.totalorder %s89, %s105
    %p107 = scmp.eq.s32.totalorder %s15, 0
    %p108 = por %p106, %p107
    %s109 = ssub.s32 %s16, %s28
    %s110 = ssub.s32 %s17, %s24
    %s111 = sor.u32 %s109, %s110
    %p112 = scmp.eq.s32.totalorder %s111, 0
    %s114 = sadd.s32 %s113, 1
    %s115 = scalar_select %p112, %s113, %s114
    %p118 = pneg %p112
    %p119 = scmp.eq.s32.totalorder %s9, 2
    %p120 = por %p118, %p119
    %p121 = scmp.ne.s32.totalorder %s113, %s116
    %p122 = scmp.eq.s32.totalorder %s9, 0
    %p123 = por %p121, %p122
    %p124 = scmp.ne.s32.totalorder %s113, %s116
    %p125 = scmp.eq.s32.totalorder %s14, 2
    %p126 = por %p124, %p125
    %p127 = scmp.ne.s32.totalorder %s116, %s117
    %p128 = scmp.eq.s32.totalorder %s14, 0
    %p129 = por %p127, %p128
    %p130 = scmp.ne.s32.totalorder %s116, %s117
    %p131 = scmp.eq.s32.totalorder %s15, 2
    %p132 = por %p130, %p131
    %p134 = scmp.ne.s32.totalorder %s117, %s133
    %p135 = scmp.eq.s32.totalorder %s15, 0
    %p136 = por %p134, %p135
    %p137 = scmp.le.s32.totalorder 1, %s9
    %p138 = scmp.lt.s32.totalorder %s9, 4
    %p139 = pnand %p137, %p138
    %p140 = pneg %p139
    // Predicated region
    $region9: #{arfaf_net_forward.8} parent=5 // pred_check
      _
    $region10: #{arfaf_net_forward.8} parent=5 // pred_check_branch
      %142 = sbr.rel (%p139) target = $region12
    $region11: #{arfaf_net_forward.8} parent=5 // pred_region
      %s143 = ssub.s32 %s9, 1
    $region12: #{arfaf_net_forward.8} parent=5 // pred_fallthru
      _
    %p144 = scmp.lt.s32.totalorder %s9, 3
    // Predicated region
    $region13: #{arfaf_net_forward.8} parent=5 // pred_check
      %p145 = pneg %p144
    $region14: #{arfaf_net_forward.8} parent=5 // pred_check_branch
      %147 = sbr.rel (%p145) target = $region16
    $region15: #{arfaf_net_forward.8} parent=5 // pred_region
      // Predicated region
      $region17: #{arfaf_net_forward.8} parent=15 // pred_check
        %p148 = pneg %p43
      $region18: #{arfaf_net_forward.8} parent=15 // pred_check_branch
        %150 = sbr.rel (%p148) target = $region20
      $region19: #{arfaf_net_forward.8} parent=15 // pred_region
        %s151 = smul.u32 16, %s17
        %p152 = scmp.lt.s32.totalorder %s16, 2
        %s153 = scalar_select %p152, %s16, 2
        %p154 = scmp.lt.s32.totalorder %s151, 15
        %s155 = scalar_select %p154, %s151, 15
        %s156 = smul.addr %s153, 16
        %s157 = sadd.s32 %s155, %s156
        %s158 = smul.addr %s157, 4
        %s159 = scalar_lea.vmem %s0, %s158
        %s160 = smul.u32 16, %s17
      $region20: #{arfaf_net_forward.8} parent=15 // pred_fallthru
        _
      // Predicated region
      $region21: #{arfaf_net_forward.8} parent=15 // pred_check
        %p161 = pneg %p69
      $region22: #{arfaf_net_forward.8} parent=15 // pred_check_branch
        %163 = sbr.rel (%p161) target = $region24
      $region23: #{arfaf_net_forward.8} parent=15 // pred_region
        %p164 = scmp.lt.s32.totalorder %s16, 2
        %s165 = scalar_select %p164, %s16, 2
        %s166 = smul.addr %s165, 16
        %s167 = smul.addr %s166, 4
        %s168 = scalar_lea.vmem %s1, %s167
      $region24: #{arfaf_net_forward.8} parent=15 // pred_fallthru
        _
      // Predicated region
      $region25: #{arfaf_net_forward.8} parent=15 // pred_check
        %p169 = pneg %p95
      $region26: #{arfaf_net_forward.8} parent=15 // pred_check_branch
        %171 = sbr.rel (%p169) target = $region28
      $region27: #{arfaf_net_forward.8} parent=15 // pred_region
        %p172 = scmp.lt.s32.totalorder %s16, 2
        %s173 = scalar_select %p172, %s16, 2
        %s174 = smul.addr %s173, 8
        %s175 = scalar_lea.vmem %s2, %s174
      $region28: #{arfaf_net_forward.8} parent=15 // pred_fallthru
        _
    $region16: #{arfaf_net_forward.8} parent=5 // pred_fallthru
      _
    %p176 = scmp.le.s32.totalorder 1, %s9
    %p177 = scmp.lt.s32.totalorder %s9, 4
    %p178 = pnand %p176, %p177
    %p179 = pneg %p178
    // Predicated region
    $region29: #{arfaf_net_forward.8} parent=5 // pred_check
      _
    $region30: #{arfaf_net_forward.8} parent=5 // pred_check_branch
      %181 = sbr.rel (%p178) target = $region32
    $region31: #{arfaf_net_forward.8} parent=5 // pred_region
      %s182 = ssub.s32 %s9, 1
      %s183 = smul.u32 16, %s19
      %p184 = scmp.lt.s32.totalorder %s18, 2
      %s185 = scalar_select %p184, %s18, 2
      %p186 = scmp.lt.s32.totalorder %s183, 15
      %s187 = scalar_select %p186, %s183, 15
      %s188 = smul.addr %s185, 16
      %s189 = sadd.s32 %s187, %s188
      %s190 = smul.addr %s189, 4
      %s191 = scalar_lea.vmem %s0, %s190
      %p192 = pneg %p49
      %p193 = pneg %p46
      %p194 = scmp.lt.s32.totalorder %s18, 2
      %s195 = scalar_select %p194, %s18, 2
      %s196 = smul.addr %s195, 16
      %s197 = smul.addr %s196, 4
      %s198 = scalar_lea.vmem %s1, %s197
      %p199 = pneg %p75
      %p200 = pneg %p72
      %p201 = scmp.lt.s32.totalorder %s18, 2
      %s202 = scalar_select %p201, %s18, 2
      %s203 = smul.addr %s202, 8
      %s204 = scalar_lea.vmem %s2, %s203
      %p205 = pneg %p101
      %p206 = pneg %p98
      %p207 = pneg %p129
      %p208 = pneg %p126
      %s209 = smul.u32 16, %s19
      %p210 = scmp.lt.s32.totalorder %s18, 2
      %s211 = scalar_select %p210, %s18, 2
      %p212 = scmp.lt.s32.totalorder %s209, 15
      %s213 = scalar_select %p212, %s209, 15
      %s214 = smul.addr %s211, 16
      %s215 = sadd.s32 %s213, %s214
      %s216 = smul.addr %s215, 4
      %s217 = scalar_lea.vmem %s3, %s216
      %s218 = smul.u32 16, %s19
      %p219 = scmp.lt.s32.totalorder %s18, 2
      %s220 = scalar_select %p219, %s18, 2
      %p221 = scmp.lt.s32.totalorder %s218, 15
      %s222 = scalar_select %p221, %s218, 15
      %s223 = smul.addr %s220, 16
      %s224 = sadd.s32 %s222, %s223
      %s225 = smul.addr %s224, 4
      %s226 = scalar_lea.vmem %s0, %s225
      %s227 = smul.u32 16, %s19
      %p228 = scmp.lt.s32.totalorder %s18, 2
      %s229 = scalar_select %p228, %s18, 2
      %s230 = smul.addr %s229, 16
      %s231 = smul.addr %s230, 4
      %s232 = scalar_lea.vmem %s1, %s231
      %p233 = scmp.lt.s32.totalorder %s18, 2
      %s234 = scalar_select %p233, %s18, 2
      %s235 = smul.addr %s234, 8
      %s236 = scalar_lea.vmem %s2, %s235
      %s237 = smul.u32 16, %s19
      %p238 = scmp.lt.s32.totalorder %s18, 2
      %s239 = scalar_select %p238, %s18, 2
      %p240 = scmp.lt.s32.totalorder %s237, 15
      %s241 = scalar_select %p240, %s237, 15
      %s242 = smul.addr %s239, 16
      %s243 = sadd.s32 %s241, %s242
      %s244 = smul.addr %s243, 4
      %s245 = scalar_lea.vmem %s3, %s244
      %s246 = smul.u32 16, %s19
      %v248 = vld [vmem:[%s226] sm:$0xf]
      %v249 = vld [vmem:[%s226 + $0x4] sm:$0xf]
      %v250 = vld [vmem:[%s226 + $0x8] sm:$0xf]
      %v251 = vld [vmem:[%s226 + $0xc] sm:$0xf]
      %v252 = vld [vmem:[%s226 + $0x10] sm:$0xf]
      %v253 = vld [vmem:[%s226 + $0x14] sm:$0xf]
      %v254 = vld [vmem:[%s226 + $0x18] sm:$0xf]
      %v255 = vld [vmem:[%s226 + $0x1c] sm:$0xf]
      %v256 = vld [vmem:[%s226 + $0x20] sm:$0xf]
      %v257 = vld [vmem:[%s226 + $0x24] sm:$0xf]
      %v258 = vld [vmem:[%s226 + $0x28] sm:$0xf]
      %v259 = vld [vmem:[%s226 + $0x2c] sm:$0xf]
      %v260 = vld [vmem:[%s226 + $0x30] sm:$0xf]
      %v261 = vld [vmem:[%s226 + $0x34] sm:$0xf]
      %v262 = vld [vmem:[%s226 + $0x38] sm:$0xf]
      %v263 = vld [vmem:[%s226 + $0x3c] sm:$0xf]
      %v264 = vld [vmem:[%s232] sm:$0xf]
      %v265 = vld [vmem:[%s232 + $0x4] sm:$0xf]
      %v266 = vld [vmem:[%s232 + $0x8] sm:$0xf]
      %v267 = vld [vmem:[%s232 + $0xc] sm:$0xf]
      %v268 = vld [vmem:[%s232 + $0x10] sm:$0xf]
      %v269 = vld [vmem:[%s232 + $0x14] sm:$0xf]
      %v270 = vld [vmem:[%s232 + $0x18] sm:$0xf]
      %v271 = vld [vmem:[%s232 + $0x1c] sm:$0xf]
      %v272 = vld [vmem:[%s232 + $0x20] sm:$0xf]
      %v273 = vld [vmem:[%s232 + $0x24] sm:$0xf]
      %v274 = vld [vmem:[%s232 + $0x28] sm:$0xf]
      %v275 = vld [vmem:[%s232 + $0x2c] sm:$0xf]
      %v276 = vld [vmem:[%s232 + $0x30] sm:$0xf]
      %v277 = vld [vmem:[%s232 + $0x34] sm:$0xf]
      %v278 = vld [vmem:[%s232 + $0x38] sm:$0xf]
      %v279 = vld [vmem:[%s232 + $0x3c] sm:$0xf]
      %v280 = vld [vmem:[%s236] sm:$0x1]
      %v281 = vlaneseq
      %v282 = vshrl.u32 %v281, 7
      %v283 = vsub.s32 0, %v282
      %v284 = vrot.slane %v280, %v283
      %v301 = vunpack.c.l.b16 %v248
      %v302 = vunpack.c.l.b16 %v249
      %v303 = vunpack.c.l.b16 %v250
      %v304 = vunpack.c.l.b16 %v251
      %v305 = vunpack.c.l.b16 %v252
      %v306 = vunpack.c.l.b16 %v253
      %v307 = vunpack.c.l.b16 %v254
      %v308 = vunpack.c.l.b16 %v255
      %v309 = vunpack.c.l.b16 %v256
      %v310 = vunpack.c.l.b16 %v257
      %v311 = vunpack.c.l.b16 %v258
      %v312 = vunpack.c.l.b16 %v259
      %v313 = vunpack.c.l.b16 %v260
      %v314 = vunpack.c.l.b16 %v261
      %v315 = vunpack.c.l.b16 %v262
      %v316 = vunpack.c.l.b16 %v263
      %v317 = vpack.c.b16 %v302, %v301
      %v318 = vpack.c.b16 %v304, %v303
      %v319 = vpack.c.b16 %v306, %v305
      %v320 = vpack.c.b16 %v308, %v307
      %v321 = vpack.c.b16 %v310, %v309
      %v322 = vpack.c.b16 %v312, %v311
      %v323 = vpack.c.b16 %v314, %v313
      %v324 = vpack.c.b16 %v316, %v315
      %v349 = vunpack.c.l.b16 %v264
      %v350 = vunpack.c.l.b16 %v265
      %v351 = vunpack.c.l.b16 %v266
      %v352 = vunpack.c.l.b16 %v267
      %v353 = vunpack.c.l.b16 %v268
      %v354 = vunpack.c.l.b16 %v269
      %v355 = vunpack.c.l.b16 %v270
      %v356 = vunpack.c.l.b16 %v271
      %v357 = vunpack.c.l.b16 %v272
      %v358 = vunpack.c.l.b16 %v273
      %v359 = vunpack.c.l.b16 %v274
      %v360 = vunpack.c.l.b16 %v275
      %v361 = vunpack.c.l.b16 %v276
      %v362 = vunpack.c.l.b16 %v277
      %v363 = vunpack.c.l.b16 %v278
      %v364 = vunpack.c.l.b16 %v279
      %v365 = vpack.c.b16 %v350, %v349
      %v366 = vpack.c.b16 %v352, %v351
      %v367 = vpack.c.b16 %v354, %v353
      %v368 = vpack.c.b16 %v356, %v355
      %v369 = vpack.c.b16 %v358, %v357
      %v370 = vpack.c.b16 %v360, %v359
      %v371 = vpack.c.b16 %v362, %v361
      %v372 = vpack.c.b16 %v364, %v363
      %381 = vmatprep.subr.bf16.mxu0 0
      %382 = vmatpush1.bf16.msra.mxu0 %v365
      %383 = vmatprep.subr.bf16.mxu0 0
      %384 = vmatpush1.bf16.msra.mxu0 %v366
      %385 = vmatprep.subr.bf16.mxu0 0
      %386 = vmatpush1.bf16.msra.mxu0 %v367
      %387 = vmatprep.subr.bf16.mxu0 0
      %388 = vmatpush1.bf16.msra.mxu0 %v368
      %389 = vmatprep.subr.bf16.mxu0 0
      %390 = vmatpush1.bf16.msra.mxu0 %v369
      %391 = vmatprep.subr.bf16.mxu0 0
      %392 = vmatpush1.bf16.msra.mxu0 %v370
      %393 = vmatprep.subr.bf16.mxu0 0
      %394 = vmatpush1.bf16.msra.mxu0 %v371
      %395 = vmatprep.subr.bf16.mxu0 0
      %396 = vmatpush1.bf16.msra.mxu0 %v372
      %397 = vmatprep.subr.bf16.mxu0 0
      %398 = vmatpush1.bf16.msra.mxu0 0
      %399 = vmatprep.subr.bf16.mxu0 0
      %400 = vmatpush1.bf16.msra.mxu0 0
      %401 = vmatprep.subr.bf16.mxu0 0
      %402 = vmatpush1.bf16.msra.mxu0 0
      %403 = vmatprep.subr.bf16.mxu0 0
      %404 = vmatpush1.bf16.msra.mxu0 0
      %405 = vmatprep.subr.bf16.mxu0 0
      %406 = vmatpush1.bf16.msra.mxu0 0
      %407 = vmatprep.subr.bf16.mxu0 0
      %408 = vmatpush1.bf16.msra.mxu0 0
      %409 = vmatprep.subr.bf16.mxu0 0
      %410 = vmatpush1.bf16.msra.mxu0 0
      %411 = vmatprep.subr.bf16.mxu0 0
      %412 = vmatpush1.bf16.msra.mxu0 0
      %413 = vmatprep.mubr.bf16.mxu0 0
      %414 = vmatmul.mubr.bf16.gmra.mrb[0].mxu0 %v317
      %v415 = vpop.f32.mrb[0].mxu0
      %v416 = vadd.f32 %v284, %v415
      %v417 = vpop.f32.mrb[0].mxu0
      %v418 = vpop.f32.mrb[0].mxu0
      %v419 = vadd.f32 %v284, %v418
      %v420 = vpop.f32.mrb[0].mxu0
      %421 = vmatprep.mubr.bf16.mxu0 0
      %422 = vmatmul.mubr.bf16.gmra.mrb[0].mxu0 %v318
      %v423 = vpop.f32.mrb[0].mxu0
      %v424 = vadd.f32 %v284, %v423
      %v425 = vpop.f32.mrb[0].mxu0
      %v426 = vpop.f32.mrb[0].mxu0
      %v427 = vadd.f32 %v284, %v426
      %v428 = vpop.f32.mrb[0].mxu0
      %429 = vmatprep.mubr.bf16.mxu0 0
      %430 = vmatmul.mubr.bf16.gmra.mrb[0].mxu0 %v319
      %v431 = vpop.f32.mrb[0].mxu0
      %v432 = vadd.f32 %v284, %v431
      %v433 = vpop.f32.mrb[0].mxu0
      %v434 = vpop.f32.mrb[0].mxu0
      %v435 = vadd.f32 %v284, %v434
      %v436 = vpop.f32.mrb[0].mxu0
      %437 = vmatprep.mubr.bf16.mxu0 0
      %438 = vmatmul.mubr.bf16.gmra.mrb[0].mxu0 %v320
      %v439 = vpop.f32.mrb[0].mxu0
      %v440 = vadd.f32 %v284, %v439
      %v441 = vpop.f32.mrb[0].mxu0
      %v442 = vpop.f32.mrb[0].mxu0
      %v443 = vadd.f32 %v284, %v442
      %v444 = vpop.f32.mrb[0].mxu0
      %445 = vmatprep.mubr.bf16.mxu0 0
      %446 = vmatmul.mubr.bf16.gmra.mrb[0].mxu0 %v321
      %v447 = vpop.f32.mrb[0].mxu0
      %v448 = vadd.f32 %v284, %v447
      %v449 = vpop.f32.mrb[0].mxu0
      %v450 = vpop.f32.mrb[0].mxu0
      %v451 = vadd.f32 %v284, %v450
      %v452 = vpop.f32.mrb[0].mxu0
      %453 = vmatprep.mubr.bf16.mxu0 0
      %454 = vmatmul.mubr.bf16.gmra.mrb[0].mxu0 %v322
      %v455 = vpop.f32.mrb[0].mxu0
      %v456 = vadd.f32 %v284, %v455
      %v457 = vpop.f32.mrb[0].mxu0
      %v458 = vpop.f32.mrb[0].mxu0
      %v459 = vadd.f32 %v284, %v458
      %v460 = vpop.f32.mrb[0].mxu0
      %461 = vmatprep.mubr.bf16.mxu0 0
      %462 = vmatmul.mubr.bf16.gmra.mrb[0].mxu0 %v323
      %v463 = vpop.f32.mrb[0].mxu0
      %v464 = vadd.f32 %v284, %v463
      %v465 = vpop.f32.mrb[0].mxu0
      %v466 = vpop.f32.mrb[0].mxu0
      %v467 = vadd.f32 %v284, %v466
      %v468 = vpop.f32.mrb[0].mxu0
      %469 = vmatprep.mubr.bf16.mxu0 0
      %470 = vmatmul.mubr.bf16.gmra.mrb[0].mxu0 %v324
      %v471 = vpop.f32.mrb[0].mxu0
      %v472 = vadd.f32 %v284, %v471
      %v473 = vpop.f32.mrb[0].mxu0
      %v474 = vpop.f32.mrb[0].mxu0
      %v475 = vadd.f32 %v284, %v474
      %v476 = vpop.f32.mrb[0].mxu0
      %477 = vdwg.mxu0
      %v478 = vmax.f32 %v416, 0.0
      %v479 = vmax.f32 %v419, 0.0
      %v480 = vmax.f32 %v424, 0.0
      %v481 = vmax.f32 %v427, 0.0
      %v482 = vmax.f32 %v432, 0.0
      %v483 = vmax.f32 %v435, 0.0
      %v484 = vmax.f32 %v440, 0.0
      %v485 = vmax.f32 %v443, 0.0
      %v486 = vmax.f32 %v448, 0.0
      %v487 = vmax.f32 %v451, 0.0
      %v488 = vmax.f32 %v456, 0.0
      %v489 = vmax.f32 %v459, 0.0
      %v490 = vmax.f32 %v464, 0.0
      %v491 = vmax.f32 %v467, 0.0
      %v492 = vmax.f32 %v472, 0.0
      %v493 = vmax.f32 %v475, 0.0
      %v494 = vpack.c.bf16 %v479, %v478
      %v495 = vpack.c.bf16 %v481, %v480
      %v496 = vpack.c.bf16 %v483, %v482
      %v497 = vpack.c.bf16 %v485, %v484
      %v498 = vpack.c.bf16 %v487, %v486
      %v499 = vpack.c.bf16 %v489, %v488
      %v500 = vpack.c.bf16 %v491, %v490
      %v501 = vpack.c.bf16 %v493, %v492
      %v510 = vunpack.c.l.b16 %v494
      %v511 = vunpack.c.h.b16 %v494
      %v512 = vunpack.c.l.b16 %v495
      %v513 = vunpack.c.h.b16 %v495
      %v514 = vunpack.c.l.b16 %v496
      %v515 = vunpack.c.h.b16 %v496
      %v516 = vunpack.c.l.b16 %v497
      %v517 = vunpack.c.h.b16 %v497
      %v518 = vunpack.c.l.b16 %v498
      %v519 = vunpack.c.h.b16 %v498
      %v520 = vunpack.c.l.b16 %v499
      %v521 = vunpack.c.h.b16 %v499
      %v522 = vunpack.c.l.b16 %v500
      %v523 = vunpack.c.h.b16 %v500
      %v524 = vunpack.c.l.b16 %v501
      %v525 = vunpack.c.h.b16 %v501
      %v526 = vpack.c.b16 %v510, %v510
      %v527 = vpack.c.b16 %v511, %v511
      %v528 = vpack.c.b16 %v512, %v512
      %v529 = vpack.c.b16 %v513, %v513
      %v530 = vpack.c.b16 %v514, %v514
      %v531 = vpack.c.b16 %v515, %v515
      %v532 = vpack.c.b16 %v516, %v516
      %v533 = vpack.c.b16 %v517, %v517
      %v534 = vpack.c.b16 %v518, %v518
      %v535 = vpack.c.b16 %v519, %v519
      %v536 = vpack.c.b16 %v520, %v520
      %v537 = vpack.c.b16 %v521, %v521
      %v538 = vpack.c.b16 %v522, %v522
      %v539 = vpack.c.b16 %v523, %v523
      %v540 = vpack.c.b16 %v524, %v524
      %v541 = vpack.c.b16 %v525, %v525
      %558 = vst [vmem:[%s245] sm:$0xf] %v526
      %559 = vst [vmem:[%s245 + $0x4] sm:$0xf] %v527
      %560 = vst [vmem:[%s245 + $0x8] sm:$0xf] %v528
      %561 = vst [vmem:[%s245 + $0xc] sm:$0xf] %v529
      %562 = vst [vmem:[%s245 + $0x10] sm:$0xf] %v530
      %563 = vst [vmem:[%s245 + $0x14] sm:$0xf] %v531
      %564 = vst [vmem:[%s245 + $0x18] sm:$0xf] %v532
      %565 = vst [vmem:[%s245 + $0x1c] sm:$0xf] %v533
      %566 = vst [vmem:[%s245 + $0x20] sm:$0xf] %v534
      %567 = vst [vmem:[%s245 + $0x24] sm:$0xf] %v535
      %568 = vst [vmem:[%s245 + $0x28] sm:$0xf] %v536
      %569 = vst [vmem:[%s245 + $0x2c] sm:$0xf] %v537
      %570 = vst [vmem:[%s245 + $0x30] sm:$0xf] %v538
      %571 = vst [vmem:[%s245 + $0x34] sm:$0xf] %v539
      %572 = vst [vmem:[%s245 + $0x38] sm:$0xf] %v540
      %573 = vst [vmem:[%s245 + $0x3c] sm:$0xf] %v541
      %s574 = smul.u32 16, %s19
      %p575 = scmp.lt.s32.totalorder %s18, 2
      %s576 = scalar_select %p575, %s18, 2
      %p577 = scmp.lt.s32.totalorder %s574, 15
      %s578 = scalar_select %p577, %s574, 15
      %s579 = smul.addr %s576, 16
      %s580 = sadd.s32 %s578, %s579
      %s581 = smul.addr %s580, 4
      %s582 = scalar_lea.vmem %s3, %s581
      // Predicated region
      $region33: #{arfaf_net_forward.8} parent=31 // pred_check
        %p583 = pneg %p126
      $region34: #{arfaf_net_forward.8} parent=31 // pred_check_branch
        %585 = sbr.rel (%p583) target = $region36
      $region35: #{arfaf_net_forward.8} parent=31 // pred_region
        %s586 = smul.u32 16, %s19
      $region36: #{arfaf_net_forward.8} parent=31 // pred_fallthru
        _
    $region32: #{arfaf_net_forward.8} parent=5 // pred_fallthru
      _
    %p587 = scmp.le.s32.totalorder 2, %s9
    // Predicated region
    $region37: #{arfaf_net_forward.8} parent=5 // pred_check
      %p588 = pneg %p587
    $region38: #{arfaf_net_forward.8} parent=5 // pred_check_branch
      %590 = sbr.rel (%p588) target = $region40
    $region39: #{arfaf_net_forward.8} parent=5 // pred_region
      %s591 = ssub.s32 %s9, 2
      // Predicated region
      $region41: #{arfaf_net_forward.8} parent=39 // pred_check
        %p592 = pneg %p132
      $region42: #{arfaf_net_forward.8} parent=39 // pred_check_branch
        %594 = sbr.rel (%p592) target = $region44
      $region43: #{arfaf_net_forward.8} parent=39 // pred_region
        %s595 = smul.u32 16, %s21
        %p596 = scmp.lt.s32.totalorder %s20, 2
        %s597 = scalar_select %p596, %s20, 2
        %p598 = scmp.lt.s32.totalorder %s595, 15
        %s599 = scalar_select %p598, %s595, 15
        %s600 = smul.addr %s597, 16
        %s601 = sadd.s32 %s599, %s600
        %s602 = smul.addr %s601, 4
        %s603 = scalar_lea.vmem %s3, %s602
      $region44: #{arfaf_net_forward.8} parent=39 // pred_fallthru
        _
    $region40: #{arfaf_net_forward.8} parent=5 // pred_fallthru
      _
  $region6: #{arfaf_net_forward.8} parent=0 // loop_footer
    %s13 = sadd.s32 1, %s9
  $region7: #{arfaf_net_forward.8} parent=0 // loop_footer_branch
    %8 = sbr.rel target = $region3
  $region8: #{arfaf_net_forward.8} parent=0 // loop_exit
    _

// kernel: arfaf_net_forward.9
$region0: #{arfaf_net_forward.9}
  #allocation0 [shape = 'u32[]', space=smem, size = 0x4, offset = 0x4, fixed_abs, tag = 'smem constant byte address 0x4 - core index']
  #allocation1 [shape = 'u32[144,128]{1,0:T(1,128)}', space=vmem, size = 0x12000, scoped, tag = 'internal scratch']
  %s0 = inlined_call_operand.vmem [shape: bf16[3,32,128], index: 0, kind: input, shape index: {}]
  %s1 = inlined_call_operand.vmem [shape: bf16[3,128,128], index: 1, kind: input, shape index: {}]
  %s2 = inlined_call_operand.vmem [shape: f32[3,8,128], index: 2, kind: input, shape index: {}]
  %s3 = inlined_call_operand.vmem [shape: bf16[3,32,128], index: 3, kind: output, shape index: {}]
  %s4 = sld [smem:[#allocation0]]
  $region45: #{arfaf_net_forward.9} parent=0
    _
  %s6 = ssub.s32 1, %s4
  %s7 = scalar_select 0, %s6, %s4
  loop: start=0, step=1, limit=5
  $region2: #{arfaf_net_forward.9} parent=0 // loop_pre_header
    _
  $region3: #{arfaf_net_forward.9} parent=0 // loop_header
    %s9 = sphi 0, %s13
    %p10 = scmp.ge.s32.totalorder %s9, 5
    %s16 = sphi 0, %s28
    %s17 = sphi 0, %s24
    %s18 = sphi 0, %s16
    %s19 = sphi 0, %s17
    %s20 = sphi 0, %s18
    %s21 = sphi 0, %s19
    %s33 = sphi 0, %s35
    %s36 = sphi 0, %s33
    %s37 = sphi 0, %s36
    %s53 = sphi 0, %s37
    %s59 = sphi 0, %s61
    %s62 = sphi 0, %s59
    %s63 = sphi 0, %s62
    %s79 = sphi 0, %s63
    %s85 = sphi 0, %s87
    %s88 = sphi 0, %s85
    %s89 = sphi 0, %s88
    %s105 = sphi 0, %s89
    %s113 = sphi 0, %s115
    %s116 = sphi 0, %s113
    %s117 = sphi 0, %s116
    %s133 = sphi 0, %s117
  $region4: #{arfaf_net_forward.9} parent=0 // loop_header_branch
    %12 = sbr.rel (%p10) target = $region8
  $region5: #{arfaf_net_forward.9} parent=0 // loop_body
    %s14 = ssub.s32 %s9, 1
    %s15 = ssub.s32 %s9, 2
    %s22 = sadd.s32 1, %s17
    %p23 = scmp.ge.s32.totalorder %s22, 1
    %s24 = scalar_select %p23, 0, %s22
    %s25 = sadd.s32 1, %s16
    %s26 = scalar_select %p23, %s25, %s16
    %p27 = scmp.ge.s32.totalorder %s26, 3
    %s28 = scalar_select %p27, 0, %s26
    %s29 = ssub.s32 %s16, %s28
    %s30 = ssub.s32 %s17, %s24
    %s31 = sor.u32 %s29, %s30
    %p32 = scmp.eq.s32.totalorder %s31, 0
    %s34 = sadd.s32 %s33, 1
    %s35 = scalar_select %p32, %s33, %s34
    %p38 = pneg %p32
    %p39 = scmp.eq.s32.totalorder %s9, 2
    %p40 = por %p38, %p39
    %p41 = scmp.ne.s32.totalorder %s33, %s36
    %p42 = scmp.eq.s32.totalorder %s9, 0
    %p43 = por %p41, %p42
    %p44 = scmp.ne.s32.totalorder %s33, %s36
    %p45 = scmp.eq.s32.totalorder %s14, 2
    %p46 = por %p44, %p45
    %p47 = scmp.ne.s32.totalorder %s36, %s37
    %p48 = scmp.eq.s32.totalorder %s14, 0
    %p49 = por %p47, %p48
    %p50 = scmp.ne.s32.totalorder %s36, %s37
    %p51 = scmp.eq.s32.totalorder %s15, 2
    %p52 = por %p50, %p51
    %p54 = scmp.ne.s32.totalorder %s37, %s53
    %p55 = scmp.eq.s32.totalorder %s15, 0
    %p56 = por %p54, %p55
    %s57 = ssub.s32 %s16, %s28
    %p58 = scmp.eq.s32.totalorder %s57, 0
    %s60 = sadd.s32 %s59, 1
    %s61 = scalar_select %p58, %s59, %s60
    %p64 = pneg %p58
    %p65 = scmp.eq.s32.totalorder %s9, 2
    %p66 = por %p64, %p65
    %p67 = scmp.ne.s32.totalorder %s59, %s62
    %p68 = scmp.eq.s32.totalorder %s9, 0
    %p69 = por %p67, %p68
    %p70 = scmp.ne.s32.totalorder %s59, %s62
    %p71 = scmp.eq.s32.totalorder %s14, 2
    %p72 = por %p70, %p71
    %p73 = scmp.ne.s32.totalorder %s62, %s63
    %p74 = scmp.eq.s32.totalorder %s14, 0
    %p75 = por %p73, %p74
    %p76 = scmp.ne.s32.totalorder %s62, %s63
    %p77 = scmp.eq.s32.totalorder %s15, 2
    %p78 = por %p76, %p77
    %p80 = scmp.ne.s32.totalorder %s63, %s79
    %p81 = scmp.eq.s32.totalorder %s15, 0
    %p82 = por %p80, %p81
    %s83 = ssub.s32 %s16, %s28
    %p84 = scmp.eq.s32.totalorder %s83, 0
    %s86 = sadd.s32 %s85, 1
    %s87 = scalar_select %p84, %s85, %s86
    %p90 = pneg %p84
    %p91 = scmp.eq.s32.totalorder %s9, 2
    %p92 = por %p90, %p91
    %p93 = scmp.ne.s32.totalorder %s85, %s88
    %p94 = scmp.eq.s32.totalorder %s9, 0
    %p95 = por %p93, %p94
    %p96 = scmp.ne.s32.totalorder %s85, %s88
    %p97 = scmp.eq.s32.totalorder %s14, 2
    %p98 = por %p96, %p97
    %p99 = scmp.ne.s32.totalorder %s88, %s89
    %p100 = scmp.eq.s32.totalorder %s14, 0
    %p101 = por %p99, %p100
    %p102 = scmp.ne.s32.totalorder %s88, %s89
    %p103 = scmp.eq.s32.totalorder %s15, 2
    %p104 = por %p102, %p103
    %p106 = scmp.ne.s32.totalorder %s89, %s105
    %p107 = scmp.eq.s32.totalorder %s15, 0
    %p108 = por %p106, %p107
    %s109 = ssub.s32 %s16, %s28
    %s110 = ssub.s32 %s17, %s24
    %s111 = sor.u32 %s109, %s110
    %p112 = scmp.eq.s32.totalorder %s111, 0
    %s114 = sadd.s32 %s113, 1
    %s115 = scalar_select %p112, %s113, %s114
    %p118 = pneg %p112
    %p119 = scmp.eq.s32.totalorder %s9, 2
    %p120 = por %p118, %p119
    %p121 = scmp.ne.s32.totalorder %s113, %s116
    %p122 = scmp.eq.s32.totalorder %s9, 0
    %p123 = por %p121, %p122
    %p124 = scmp.ne.s32.totalorder %s113, %s116
    %p125 = scmp.eq.s32.totalorder %s14, 2
    %p126 = por %p124, %p125
    %p127 = scmp.ne.s32.totalorder %s116, %s117
    %p128 = scmp.eq.s32.totalorder %s14, 0
    %p129 = por %p127, %p128
    %p130 = scmp.ne.s32.totalorder %s116, %s117
    %p131 = scmp.eq.s32.totalorder %s15, 2
    %p132 = por %p130, %p131
    %p134 = scmp.ne.s32.totalorder %s117, %s133
    %p135 = scmp.eq.s32.totalorder %s15, 0
    %p136 = por %p134, %p135
    %p137 = scmp.le.s32.totalorder 1, %s9
    %p138 = scmp.lt.s32.totalorder %s9, 4
    %p139 = pnand %p137, %p138
    %p140 = pneg %p139
    // Predicated region
    $region9: #{arfaf_net_forward.9} parent=5 // pred_check
      _
    $region10: #{arfaf_net_forward.9} parent=5 // pred_check_branch
      %142 = sbr.rel (%p139) target = $region12
    $region11: #{arfaf_net_forward.9} parent=5 // pred_region
      %s143 = ssub.s32 %s9, 1
    $region12: #{arfaf_net_forward.9} parent=5 // pred_fallthru
      _
    %p144 = scmp.lt.s32.totalorder %s9, 3
    // Predicated region
    $region13: #{arfaf_net_forward.9} parent=5 // pred_check
      %p145 = pneg %p144
    $region14: #{arfaf_net_forward.9} parent=5 // pred_check_branch
      %147 = sbr.rel (%p145) target = $region16
    $region15: #{arfaf_net_forward.9} parent=5 // pred_region
      // Predicated region
      $region17: #{arfaf_net_forward.9} parent=15 // pred_check
        %p148 = pneg %p43
      $region18: #{arfaf_net_forward.9} parent=15 // pred_check_branch
        %150 = sbr.rel (%p148) target = $region20
      $region19: #{arfaf_net_forward.9} parent=15 // pred_region
        %s151 = smul.u32 4, %s17
        %p152 = scmp.lt.s32.totalorder %s16, 2
        %s153 = scalar_select %p152, %s16, 2
        %p154 = scmp.lt.s32.totalorder %s151, 3
        %s155 = scalar_select %p154, %s151, 3
        %s156 = smul.addr %s153, 4
        %s157 = sadd.s32 %s155, %s156
        %s158 = smul.addr %s157, 4
        %s159 = scalar_lea.vmem %s0, %s158
        %s160 = smul.u32 4, %s17
      $region20: #{arfaf_net_forward.9} parent=15 // pred_fallthru
        _
      // Predicated region
      $region21: #{arfaf_net_forward.9} parent=15 // pred_check
        %p161 = pneg %p69
      $region22: #{arfaf_net_forward.9} parent=15 // pred_check_branch
        %163 = sbr.rel (%p161) target = $region24
      $region23: #{arfaf_net_forward.9} parent=15 // pred_region
        %p164 = scmp.lt.s32.totalorder %s16, 2
        %s165 = scalar_select %p164, %s16, 2
        %s166 = smul.addr %s165, 16
        %s167 = smul.addr %s166, 4
        %s168 = scalar_lea.vmem %s1, %s167
      $region24: #{arfaf_net_forward.9} parent=15 // pred_fallthru
        _
      // Predicated region
      $region25: #{arfaf_net_forward.9} parent=15 // pred_check
        %p169 = pneg %p95
      $region26: #{arfaf_net_forward.9} parent=15 // pred_check_branch
        %171 = sbr.rel (%p169) target = $region28
      $region27: #{arfaf_net_forward.9} parent=15 // pred_region
        %p172 = scmp.lt.s32.totalorder %s16, 2
        %s173 = scalar_select %p172, %s16, 2
        %s174 = smul.addr %s173, 8
        %s175 = scalar_lea.vmem %s2, %s174
      $region28: #{arfaf_net_forward.9} parent=15 // pred_fallthru
        _
    $region16: #{arfaf_net_forward.9} parent=5 // pred_fallthru
      _
    %p176 = scmp.le.s32.totalorder 1, %s9
    %p177 = scmp.lt.s32.totalorder %s9, 4
    %p178 = pnand %p176, %p177
    %p179 = pneg %p178
    // Predicated region
    $region29: #{arfaf_net_forward.9} parent=5 // pred_check
      _
    $region30: #{arfaf_net_forward.9} parent=5 // pred_check_branch
      %181 = sbr.rel (%p178) target = $region32
    $region31: #{arfaf_net_forward.9} parent=5 // pred_region
      %s182 = ssub.s32 %s9, 1
      %s183 = smul.u32 4, %s19
      %p184 = scmp.lt.s32.totalorder %s18, 2
      %s185 = scalar_select %p184, %s18, 2
      %p186 = scmp.lt.s32.totalorder %s183, 3
      %s187 = scalar_select %p186, %s183, 3
      %s188 = smul.addr %s185, 4
      %s189 = sadd.s32 %s187, %s188
      %s190 = smul.addr %s189, 4
      %s191 = scalar_lea.vmem %s0, %s190
      %p192 = pneg %p49
      %p193 = pneg %p46
      %p194 = scmp.lt.s32.totalorder %s18, 2
      %s195 = scalar_select %p194, %s18, 2
      %s196 = smul.addr %s195, 16
      %s197 = smul.addr %s196, 4
      %s198 = scalar_lea.vmem %s1, %s197
      %p199 = pneg %p75
      %p200 = pneg %p72
      %p201 = scmp.lt.s32.totalorder %s18, 2
      %s202 = scalar_select %p201, %s18, 2
      %s203 = smul.addr %s202, 8
      %s204 = scalar_lea.vmem %s2, %s203
      %p205 = pneg %p101
      %p206 = pneg %p98
      %p207 = pneg %p129
      %p208 = pneg %p126
      %s209 = smul.u32 4, %s19
      %p210 = scmp.lt.s32.totalorder %s18, 2
      %s211 = scalar_select %p210, %s18, 2
      %p212 = scmp.lt.s32.totalorder %s209, 3
      %s213 = scalar_select %p212, %s209, 3
      %s214 = smul.addr %s211, 4
      %s215 = sadd.s32 %s213, %s214
      %s216 = smul.addr %s215, 4
      %s217 = scalar_lea.vmem %s3, %s216
      %s218 = smul.u32 4, %s19
      %p219 = scmp.lt.s32.totalorder %s18, 2
      %s220 = scalar_select %p219, %s18, 2
      %p221 = scmp.lt.s32.totalorder %s218, 3
      %s222 = scalar_select %p221, %s218, 3
      %s223 = smul.addr %s220, 4
      %s224 = sadd.s32 %s222, %s223
      %s225 = smul.addr %s224, 4
      %s226 = scalar_lea.vmem %s0, %s225
      %s227 = smul.u32 4, %s19
      %p228 = scmp.lt.s32.totalorder %s18, 2
      %s229 = scalar_select %p228, %s18, 2
      %s230 = smul.addr %s229, 16
      %s231 = smul.addr %s230, 4
      %s232 = scalar_lea.vmem %s1, %s231
      %p233 = scmp.lt.s32.totalorder %s18, 2
      %s234 = scalar_select %p233, %s18, 2
      %s235 = smul.addr %s234, 8
      %s236 = scalar_lea.vmem %s2, %s235
      %s237 = smul.u32 4, %s19
      %p238 = scmp.lt.s32.totalorder %s18, 2
      %s239 = scalar_select %p238, %s18, 2
      %p240 = scmp.lt.s32.totalorder %s237, 3
      %s241 = scalar_select %p240, %s237, 3
      %s242 = smul.addr %s239, 4
      %s243 = sadd.s32 %s241, %s242
      %s244 = smul.addr %s243, 4
      %s245 = scalar_lea.vmem %s3, %s244
      %s246 = smul.u32 4, %s19
      %v248 = vld [vmem:[%s226] sm:$0xf]
      %v249 = vld [vmem:[%s226 + $0x4] sm:$0xf]
      %v250 = vld [vmem:[%s226 + $0x8] sm:$0xf]
      %v251 = vld [vmem:[%s226 + $0xc] sm:$0xf]
      %v252 = vld [vmem:[%s232] sm:$0xf]
      %v253 = vld [vmem:[%s232 + $0x4] sm:$0xf]
      %v254 = vld [vmem:[%s232 + $0x8] sm:$0xf]
      %v255 = vld [vmem:[%s232 + $0xc] sm:$0xf]
      %v256 = vld [vmem:[%s232 + $0x10] sm:$0xf]
      %v257 = vld [vmem:[%s232 + $0x14] sm:$0xf]
      %v258 = vld [vmem:[%s232 + $0x18] sm:$0xf]
      %v259 = vld [vmem:[%s232 + $0x1c] sm:$0xf]
      %v260 = vld [vmem:[%s232 + $0x20] sm:$0xf]
      %v261 = vld [vmem:[%s232 + $0x24] sm:$0xf]
      %v262 = vld [vmem:[%s232 + $0x28] sm:$0xf]
      %v263 = vld [vmem:[%s232 + $0x2c] sm:$0xf]
      %v264 = vld [vmem:[%s232 + $0x30] sm:$0xf]
      %v265 = vld [vmem:[%s232 + $0x34] sm:$0xf]
      %v266 = vld [vmem:[%s232 + $0x38] sm:$0xf]
      %v267 = vld [vmem:[%s232 + $0x3c] sm:$0xf]
      %v268 = vld [vmem:[%s236] sm:$0x1]
      %v269 = vlaneseq
      %v270 = vshrl.u32 %v269, 7
      %v271 = vsub.s32 0, %v270
      %v272 = vrot.slane %v268, %v271
      %v277 = vunpack.c.l.b16 %v248
      %v278 = vunpack.c.l.b16 %v249
      %v279 = vunpack.c.l.b16 %v250
      %v280 = vunpack.c.l.b16 %v251
      %v281 = vpack.c.b16 %v278, %v277
      %v282 = vpack.c.b16 %v280, %v279
      %v301 = vunpack.c.l.b16 %v252
      %v302 = vunpack.c.l.b16 %v253
      %v303 = vunpack.c.l.b16 %v254
      %v304 = vunpack.c.l.b16 %v255
      %v305 = vunpack.c.l.b16 %v256
      %v306 = vunpack.c.l.b16 %v257
      %v307 = vunpack.c.l.b16 %v258
      %v308 = vunpack.c.l.b16 %v259
      %v309 = vunpack.c.l.b16 %v260
      %v310 = vunpack.c.l.b16 %v261
      %v311 = vunpack.c.l.b16 %v262
      %v312 = vunpack.c.l.b16 %v263
      %v313 = vunpack.c.l.b16 %v264
      %v314 = vunpack.c.l.b16 %v265
      %v315 = vunpack.c.l.b16 %v266
      %v316 = vunpack.c.l.b16 %v267
      %v317 = vpack.c.b16 %v302, %v301
      %v318 = vpack.c.b16 %v304, %v303
      %v319 = vpack.c.b16 %v306, %v305
      %v320 = vpack.c.b16 %v308, %v307
      %v321 = vpack.c.b16 %v310, %v309
      %v322 = vpack.c.b16 %v312, %v311
      %v323 = vpack.c.b16 %v314, %v313
      %v324 = vpack.c.b16 %v316, %v315
      %333 = vmatprep.subr.bf16.mxu0 0
      %334 = vmatpush1.bf16.msra.mxu0 %v317
      %335 = vmatprep.subr.bf16.mxu0 0
      %336 = vmatpush1.bf16.msra.mxu0 %v318
      %337 = vmatprep.subr.bf16.mxu0 0
      %338 = vmatpush1.bf16.msra.mxu0 %v319
      %339 = vmatprep.subr.bf16.mxu0 0
      %340 = vmatpush1.bf16.msra.mxu0 %v320
      %341 = vmatprep.subr.bf16.mxu0 0
      %342 = vmatpush1.bf16.msra.mxu0 %v321
      %343 = vmatprep.subr.bf16.mxu0 0
      %344 = vmatpush1.bf16.msra.mxu0 %v322
      %345 = vmatprep.subr.bf16.mxu0 0
      %346 = vmatpush1.bf16.msra.mxu0 %v323
      %347 = vmatprep.subr.bf16.mxu0 0
      %348 = vmatpush1.bf16.msra.mxu0 %v324
      %349 = vmatprep.subr.bf16.mxu0 0
      %350 = vmatpush1.bf16.msra.mxu0 0
      %351 = vmatprep.subr.bf16.mxu0 0
      %352 = vmatpush1.bf16.msra.mxu0 0
      %353 = vmatprep.subr.bf16.mxu0 0
      %354 = vmatpush1.bf16.msra.mxu0 0
      %355 = vmatprep.subr.bf16.mxu0 0
      %356 = vmatpush1.bf16.msra.mxu0 0
      %357 = vmatprep.subr.bf16.mxu0 0
      %358 = vmatpush1.bf16.msra.mxu0 0
      %359 = vmatprep.subr.bf16.mxu0 0
      %360 = vmatpush1.bf16.msra.mxu0 0
      %361 = vmatprep.subr.bf16.mxu0 0
      %362 = vmatpush1.bf16.msra.mxu0 0
      %363 = vmatprep.subr.bf16.mxu0 0
      %364 = vmatpush1.bf16.msra.mxu0 0
      %365 = vmatprep.mubr.bf16.mxu0 0
      %366 = vmatmul.mubr.bf16.gmra.mrb[0].mxu0 %v281
      %v367 = vpop.f32.mrb[0].mxu0
      %v368 = vadd.f32 %v272, %v367
      %v369 = vpop.f32.mrb[0].mxu0
      %v370 = vpop.f32.mrb[0].mxu0
      %v371 = vadd.f32 %v272, %v370
      %v372 = vpop.f32.mrb[0].mxu0
      %373 = vmatprep.mubr.bf16.mxu0 0
      %374 = vmatmul.mubr.bf16.gmra.mrb[0].mxu0 %v282
      %v375 = vpop.f32.mrb[0].mxu0
      %v376 = vadd.f32 %v272, %v375
      %v377 = vpop.f32.mrb[0].mxu0
      %v378 = vpop.f32.mrb[0].mxu0
      %v379 = vadd.f32 %v272, %v378
      %v380 = vpop.f32.mrb[0].mxu0
      %381 = vdwg.mxu0
      %v382 = vmax.f32 %v368, 0.0
      %v383 = vmax.f32 %v371, 0.0
      %v384 = vmax.f32 %v376, 0.0
      %v385 = vmax.f32 %v379, 0.0
      %v386 = vpack.c.bf16 %v383, %v382
      %v387 = vpack.c.bf16 %v385, %v384
      %v390 = vunpack.c.l.b16 %v386
      %v391 = vunpack.c.h.b16 %v386
      %v392 = vunpack.c.l.b16 %v387
      %v393 = vunpack.c.h.b16 %v387
      %v394 = vpack.c.b16 %v390, %v390
      %v395 = vpack.c.b16 %v391, %v391
      %v396 = vpack.c.b16 %v392, %v392
      %v397 = vpack.c.b16 %v393, %v393
      %402 = vst [vmem:[%s245] sm:$0xf] %v394
      %403 = vst [vmem:[%s245 + $0x4] sm:$0xf] %v395
      %404 = vst [vmem:[%s245 + $0x8] sm:$0xf] %v396
      %405 = vst [vmem:[%s245 + $0xc] sm:$0xf] %v397
      %s406 = smul.u32 4, %s19
      %p407 = scmp.lt.s32.totalorder %s18, 2
      %s408 = scalar_select %p407, %s18, 2
      %p409 = scmp.lt.s32.totalorder %s406, 3
      %s410 = scalar_select %p409, %s406, 3
      %s411 = smul.addr %s408, 4
      %s412 = sadd.s32 %s410, %s411
      %s413 = smul.addr %s412, 4
      %s414 = scalar_lea.vmem %s3, %s413
      // Predicated region
      $region33: #{arfaf_net_forward.9} parent=31 // pred_check
        %p415 = pneg %p126
      $region34: #{arfaf_net_forward.9} parent=31 // pred_check_branch
        %417 = sbr.rel (%p415) target = $region36
      $region35: #{arfaf_net_forward.9} parent=31 // pred_region
        %s418 = smul.u32 4, %s19
      $region36: #{arfaf_net_forward.9} parent=31 // pred_fallthru
        _
    $region32: #{arfaf_net_forward.9} parent=5 // pred_fallthru
      _
    %p419 = scmp.le.s32.totalorder 2, %s9
    // Predicated region
    $region37: #{arfaf_net_forward.9} parent=5 // pred_check
      %p420 = pneg %p419
    $region38: #{arfaf_net_forward.9} parent=5 // pred_check_branch
      %422 = sbr.rel (%p420) target = $region40
    $region39: #{arfaf_net_forward.9} parent=5 // pred_region
      %s423 = ssub.s32 %s9, 2
      // Predicated region
      $region41: #{arfaf_net_forward.9} parent=39 // pred_check
        %p424 = pneg %p132
      $region42: #{arfaf_net_forward.9} parent=39 // pred_check_branch
        %426 = sbr.rel (%p424) target = $region44
      $region43: #{arfaf_net_forward.9} parent=39 // pred_region
        %s427 = smul.u32 4, %s21
        %p428 = scmp.lt.s32.totalorder %s20, 2
        %s429 = scalar_select %p428, %s20, 2
        %p430 = scmp.lt.s32.totalorder %s427, 3
        %s431 = scalar_select %p430, %s427, 3
        %s432 = smul.addr %s429, 4
        %s433 = sadd.s32 %s431, %s432
        %s434 = smul.addr %s433, 4
        %s435 = scalar_lea.vmem %s3, %s434
      $region44: #{arfaf_net_forward.9} parent=39 // pred_fallthru
        _
    $region40: #{arfaf_net_forward.9} parent=5 // pred_fallthru
      _
  $region6: #{arfaf_net_forward.9} parent=0 // loop_footer
    %s13 = sadd.s32 1, %s9
  $region7: #{arfaf_net_forward.9} parent=0 // loop_footer_branch
    %8 = sbr.rel target = $region3
  $region8: #{arfaf_net_forward.9} parent=0 // loop_exit
    _

// kernel: arfaf_net_forward.10
$region0: #{arfaf_net_forward.10}
  #allocation0 [shape = 'u32[]', space=smem, size = 0x4, offset = 0x4, fixed_abs, tag = 'smem constant byte address 0x4 - core index']
  #allocation1 [shape = 'u32[144,128]{1,0:T(1,128)}', space=vmem, size = 0x12000, scoped, tag = 'internal scratch']
  %s0 = inlined_call_operand.vmem [shape: bf16[3,16,256], index: 0, kind: input, shape index: {}]
  %s1 = inlined_call_operand.vmem [shape: bf16[3,256,128], index: 1, kind: input, shape index: {}]
  %s2 = inlined_call_operand.vmem [shape: f32[3,8,128], index: 2, kind: input, shape index: {}]
  %s3 = inlined_call_operand.vmem [shape: bf16[3,16,128], index: 3, kind: output, shape index: {}]
  %s4 = sld [smem:[#allocation0]]
  $region45: #{arfaf_net_forward.10} parent=0
    _
  %s6 = ssub.s32 1, %s4
  %s7 = scalar_select 0, %s6, %s4
  loop: start=0, step=1, limit=5
  $region2: #{arfaf_net_forward.10} parent=0 // loop_pre_header
    _
  $region3: #{arfaf_net_forward.10} parent=0 // loop_header
    %s9 = sphi 0, %s13
    %p10 = scmp.ge.s32.totalorder %s9, 5
    %s16 = sphi 0, %s28
    %s17 = sphi 0, %s24
    %s18 = sphi 0, %s16
    %s19 = sphi 0, %s17
    %s20 = sphi 0, %s18
    %s21 = sphi 0, %s19
    %s33 = sphi 0, %s35
    %s36 = sphi 0, %s33
    %s37 = sphi 0, %s36
    %s53 = sphi 0, %s37
    %s59 = sphi 0, %s61
    %s62 = sphi 0, %s59
    %s63 = sphi 0, %s62
    %s79 = sphi 0, %s63
    %s85 = sphi 0, %s87
    %s88 = sphi 0, %s85
    %s89 = sphi 0, %s88
    %s105 = sphi 0, %s89
    %s113 = sphi 0, %s115
    %s116 = sphi 0, %s113
    %s117 = sphi 0, %s116
    %s133 = sphi 0, %s117
  $region4: #{arfaf_net_forward.10} parent=0 // loop_header_branch
    %12 = sbr.rel (%p10) target = $region8
  $region5: #{arfaf_net_forward.10} parent=0 // loop_body
    %s14 = ssub.s32 %s9, 1
    %s15 = ssub.s32 %s9, 2
    %s22 = sadd.s32 1, %s17
    %p23 = scmp.ge.s32.totalorder %s22, 1
    %s24 = scalar_select %p23, 0, %s22
    %s25 = sadd.s32 1, %s16
    %s26 = scalar_select %p23, %s25, %s16
    %p27 = scmp.ge.s32.totalorder %s26, 3
    %s28 = scalar_select %p27, 0, %s26
    %s29 = ssub.s32 %s16, %s28
    %s30 = ssub.s32 %s17, %s24
    %s31 = sor.u32 %s29, %s30
    %p32 = scmp.eq.s32.totalorder %s31, 0
    %s34 = sadd.s32 %s33, 1
    %s35 = scalar_select %p32, %s33, %s34
    %p38 = pneg %p32
    %p39 = scmp.eq.s32.totalorder %s9, 2
    %p40 = por %p38, %p39
    %p41 = scmp.ne.s32.totalorder %s33, %s36
    %p42 = scmp.eq.s32.totalorder %s9, 0
    %p43 = por %p41, %p42
    %p44 = scmp.ne.s32.totalorder %s33, %s36
    %p45 = scmp.eq.s32.totalorder %s14, 2
    %p46 = por %p44, %p45
    %p47 = scmp.ne.s32.totalorder %s36, %s37
    %p48 = scmp.eq.s32.totalorder %s14, 0
    %p49 = por %p47, %p48
    %p50 = scmp.ne.s32.totalorder %s36, %s37
    %p51 = scmp.eq.s32.totalorder %s15, 2
    %p52 = por %p50, %p51
    %p54 = scmp.ne.s32.totalorder %s37, %s53
    %p55 = scmp.eq.s32.totalorder %s15, 0
    %p56 = por %p54, %p55
    %s57 = ssub.s32 %s16, %s28
    %p58 = scmp.eq.s32.totalorder %s57, 0
    %s60 = sadd.s32 %s59, 1
    %s61 = scalar_select %p58, %s59, %s60
    %p64 = pneg %p58
    %p65 = scmp.eq.s32.totalorder %s9, 2
    %p66 = por %p64, %p65
    %p67 = scmp.ne.s32.totalorder %s59, %s62
    %p68 = scmp.eq.s32.totalorder %s9, 0
    %p69 = por %p67, %p68
    %p70 = scmp.ne.s32.totalorder %s59, %s62
    %p71 = scmp.eq.s32.totalorder %s14, 2
    %p72 = por %p70, %p71
    %p73 = scmp.ne.s32.totalorder %s62, %s63
    %p74 = scmp.eq.s32.totalorder %s14, 0
    %p75 = por %p73, %p74
    %p76 = scmp.ne.s32.totalorder %s62, %s63
    %p77 = scmp.eq.s32.totalorder %s15, 2
    %p78 = por %p76, %p77
    %p80 = scmp.ne.s32.totalorder %s63, %s79
    %p81 = scmp.eq.s32.totalorder %s15, 0
    %p82 = por %p80, %p81
    %s83 = ssub.s32 %s16, %s28
    %p84 = scmp.eq.s32.totalorder %s83, 0
    %s86 = sadd.s32 %s85, 1
    %s87 = scalar_select %p84, %s85, %s86
    %p90 = pneg %p84
    %p91 = scmp.eq.s32.totalorder %s9, 2
    %p92 = por %p90, %p91
    %p93 = scmp.ne.s32.totalorder %s85, %s88
    %p94 = scmp.eq.s32.totalorder %s9, 0
    %p95 = por %p93, %p94
    %p96 = scmp.ne.s32.totalorder %s85, %s88
    %p97 = scmp.eq.s32.totalorder %s14, 2
    %p98 = por %p96, %p97
    %p99 = scmp.ne.s32.totalorder %s88, %s89
    %p100 = scmp.eq.s32.totalorder %s14, 0
    %p101 = por %p99, %p100
    %p102 = scmp.ne.s32.totalorder %s88, %s89
    %p103 = scmp.eq.s32.totalorder %s15, 2
    %p104 = por %p102, %p103
    %p106 = scmp.ne.s32.totalorder %s89, %s105
    %p107 = scmp.eq.s32.totalorder %s15, 0
    %p108 = por %p106, %p107
    %s109 = ssub.s32 %s16, %s28
    %s110 = ssub.s32 %s17, %s24
    %s111 = sor.u32 %s109, %s110
    %p112 = scmp.eq.s32.totalorder %s111, 0
    %s114 = sadd.s32 %s113, 1
    %s115 = scalar_select %p112, %s113, %s114
    %p118 = pneg %p112
    %p119 = scmp.eq.s32.totalorder %s9, 2
    %p120 = por %p118, %p119
    %p121 = scmp.ne.s32.totalorder %s113, %s116
    %p122 = scmp.eq.s32.totalorder %s9, 0
    %p123 = por %p121, %p122
    %p124 = scmp.ne.s32.totalorder %s113, %s116
    %p125 = scmp.eq.s32.totalorder %s14, 2
    %p126 = por %p124, %p125
    %p127 = scmp.ne.s32.totalorder %s116, %s117
    %p128 = scmp.eq.s32.totalorder %s14, 0
    %p129 = por %p127, %p128
    %p130 = scmp.ne.s32.totalorder %s116, %s117
    %p131 = scmp.eq.s32.totalorder %s15, 2
    %p132 = por %p130, %p131
    %p134 = scmp.ne.s32.totalorder %s117, %s133
    %p135 = scmp.eq.s32.totalorder %s15, 0
    %p136 = por %p134, %p135
    %p137 = scmp.le.s32.totalorder 1, %s9
    %p138 = scmp.lt.s32.totalorder %s9, 4
    %p139 = pnand %p137, %p138
    %p140 = pneg %p139
    // Predicated region
    $region9: #{arfaf_net_forward.10} parent=5 // pred_check
      _
    $region10: #{arfaf_net_forward.10} parent=5 // pred_check_branch
      %142 = sbr.rel (%p139) target = $region12
    $region11: #{arfaf_net_forward.10} parent=5 // pred_region
      %s143 = ssub.s32 %s9, 1
    $region12: #{arfaf_net_forward.10} parent=5 // pred_fallthru
      _
    %p144 = scmp.lt.s32.totalorder %s9, 3
    // Predicated region
    $region13: #{arfaf_net_forward.10} parent=5 // pred_check
      %p145 = pneg %p144
    $region14: #{arfaf_net_forward.10} parent=5 // pred_check_branch
      %147 = sbr.rel (%p145) target = $region16
    $region15: #{arfaf_net_forward.10} parent=5 // pred_region
      // Predicated region
      $region17: #{arfaf_net_forward.10} parent=15 // pred_check
        %p148 = pneg %p43
      $region18: #{arfaf_net_forward.10} parent=15 // pred_check_branch
        %150 = sbr.rel (%p148) target = $region20
      $region19: #{arfaf_net_forward.10} parent=15 // pred_region
        %s151 = smul.u32 2, %s17
        %p152 = scmp.lt.s32.totalorder %s16, 2
        %s153 = scalar_select %p152, %s16, 2
        %p154 = scmp.lt.s32.totalorder %s151, 1
        %s155 = scalar_select %p154, %s151, 1
        %s156 = smul.addr %s155, 2
        %s157 = smul.addr %s153, 4
        %s158 = sadd.s32 %s156, %s157
        %s159 = smul.addr %s158, 4
        %s160 = scalar_lea.vmem %s0, %s159
        %s161 = smul.u32 2, %s17
      $region20: #{arfaf_net_forward.10} parent=15 // pred_fallthru
        _
      // Predicated region
      $region21: #{arfaf_net_forward.10} parent=15 // pred_check
        %p162 = pneg %p69
      $region22: #{arfaf_net_forward.10} parent=15 // pred_check_branch
        %164 = sbr.rel (%p162) target = $region24
      $region23: #{arfaf_net_forward.10} parent=15 // pred_region
        %p165 = scmp.lt.s32.totalorder %s16, 2
        %s166 = scalar_select %p165, %s16, 2
        %s167 = smul.addr %s166, 32
        %s168 = smul.addr %s167, 4
        %s169 = scalar_lea.vmem %s1, %s168
      $region24: #{arfaf_net_forward.10} parent=15 // pred_fallthru
        _
      // Predicated region
      $region25: #{arfaf_net_forward.10} parent=15 // pred_check
        %p170 = pneg %p95
      $region26: #{arfaf_net_forward.10} parent=15 // pred_check_branch
        %172 = sbr.rel (%p170) target = $region28
      $region27: #{arfaf_net_forward.10} parent=15 // pred_region
        %p173 = scmp.lt.s32.totalorder %s16, 2
        %s174 = scalar_select %p173, %s16, 2
        %s175 = smul.addr %s174, 8
        %s176 = scalar_lea.vmem %s2, %s175
      $region28: #{arfaf_net_forward.10} parent=15 // pred_fallthru
        _
    $region16: #{arfaf_net_forward.10} parent=5 // pred_fallthru
      _
    %p177 = scmp.le.s32.totalorder 1, %s9
    %p178 = scmp.lt.s32.totalorder %s9, 4
    %p179 = pnand %p177, %p178
    %p180 = pneg %p179
    // Predicated region
    $region29: #{arfaf_net_forward.10} parent=5 // pred_check
      _
    $region30: #{arfaf_net_forward.10} parent=5 // pred_check_branch
      %182 = sbr.rel (%p179) target = $region32
    $region31: #{arfaf_net_forward.10} parent=5 // pred_region
      %s183 = ssub.s32 %s9, 1
      %s184 = smul.u32 2, %s19
      %p185 = scmp.lt.s32.totalorder %s18, 2
      %s186 = scalar_select %p185, %s18, 2
      %p187 = scmp.lt.s32.totalorder %s184, 1
      %s188 = scalar_select %p187, %s184, 1
      %s189 = smul.addr %s188, 2
      %s190 = smul.addr %s186, 4
      %s191 = sadd.s32 %s189, %s190
      %s192 = smul.addr %s191, 4
      %s193 = scalar_lea.vmem %s0, %s192
      %p194 = pneg %p49
      %p195 = pneg %p46
      %p196 = scmp.lt.s32.totalorder %s18, 2
      %s197 = scalar_select %p196, %s18, 2
      %s198 = smul.addr %s197, 32
      %s199 = smul.addr %s198, 4
      %s200 = scalar_lea.vmem %s1, %s199
      %p201 = pneg %p75
      %p202 = pneg %p72
      %p203 = scmp.lt.s32.totalorder %s18, 2
      %s204 = scalar_select %p203, %s18, 2
      %s205 = smul.addr %s204, 8
      %s206 = scalar_lea.vmem %s2, %s205
      %p207 = pneg %p101
      %p208 = pneg %p98
      %p209 = pneg %p129
      %p210 = pneg %p126
      %s211 = smul.u32 2, %s19
      %p212 = scmp.lt.s32.totalorder %s18, 2
      %s213 = scalar_select %p212, %s18, 2
      %p214 = scmp.lt.s32.totalorder %s211, 1
      %s215 = scalar_select %p214, %s211, 1
      %s216 = smul.addr %s213, 2
      %s217 = sadd.s32 %s215, %s216
      %s218 = smul.addr %s217, 4
      %s219 = scalar_lea.vmem %s3, %s218
      %s220 = smul.u32 2, %s19
      %p221 = scmp.lt.s32.totalorder %s18, 2
      %s222 = scalar_select %p221, %s18, 2
      %p223 = scmp.lt.s32.totalorder %s220, 1
      %s224 = scalar_select %p223, %s220, 1
      %s225 = smul.addr %s224, 2
      %s226 = smul.addr %s222, 4
      %s227 = sadd.s32 %s225, %s226
      %s228 = smul.addr %s227, 4
      %s229 = scalar_lea.vmem %s0, %s228
      %s230 = smul.u32 2, %s19
      %p231 = scmp.lt.s32.totalorder %s18, 2
      %s232 = scalar_select %p231, %s18, 2
      %s233 = smul.addr %s232, 32
      %s234 = smul.addr %s233, 4
      %s235 = scalar_lea.vmem %s1, %s234
      %p236 = scmp.lt.s32.totalorder %s18, 2
      %s237 = scalar_select %p236, %s18, 2
      %s238 = smul.addr %s237, 8
      %s239 = scalar_lea.vmem %s2, %s238
      %s240 = smul.u32 2, %s19
      %p241 = scmp.lt.s32.totalorder %s18, 2
      %s242 = scalar_select %p241, %s18, 2
      %p243 = scmp.lt.s32.totalorder %s240, 1
      %s244 = scalar_select %p243, %s240, 1
      %s245 = smul.addr %s242, 2
      %s246 = sadd.s32 %s244, %s245
      %s247 = smul.addr %s246, 4
      %s248 = scalar_lea.vmem %s3, %s247
      %s249 = smul.u32 2, %s19
      %v251 = vld [vmem:[%s229] sm:$0xff]
      %v252 = vld [vmem:[%s229 + $0x8] sm:$0xff]
      %v253 = vld [vmem:[%s235] sm:$0xf]
      %v254 = vld [vmem:[%s235 + $0x4] sm:$0xf]
      %v255 = vld [vmem:[%s235 + $0x8] sm:$0xf]
      %v256 = vld [vmem:[%s235 + $0xc] sm:$0xf]
      %v257 = vld [vmem:[%s235 + $0x10] sm:$0xf]
      %v258 = vld [vmem:[%s235 + $0x14] sm:$0xf]
      %v259 = vld [vmem:[%s235 + $0x18] sm:$0xf]
      %v260 = vld [vmem:[%s235 + $0x1c] sm:$0xf]
      %v261 = vld [vmem:[%s235 + $0x20] sm:$0xf]
      %v262 = vld [vmem:[%s235 + $0x24] sm:$0xf]
      %v263 = vld [vmem:[%s235 + $0x28] sm:$0xf]
      %v264 = vld [vmem:[%s235 + $0x2c] sm:$0xf]
      %v265 = vld [vmem:[%s235 + $0x30] sm:$0xf]
      %v266 = vld [vmem:[%s235 + $0x34] sm:$0xf]
      %v267 = vld [vmem:[%s235 + $0x38] sm:$0xf]
      %v268 = vld [vmem:[%s235 + $0x3c] sm:$0xf]
      %v269 = vld [vmem:[%s235 + $0x40] sm:$0xf]
      %v270 = vld [vmem:[%s235 + $0x44] sm:$0xf]
      %v271 = vld [vmem:[%s235 + $0x48] sm:$0xf]
      %v272 = vld [vmem:[%s235 + $0x4c] sm:$0xf]
      %v273 = vld [vmem:[%s235 + $0x50] sm:$0xf]
      %v274 = vld [vmem:[%s235 + $0x54] sm:$0xf]
      %v275 = vld [vmem:[%s235 + $0x58] sm:$0xf]
      %v276 = vld [vmem:[%s235 + $0x5c] sm:$0xf]
      %v277 = vld [vmem:[%s235 + $0x60] sm:$0xf]
      %v278 = vld [vmem:[%s235 + $0x64] sm:$0xf]
      %v279 = vld [vmem:[%s235 + $0x68] sm:$0xf]
      %v280 = vld [vmem:[%s235 + $0x6c] sm:$0xf]
      %v281 = vld [vmem:[%s235 + $0x70] sm:$0xf]
      %v282 = vld [vmem:[%s235 + $0x74] sm:$0xf]
      %v283 = vld [vmem:[%s235 + $0x78] sm:$0xf]
      %v284 = vld [vmem:[%s235 + $0x7c] sm:$0xf]
      %v285 = vld [vmem:[%s239] sm:$0x1]
      %v286 = vlaneseq
      %v287 = vshrl.u32 %v286, 7
      %v288 = vsub.s32 0, %v287
      %v289 = vrot.slane %v285, %v288
      %v292 = vunpack.c.l.b16 %v251
      %v293 = vunpack.c.h.b16 %v251
      %v294 = vunpack.c.l.b16 %v252
      %v295 = vunpack.c.h.b16 %v252
      %v296 = vpack.c.b16 %v294, %v292
      %v297 = vpack.c.b16 %v295, %v293
      %v332 = vunpack.c.l.b16 %v253
      %v333 = vunpack.c.l.b16 %v254
      %v334 = vunpack.c.l.b16 %v255
      %v335 = vunpack.c.l.b16 %v256
      %v336 = vunpack.c.l.b16 %v257
      %v337 = vunpack.c.l.b16 %v258
      %v338 = vunpack.c.l.b16 %v259
      %v339 = vunpack.c.l.b16 %v260
      %v340 = vunpack.c.l.b16 %v261
      %v341 = vunpack.c.l.b16 %v262
      %v342 = vunpack.c.l.b16 %v263
      %v343 = vunpack.c.l.b16 %v264
      %v344 = vunpack.c.l.b16 %v265
      %v345 = vunpack.c.l.b16 %v266
      %v346 = vunpack.c.l.b16 %v267
      %v347 = vunpack.c.l.b16 %v268
      %v348 = vunpack.c.l.b16 %v269
      %v349 = vunpack.c.l.b16 %v270
      %v350 = vunpack.c.l.b16 %v271
      %v351 = vunpack.c.l.b16 %v272
      %v352 = vunpack.c.l.b16 %v273
      %v353 = vunpack.c.l.b16 %v274
      %v354 = vunpack.c.l.b16 %v275
      %v355 = vunpack.c.l.b16 %v276
      %v356 = vunpack.c.l.b16 %v277
      %v357 = vunpack.c.l.b16 %v278
      %v358 = vunpack.c.l.b16 %v279
      %v359 = vunpack.c.l.b16 %v280
      %v360 = vunpack.c.l.b16 %v281
      %v361 = vunpack.c.l.b16 %v282
      %v362 = vunpack.c.l.b16 %v283
      %v363 = vunpack.c.l.b16 %v284
      %v364 = vpack.c.b16 %v333, %v332
      %v365 = vpack.c.b16 %v335, %v334
      %v366 = vpack.c.b16 %v337, %v336
      %v367 = vpack.c.b16 %v339, %v338
      %v368 = vpack.c.b16 %v341, %v340
      %v369 = vpack.c.b16 %v343, %v342
      %v370 = vpack.c.b16 %v345, %v344
      %v371 = vpack.c.b16 %v347, %v346
      %v372 = vpack.c.b16 %v349, %v348
      %v373 = vpack.c.b16 %v351, %v350
      %v374 = vpack.c.b16 %v353, %v352
      %v375 = vpack.c.b16 %v355, %v354
      %v376 = vpack.c.b16 %v357, %v356
      %v377 = vpack.c.b16 %v359, %v358
      %v378 = vpack.c.b16 %v361, %v360
      %v379 = vpack.c.b16 %v363, %v362
      %396 = vmatprep.subr.bf16.mxu0 0
      %397 = vmatpush1.bf16.msra.mxu0 %v364
      %398 = vmatprep.subr.bf16.mxu0 0
      %399 = vmatpush1.bf16.msra.mxu0 %v365
      %400 = vmatprep.subr.bf16.mxu0 0
      %401 = vmatpush1.bf16.msra.mxu0 %v366
      %402 = vmatprep.subr.bf16.mxu0 0
      %403 = vmatpush1.bf16.msra.mxu0 %v367
      %404 = vmatprep.subr.bf16.mxu0 0
      %405 = vmatpush1.bf16.msra.mxu0 %v368
      %406 = vmatprep.subr.bf16.mxu0 0
      %407 = vmatpush1.bf16.msra.mxu0 %v369
      %408 = vmatprep.subr.bf16.mxu0 0
      %409 = vmatpush1.bf16.msra.mxu0 %v370
      %410 = vmatprep.subr.bf16.mxu0 0
      %411 = vmatpush1.bf16.msra.mxu0 %v371
      %412 = vmatprep.subr.bf16.mxu0 0
      %413 = vmatpush1.bf16.msra.mxu0 %v372
      %414 = vmatprep.subr.bf16.mxu0 0
      %415 = vmatpush1.bf16.msra.mxu0 %v373
      %416 = vmatprep.subr.bf16.mxu0 0
      %417 = vmatpush1.bf16.msra.mxu0 %v374
      %418 = vmatprep.subr.bf16.mxu0 0
      %419 = vmatpush1.bf16.msra.mxu0 %v375
      %420 = vmatprep.subr.bf16.mxu0 0
      %421 = vmatpush1.bf16.msra.mxu0 %v376
      %422 = vmatprep.subr.bf16.mxu0 0
      %423 = vmatpush1.bf16.msra.mxu0 %v377
      %424 = vmatprep.subr.bf16.mxu0 0
      %425 = vmatpush1.bf16.msra.mxu0 %v378
      %426 = vmatprep.subr.bf16.mxu0 0
      %427 = vmatpush1.bf16.msra.mxu0 %v379
      %428 = vmatprep.mubr.bf16.mxu0 %v297
      %429 = vmatmul.mubr.bf16.gmra.mrb[0].mxu0 %v296
      %v430 = vpop.f32.mrb[0].mxu0
      %v431 = vadd.f32 %v289, %v430
      %v432 = vpop.f32.mrb[0].mxu0
      %v433 = vpop.f32.mrb[0].mxu0
      %v434 = vadd.f32 %v289, %v433
      %v435 = vpop.f32.mrb[0].mxu0
      %436 = vdwg.mxu0
      %v437 = vmax.f32 %v431, 0.0
      %v438 = vmax.f32 %v434, 0.0
      %v439 = vpack.c.bf16 %v438, %v437
      %v441 = vunpack.c.l.b16 %v439
      %v442 = vunpack.c.h.b16 %v439
      %v443 = vpack.c.b16 %v441, %v441
      %v444 = vpack.c.b16 %v442, %v442
      %447 = vst [vmem:[%s248] sm:$0xf] %v443
      %448 = vst [vmem:[%s248 + $0x4] sm:$0xf] %v444
      %s449 = smul.u32 2, %s19
      %p450 = scmp.lt.s32.totalorder %s18, 2
      %s451 = scalar_select %p450, %s18, 2
      %p452 = scmp.lt.s32.totalorder %s449, 1
      %s453 = scalar_select %p452, %s449, 1
      %s454 = smul.addr %s451, 2
      %s455 = sadd.s32 %s453, %s454
      %s456 = smul.addr %s455, 4
      %s457 = scalar_lea.vmem %s3, %s456
      // Predicated region
      $region33: #{arfaf_net_forward.10} parent=31 // pred_check
        %p458 = pneg %p126
      $region34: #{arfaf_net_forward.10} parent=31 // pred_check_branch
        %460 = sbr.rel (%p458) target = $region36
      $region35: #{arfaf_net_forward.10} parent=31 // pred_region
        %s461 = smul.u32 2, %s19
      $region36: #{arfaf_net_forward.10} parent=31 // pred_fallthru
        _
    $region32: #{arfaf_net_forward.10} parent=5 // pred_fallthru
      _
    %p462 = scmp.le.s32.totalorder 2, %s9
    // Predicated region
    $region37: #{arfaf_net_forward.10} parent=5 // pred_check
      %p463 = pneg %p462
    $region38: #{arfaf_net_forward.10} parent=5 // pred_check_branch
      %465 = sbr.rel (%p463) target = $region40
    $region39: #{arfaf_net_forward.10} parent=5 // pred_region
      %s466 = ssub.s32 %s9, 2
      // Predicated region
      $region41: #{arfaf_net_forward.10} parent=39 // pred_check
        %p467 = pneg %p132
      $region42: #{arfaf_net_forward.10} parent=39 // pred_check_branch
        %469 = sbr.rel (%p467) target = $region44
      $region43: #{arfaf_net_forward.10} parent=39 // pred_region
        %s470 = smul.u32 2, %s21
        %p471 = scmp.lt.s32.totalorder %s20, 2
        %s472 = scalar_select %p471, %s20, 2
        %p473 = scmp.lt.s32.totalorder %s470, 1
        %s474 = scalar_select %p473, %s470, 1
        %s475 = smul.addr %s472, 2
        %s476 = sadd.s32 %s474, %s475
        %s477 = smul.addr %s476, 4
        %s478 = scalar_lea.vmem %s3, %s477
      $region44: #{arfaf_net_forward.10} parent=39 // pred_fallthru
        _
    $region40: #{arfaf_net_forward.10} parent=5 // pred_fallthru
      _
  $region6: #{arfaf_net_forward.10} parent=0 // loop_footer
    %s13 = sadd.s32 1, %s9
  $region7: #{arfaf_net_forward.10} parent=0 // loop_footer_branch
    %8 = sbr.rel target = $region3
  $region8: #{arfaf_net_forward.10} parent=0 // loop_exit
    _

// kernel: arfaf_net_forward.11
$region0: #{arfaf_net_forward.11}
  #allocation0 [shape = 'u32[]', space=smem, size = 0x4, offset = 0x4, fixed_abs, tag = 'smem constant byte address 0x4 - core index']
  #allocation1 [shape = 'u32[144,128]{1,0:T(1,128)}', space=vmem, size = 0x12000, scoped, tag = 'internal scratch']
  %s0 = inlined_call_operand.vmem [shape: bf16[3,16,384], index: 0, kind: input, shape index: {}]
  %s1 = inlined_call_operand.vmem [shape: bf16[3,384,128], index: 1, kind: input, shape index: {}]
  %s2 = inlined_call_operand.vmem [shape: f32[3,8,128], index: 2, kind: input, shape index: {}]
  %s3 = inlined_call_operand.vmem [shape: bf16[3,16,128], index: 3, kind: output, shape index: {}]
  %s4 = sld [smem:[#allocation0]]
  $region45: #{arfaf_net_forward.11} parent=0
    _
  %s6 = ssub.s32 1, %s4
  %s7 = scalar_select 0, %s6, %s4
  loop: start=0, step=1, limit=5
  $region2: #{arfaf_net_forward.11} parent=0 // loop_pre_header
    _
  $region3: #{arfaf_net_forward.11} parent=0 // loop_header
    %s9 = sphi 0, %s13
    %p10 = scmp.ge.s32.totalorder %s9, 5
    %s16 = sphi 0, %s28
    %s17 = sphi 0, %s24
    %s18 = sphi 0, %s16
    %s19 = sphi 0, %s17
    %s20 = sphi 0, %s18
    %s21 = sphi 0, %s19
    %s33 = sphi 0, %s35
    %s36 = sphi 0, %s33
    %s37 = sphi 0, %s36
    %s53 = sphi 0, %s37
    %s59 = sphi 0, %s61
    %s62 = sphi 0, %s59
    %s63 = sphi 0, %s62
    %s79 = sphi 0, %s63
    %s85 = sphi 0, %s87
    %s88 = sphi 0, %s85
    %s89 = sphi 0, %s88
    %s105 = sphi 0, %s89
    %s113 = sphi 0, %s115
    %s116 = sphi 0, %s113
    %s117 = sphi 0, %s116
    %s133 = sphi 0, %s117
  $region4: #{arfaf_net_forward.11} parent=0 // loop_header_branch
    %12 = sbr.rel (%p10) target = $region8
  $region5: #{arfaf_net_forward.11} parent=0 // loop_body
    %s14 = ssub.s32 %s9, 1
    %s15 = ssub.s32 %s9, 2
    %s22 = sadd.s32 1, %s17
    %p23 = scmp.ge.s32.totalorder %s22, 1
    %s24 = scalar_select %p23, 0, %s22
    %s25 = sadd.s32 1, %s16
    %s26 = scalar_select %p23, %s25, %s16
    %p27 = scmp.ge.s32.totalorder %s26, 3
    %s28 = scalar_select %p27, 0, %s26
    %s29 = ssub.s32 %s16, %s28
    %s30 = ssub.s32 %s17, %s24
    %s31 = sor.u32 %s29, %s30
    %p32 = scmp.eq.s32.totalorder %s31, 0
    %s34 = sadd.s32 %s33, 1
    %s35 = scalar_select %p32, %s33, %s34
    %p38 = pneg %p32
    %p39 = scmp.eq.s32.totalorder %s9, 2
    %p40 = por %p38, %p39
    %p41 = scmp.ne.s32.totalorder %s33, %s36
    %p42 = scmp.eq.s32.totalorder %s9, 0
    %p43 = por %p41, %p42
    %p44 = scmp.ne.s32.totalorder %s33, %s36
    %p45 = scmp.eq.s32.totalorder %s14, 2
    %p46 = por %p44, %p45
    %p47 = scmp.ne.s32.totalorder %s36, %s37
    %p48 = scmp.eq.s32.totalorder %s14, 0
    %p49 = por %p47, %p48
    %p50 = scmp.ne.s32.totalorder %s36, %s37
    %p51 = scmp.eq.s32.totalorder %s15, 2
    %p52 = por %p50, %p51
    %p54 = scmp.ne.s32.totalorder %s37, %s53
    %p55 = scmp.eq.s32.totalorder %s15, 0
    %p56 = por %p54, %p55
    %s57 = ssub.s32 %s16, %s28
    %p58 = scmp.eq.s32.totalorder %s57, 0
    %s60 = sadd.s32 %s59, 1
    %s61 = scalar_select %p58, %s59, %s60
    %p64 = pneg %p58
    %p65 = scmp.eq.s32.totalorder %s9, 2
    %p66 = por %p64, %p65
    %p67 = scmp.ne.s32.totalorder %s59, %s62
    %p68 = scmp.eq.s32.totalorder %s9, 0
    %p69 = por %p67, %p68
    %p70 = scmp.ne.s32.totalorder %s59, %s62
    %p71 = scmp.eq.s32.totalorder %s14, 2
    %p72 = por %p70, %p71
    %p73 = scmp.ne.s32.totalorder %s62, %s63
    %p74 = scmp.eq.s32.totalorder %s14, 0
    %p75 = por %p73, %p74
    %p76 = scmp.ne.s32.totalorder %s62, %s63
    %p77 = scmp.eq.s32.totalorder %s15, 2
    %p78 = por %p76, %p77
    %p80 = scmp.ne.s32.totalorder %s63, %s79
    %p81 = scmp.eq.s32.totalorder %s15, 0
    %p82 = por %p80, %p81
    %s83 = ssub.s32 %s16, %s28
    %p84 = scmp.eq.s32.totalorder %s83, 0
    %s86 = sadd.s32 %s85, 1
    %s87 = scalar_select %p84, %s85, %s86
    %p90 = pneg %p84
    %p91 = scmp.eq.s32.totalorder %s9, 2
    %p92 = por %p90, %p91
    %p93 = scmp.ne.s32.totalorder %s85, %s88
    %p94 = scmp.eq.s32.totalorder %s9, 0
    %p95 = por %p93, %p94
    %p96 = scmp.ne.s32.totalorder %s85, %s88
    %p97 = scmp.eq.s32.totalorder %s14, 2
    %p98 = por %p96, %p97
    %p99 = scmp.ne.s32.totalorder %s88, %s89
    %p100 = scmp.eq.s32.totalorder %s14, 0
    %p101 = por %p99, %p100
    %p102 = scmp.ne.s32.totalorder %s88, %s89
    %p103 = scmp.eq.s32.totalorder %s15, 2
    %p104 = por %p102, %p103
    %p106 = scmp.ne.s32.totalorder %s89, %s105
    %p107 = scmp.eq.s32.totalorder %s15, 0
    %p108 = por %p106, %p107
    %s109 = ssub.s32 %s16, %s28
    %s110 = ssub.s32 %s17, %s24
    %s111 = sor.u32 %s109, %s110
    %p112 = scmp.eq.s32.totalorder %s111, 0
    %s114 = sadd.s32 %s113, 1
    %s115 = scalar_select %p112, %s113, %s114
    %p118 = pneg %p112
    %p119 = scmp.eq.s32.totalorder %s9, 2
    %p120 = por %p118, %p119
    %p121 = scmp.ne.s32.totalorder %s113, %s116
    %p122 = scmp.eq.s32.totalorder %s9, 0
    %p123 = por %p121, %p122
    %p124 = scmp.ne.s32.totalorder %s113, %s116
    %p125 = scmp.eq.s32.totalorder %s14, 2
    %p126 = por %p124, %p125
    %p127 = scmp.ne.s32.totalorder %s116, %s117
    %p128 = scmp.eq.s32.totalorder %s14, 0
    %p129 = por %p127, %p128
    %p130 = scmp.ne.s32.totalorder %s116, %s117
    %p131 = scmp.eq.s32.totalorder %s15, 2
    %p132 = por %p130, %p131
    %p134 = scmp.ne.s32.totalorder %s117, %s133
    %p135 = scmp.eq.s32.totalorder %s15, 0
    %p136 = por %p134, %p135
    %p137 = scmp.le.s32.totalorder 1, %s9
    %p138 = scmp.lt.s32.totalorder %s9, 4
    %p139 = pnand %p137, %p138
    %p140 = pneg %p139
    // Predicated region
    $region9: #{arfaf_net_forward.11} parent=5 // pred_check
      _
    $region10: #{arfaf_net_forward.11} parent=5 // pred_check_branch
      %142 = sbr.rel (%p139) target = $region12
    $region11: #{arfaf_net_forward.11} parent=5 // pred_region
      %s143 = ssub.s32 %s9, 1
    $region12: #{arfaf_net_forward.11} parent=5 // pred_fallthru
      _
    %p144 = scmp.lt.s32.totalorder %s9, 3
    // Predicated region
    $region13: #{arfaf_net_forward.11} parent=5 // pred_check
      %p145 = pneg %p144
    $region14: #{arfaf_net_forward.11} parent=5 // pred_check_branch
      %147 = sbr.rel (%p145) target = $region16
    $region15: #{arfaf_net_forward.11} parent=5 // pred_region
      // Predicated region
      $region17: #{arfaf_net_forward.11} parent=15 // pred_check
        %p148 = pneg %p43
      $region18: #{arfaf_net_forward.11} parent=15 // pred_check_branch
        %150 = sbr.rel (%p148) target = $region20
      $region19: #{arfaf_net_forward.11} parent=15 // pred_region
        %s151 = smul.u32 2, %s17
        %p152 = scmp.lt.s32.totalorder %s16, 2
        %s153 = scalar_select %p152, %s16, 2
        %p154 = scmp.lt.s32.totalorder %s151, 1
        %s155 = scalar_select %p154, %s151, 1
        %s156 = smul.addr %s155, 3
        %s157 = smul.addr %s153, 6
        %s158 = sadd.s32 %s156, %s157
        %s159 = smul.addr %s158, 4
        %s160 = scalar_lea.vmem %s0, %s159
        %s161 = smul.u32 2, %s17
      $region20: #{arfaf_net_forward.11} parent=15 // pred_fallthru
        _
      // Predicated region
      $region21: #{arfaf_net_forward.11} parent=15 // pred_check
        %p162 = pneg %p69
      $region22: #{arfaf_net_forward.11} parent=15 // pred_check_branch
        %164 = sbr.rel (%p162) target = $region24
      $region23: #{arfaf_net_forward.11} parent=15 // pred_region
        %p165 = scmp.lt.s32.totalorder %s16, 2
        %s166 = scalar_select %p165, %s16, 2
        %s167 = smul.addr %s166, 48
        %s168 = smul.addr %s167, 4
        %s169 = scalar_lea.vmem %s1, %s168
      $region24: #{arfaf_net_forward.11} parent=15 // pred_fallthru
        _
      // Predicated region
      $region25: #{arfaf_net_forward.11} parent=15 // pred_check
        %p170 = pneg %p95
      $region26: #{arfaf_net_forward.11} parent=15 // pred_check_branch
        %172 = sbr.rel (%p170) target = $region28
      $region27: #{arfaf_net_forward.11} parent=15 // pred_region
        %p173 = scmp.lt.s32.totalorder %s16, 2
        %s174 = scalar_select %p173, %s16, 2
        %s175 = smul.addr %s174, 8
        %s176 = scalar_lea.vmem %s2, %s175
      $region28: #{arfaf_net_forward.11} parent=15 // pred_fallthru
        _
    $region16: #{arfaf_net_forward.11} parent=5 // pred_fallthru
      _
    %p177 = scmp.le.s32.totalorder 1, %s9
    %p178 = scmp.lt.s32.totalorder %s9, 4
    %p179 = pnand %p177, %p178
    %p180 = pneg %p179
    // Predicated region
    $region29: #{arfaf_net_forward.11} parent=5 // pred_check
      _
    $region30: #{arfaf_net_forward.11} parent=5 // pred_check_branch
      %182 = sbr.rel (%p179) target = $region32
    $region31: #{arfaf_net_forward.11} parent=5 // pred_region
      %s183 = ssub.s32 %s9, 1
      %s184 = smul.u32 2, %s19
      %p185 = scmp.lt.s32.totalorder %s18, 2
      %s186 = scalar_select %p185, %s18, 2
      %p187 = scmp.lt.s32.totalorder %s184, 1
      %s188 = scalar_select %p187, %s184, 1
      %s189 = smul.addr %s188, 3
      %s190 = smul.addr %s186, 6
      %s191 = sadd.s32 %s189, %s190
      %s192 = smul.addr %s191, 4
      %s193 = scalar_lea.vmem %s0, %s192
      %p194 = pneg %p49
      %p195 = pneg %p46
      %p196 = scmp.lt.s32.totalorder %s18, 2
      %s197 = scalar_select %p196, %s18, 2
      %s198 = smul.addr %s197, 48
      %s199 = smul.addr %s198, 4
      %s200 = scalar_lea.vmem %s1, %s199
      %p201 = pneg %p75
      %p202 = pneg %p72
      %p203 = scmp.lt.s32.totalorder %s18, 2
      %s204 = scalar_select %p203, %s18, 2
      %s205 = smul.addr %s204, 8
      %s206 = scalar_lea.vmem %s2, %s205
      %p207 = pneg %p101
      %p208 = pneg %p98
      %p209 = pneg %p129
      %p210 = pneg %p126
      %s211 = smul.u32 2, %s19
      %p212 = scmp.lt.s32.totalorder %s18, 2
      %s213 = scalar_select %p212, %s18, 2
      %p214 = scmp.lt.s32.totalorder %s211, 1
      %s215 = scalar_select %p214, %s211, 1
      %s216 = smul.addr %s213, 2
      %s217 = sadd.s32 %s215, %s216
      %s218 = smul.addr %s217, 4
      %s219 = scalar_lea.vmem %s3, %s218
      %s220 = smul.u32 2, %s19
      %p221 = scmp.lt.s32.totalorder %s18, 2
      %s222 = scalar_select %p221, %s18, 2
      %p223 = scmp.lt.s32.totalorder %s220, 1
      %s224 = scalar_select %p223, %s220, 1
      %s225 = smul.addr %s224, 3
      %s226 = smul.addr %s222, 6
      %s227 = sadd.s32 %s225, %s226
      %s228 = smul.addr %s227, 4
      %s229 = scalar_lea.vmem %s0, %s228
      %s230 = smul.u32 2, %s19
      %p231 = scmp.lt.s32.totalorder %s18, 2
      %s232 = scalar_select %p231, %s18, 2
      %s233 = smul.addr %s232, 48
      %s234 = smul.addr %s233, 4
      %s235 = scalar_lea.vmem %s1, %s234
      %p236 = scmp.lt.s32.totalorder %s18, 2
      %s237 = scalar_select %p236, %s18, 2
      %s238 = smul.addr %s237, 8
      %s239 = scalar_lea.vmem %s2, %s238
      %s240 = smul.u32 2, %s19
      %p241 = scmp.lt.s32.totalorder %s18, 2
      %s242 = scalar_select %p241, %s18, 2
      %p243 = scmp.lt.s32.totalorder %s240, 1
      %s244 = scalar_select %p243, %s240, 1
      %s245 = smul.addr %s242, 2
      %s246 = sadd.s32 %s244, %s245
      %s247 = smul.addr %s246, 4
      %s248 = scalar_lea.vmem %s3, %s247
      %s249 = smul.u32 2, %s19
      %v251 = vld [vmem:[%s229] sm:$0xff]
      %v252 = vld [vmem:[%s229 + $0x8] sm:$0xf]
      %v253 = vld [vmem:[%s229 + $0xc] sm:$0xff]
      %v254 = vld [vmem:[%s229 + $0x14] sm:$0xf]
      %v255 = vld [vmem:[%s235] sm:$0xf]
      %v256 = vld [vmem:[%s235 + $0x4] sm:$0xf]
      %v257 = vld [vmem:[%s235 + $0x8] sm:$0xf]
      %v258 = vld [vmem:[%s235 + $0xc] sm:$0xf]
      %v259 = vld [vmem:[%s235 + $0x10] sm:$0xf]
      %v260 = vld [vmem:[%s235 + $0x14] sm:$0xf]
      %v261 = vld [vmem:[%s235 + $0x18] sm:$0xf]
      %v262 = vld [vmem:[%s235 + $0x1c] sm:$0xf]
      %v263 = vld [vmem:[%s235 + $0x20] sm:$0xf]
      %v264 = vld [vmem:[%s235 + $0x24] sm:$0xf]
      %v265 = vld [vmem:[%s235 + $0x28] sm:$0xf]
      %v266 = vld [vmem:[%s235 + $0x2c] sm:$0xf]
      %v267 = vld [vmem:[%s235 + $0x30] sm:$0xf]
      %v268 = vld [vmem:[%s235 + $0x34] sm:$0xf]
      %v269 = vld [vmem:[%s235 + $0x38] sm:$0xf]
      %v270 = vld [vmem:[%s235 + $0x3c] sm:$0xf]
      %v271 = vld [vmem:[%s235 + $0x40] sm:$0xf]
      %v272 = vld [vmem:[%s235 + $0x44] sm:$0xf]
      %v273 = vld [vmem:[%s235 + $0x48] sm:$0xf]
      %v274 = vld [vmem:[%s235 + $0x4c] sm:$0xf]
      %v275 = vld [vmem:[%s235 + $0x50] sm:$0xf]
      %v276 = vld [vmem:[%s235 + $0x54] sm:$0xf]
      %v277 = vld [vmem:[%s235 + $0x58] sm:$0xf]
      %v278 = vld [vmem:[%s235 + $0x5c] sm:$0xf]
      %v279 = vld [vmem:[%s235 + $0x60] sm:$0xf]
      %v280 = vld [vmem:[%s235 + $0x64] sm:$0xf]
      %v281 = vld [vmem:[%s235 + $0x68] sm:$0xf]
      %v282 = vld [vmem:[%s235 + $0x6c] sm:$0xf]
      %v283 = vld [vmem:[%s235 + $0x70] sm:$0xf]
      %v284 = vld [vmem:[%s235 + $0x74] sm:$0xf]
      %v285 = vld [vmem:[%s235 + $0x78] sm:$0xf]
      %v286 = vld [vmem:[%s235 + $0x7c] sm:$0xf]
      %v287 = vld [vmem:[%s235 + $0x80] sm:$0xf]
      %v288 = vld [vmem:[%s235 + $0x84] sm:$0xf]
      %v289 = vld [vmem:[%s235 + $0x88] sm:$0xf]
      %v290 = vld [vmem:[%s235 + $0x8c] sm:$0xf]
      %v291 = vld [vmem:[%s235 + $0x90] sm:$0xf]
      %v292 = vld [vmem:[%s235 + $0x94] sm:$0xf]
      %v293 = vld [vmem:[%s235 + $0x98] sm:$0xf]
      %v294 = vld [vmem:[%s235 + $0x9c] sm:$0xf]
      %v295 = vld [vmem:[%s235 + $0xa0] sm:$0xf]
      %v296 = vld [vmem:[%s235 + $0xa4] sm:$0xf]
      %v297 = vld [vmem:[%s235 + $0xa8] sm:$0xf]
      %v298 = vld [vmem:[%s235 + $0xac] sm:$0xf]
      %v299 = vld [vmem:[%s235 + $0xb0] sm:$0xf]
      %v300 = vld [vmem:[%s235 + $0xb4] sm:$0xf]
      %v301 = vld [vmem:[%s235 + $0xb8] sm:$0xf]
      %v302 = vld [vmem:[%s235 + $0xbc] sm:$0xf]
      %v303 = vld [vmem:[%s239] sm:$0x1]
      %v304 = vlaneseq
      %v305 = vshrl.u32 %v304, 7
      %v306 = vsub.s32 0, %v305
      %v307 = vrot.slane %v303, %v306
      %v312 = vunpack.c.l.b16 %v251
      %v313 = vunpack.c.h.b16 %v251
      %v314 = vunpack.c.l.b16 %v252
      %v315 = vunpack.c.l.b16 %v253
      %v316 = vunpack.c.h.b16 %v253
      %v317 = vunpack.c.l.b16 %v254
      %v318 = vpack.c.b16 %v315, %v312
      %v319 = vpack.c.b16 %v316, %v313
      %v320 = vpack.c.b16 %v317, %v314
      %v372 = vunpack.c.l.b16 %v255
      %v373 = vunpack.c.l.b16 %v256
      %v374 = vunpack.c.l.b16 %v257
      %v375 = vunpack.c.l.b16 %v258
      %v376 = vunpack.c.l.b16 %v259
      %v377 = vunpack.c.l.b16 %v260
      %v378 = vunpack.c.l.b16 %v261
      %v379 = vunpack.c.l.b16 %v262
      %v380 = vunpack.c.l.b16 %v263
      %v381 = vunpack.c.l.b16 %v264
      %v382 = vunpack.c.l.b16 %v265
      %v383 = vunpack.c.l.b16 %v266
      %v384 = vunpack.c.l.b16 %v267
      %v385 = vunpack.c.l.b16 %v268
      %v386 = vunpack.c.l.b16 %v269
      %v387 = vunpack.c.l.b16 %v270
      %v388 = vunpack.c.l.b16 %v271
      %v389 = vunpack.c.l.b16 %v272
      %v390 = vunpack.c.l.b16 %v273
      %v391 = vunpack.c.l.b16 %v274
      %v392 = vunpack.c.l.b16 %v275
      %v393 = vunpack.c.l.b16 %v276
      %v394 = vunpack.c.l.b16 %v277
      %v395 = vunpack.c.l.b16 %v278
      %v396 = vunpack.c.l.b16 %v279
      %v397 = vunpack.c.l.b16 %v280
      %v398 = vunpack.c.l.b16 %v281
      %v399 = vunpack.c.l.b16 %v282
      %v400 = vunpack.c.l.b16 %v283
      %v401 = vunpack.c.l.b16 %v284
      %v402 = vunpack.c.l.b16 %v285
      %v403 = vunpack.c.l.b16 %v286
      %v404 = vunpack.c.l.b16 %v287
      %v405 = vunpack.c.l.b16 %v288
      %v406 = vunpack.c.l.b16 %v289
      %v407 = vunpack.c.l.b16 %v290
      %v408 = vunpack.c.l.b16 %v291
      %v409 = vunpack.c.l.b16 %v292
      %v410 = vunpack.c.l.b16 %v293
      %v411 = vunpack.c.l.b16 %v294
      %v412 = vunpack.c.l.b16 %v295
      %v413 = vunpack.c.l.b16 %v296
      %v414 = vunpack.c.l.b16 %v297
      %v415 = vunpack.c.l.b16 %v298
      %v416 = vunpack.c.l.b16 %v299
      %v417 = vunpack.c.l.b16 %v300
      %v418 = vunpack.c.l.b16 %v301
      %v419 = vunpack.c.l.b16 %v302
      %v420 = vpack.c.b16 %v373, %v372
      %v421 = vpack.c.b16 %v375, %v374
      %v422 = vpack.c.b16 %v377, %v376
      %v423 = vpack.c.b16 %v379, %v378
      %v424 = vpack.c.b16 %v381, %v380
      %v425 = vpack.c.b16 %v383, %v382
      %v426 = vpack.c.b16 %v385, %v384
      %v427 = vpack.c.b16 %v387, %v386
      %v428 = vpack.c.b16 %v389, %v388
      %v429 = vpack.c.b16 %v391, %v390
      %v430 = vpack.c.b16 %v393, %v392
      %v431 = vpack.c.b16 %v395, %v394
      %v432 = vpack.c.b16 %v397, %v396
      %v433 = vpack.c.b16 %v399, %v398
      %v434 = vpack.c.b16 %v401, %v400
      %v435 = vpack.c.b16 %v403, %v402
      %v436 = vpack.c.b16 %v405, %v404
      %v437 = vpack.c.b16 %v407, %v406
      %v438 = vpack.c.b16 %v409, %v408
      %v439 = vpack.c.b16 %v411, %v410
      %v440 = vpack.c.b16 %v413, %v412
      %v441 = vpack.c.b16 %v415, %v414
      %v442 = vpack.c.b16 %v417, %v416
      %v443 = vpack.c.b16 %v419, %v418
      %468 = vmatprep.subr.bf16.mxu0 0
      %469 = vmatpush1.bf16.msra.mxu0 %v420
      %470 = vmatprep.subr.bf16.mxu0 0
      %471 = vmatpush1.bf16.msra.mxu0 %v421
      %472 = vmatprep.subr.bf16.mxu0 0
      %473 = vmatpush1.bf16.msra.mxu0 %v422
      %474 = vmatprep.subr.bf16.mxu0 0
      %475 = vmatpush1.bf16.msra.mxu0 %v423
      %476 = vmatprep.subr.bf16.mxu0 0
      %477 = vmatpush1.bf16.msra.mxu0 %v424
      %478 = vmatprep.subr.bf16.mxu0 0
      %479 = vmatpush1.bf16.msra.mxu0 %v425
      %480 = vmatprep.subr.bf16.mxu0 0
      %481 = vmatpush1.bf16.msra.mxu0 %v426
      %482 = vmatprep.subr.bf16.mxu0 0
      %483 = vmatpush1.bf16.msra.mxu0 %v427
      %484 = vmatprep.subr.bf16.mxu0 0
      %485 = vmatpush1.bf16.msra.mxu0 %v428
      %486 = vmatprep.subr.bf16.mxu0 0
      %487 = vmatpush1.bf16.msra.mxu0 %v429
      %488 = vmatprep.subr.bf16.mxu0 0
      %489 = vmatpush1.bf16.msra.mxu0 %v430
      %490 = vmatprep.subr.bf16.mxu0 0
      %491 = vmatpush1.bf16.msra.mxu0 %v431
      %492 = vmatprep.subr.bf16.mxu0 0
      %493 = vmatpush1.bf16.msra.mxu0 %v432
      %494 = vmatprep.subr.bf16.mxu0 0
      %495 = vmatpush1.bf16.msra.mxu0 %v433
      %496 = vmatprep.subr.bf16.mxu0 0
      %497 = vmatpush1.bf16.msra.mxu0 %v434
      %498 = vmatprep.subr.bf16.mxu0 0
      %499 = vmatpush1.bf16.msra.mxu0 %v435
      %500 = vmatprep.mubr.bf16.mxu0 %v319
      %501 = vmatmul.mubr.bf16.gmra.mrb[0].mxu0 %v318
      %v502 = vpop.f32.mrb[0].mxu0
      %v503 = vadd.f32 %v307, %v502
      %v504 = vpop.f32.mrb[0].mxu0
      %v505 = vpop.f32.mrb[0].mxu0
      %v506 = vadd.f32 %v307, %v505
      %v507 = vpop.f32.mrb[0].mxu0
      %508 = vdwg.mxu0
      %509 = vmatprep.subr.bf16.mxu0 0
      %510 = vmatpush1.bf16.msra.mxu0 %v436
      %511 = vmatprep.subr.bf16.mxu0 0
      %512 = vmatpush1.bf16.msra.mxu0 %v437
      %513 = vmatprep.subr.bf16.mxu0 0
      %514 = vmatpush1.bf16.msra.mxu0 %v438
      %515 = vmatprep.subr.bf16.mxu0 0
      %516 = vmatpush1.bf16.msra.mxu0 %v439
      %517 = vmatprep.subr.bf16.mxu0 0
      %518 = vmatpush1.bf16.msra.mxu0 %v440
      %519 = vmatprep.subr.bf16.mxu0 0
      %520 = vmatpush1.bf16.msra.mxu0 %v441
      %521 = vmatprep.subr.bf16.mxu0 0
      %522 = vmatpush1.bf16.msra.mxu0 %v442
      %523 = vmatprep.subr.bf16.mxu0 0
      %524 = vmatpush1.bf16.msra.mxu0 %v443
      %525 = vmatprep.subr.bf16.mxu0 0
      %526 = vmatpush1.bf16.msra.mxu0 0
      %527 = vmatprep.subr.bf16.mxu0 0
      %528 = vmatpush1.bf16.msra.mxu0 0
      %529 = vmatprep.subr.bf16.mxu0 0
      %530 = vmatpush1.bf16.msra.mxu0 0
      %531 = vmatprep.subr.bf16.mxu0 0
      %532 = vmatpush1.bf16.msra.mxu0 0
      %533 = vmatprep.subr.bf16.mxu0 0
      %534 = vmatpush1.bf16.msra.mxu0 0
      %535 = vmatprep.subr.bf16.mxu0 0
      %536 = vmatpush1.bf16.msra.mxu0 0
      %537 = vmatprep.subr.bf16.mxu0 0
      %538 = vmatpush1.bf16.msra.mxu0 0
      %539 = vmatprep.subr.bf16.mxu0 0
      %540 = vmatpush1.bf16.msra.mxu0 0
      %541 = vmatprep.mubr.bf16.mxu0 0
      %542 = vmatmul.mubr.bf16.gmra.mrb[0].mxu0 %v320
      %v543 = vpop.f32.mrb[0].mxu0
      %v544 = vadd.f32 %v503, %v543
      %v545 = vpop.f32.mrb[0].mxu0
      %v546 = vpop.f32.mrb[0].mxu0
      %v547 = vadd.f32 %v506, %v546
      %v548 = vpop.f32.mrb[0].mxu0
      %549 = vdwg.mxu0
      %v550 = vmax.f32 %v544, 0.0
      %v551 = vmax.f32 %v547, 0.0
      %v552 = vpack.c.bf16 %v551, %v550
      %v554 = vunpack.c.l.b16 %v552
      %v555 = vunpack.c.h.b16 %v552
      %v556 = vpack.c.b16 %v554, %v554
      %v557 = vpack.c.b16 %v555, %v555
      %560 = vst [vmem:[%s248] sm:$0xf] %v556
      %561 = vst [vmem:[%s248 + $0x4] sm:$0xf] %v557
      %s562 = smul.u32 2, %s19
      %p563 = scmp.lt.s32.totalorder %s18, 2
      %s564 = scalar_select %p563, %s18, 2
      %p565 = scmp.lt.s32.totalorder %s562, 1
      %s566 = scalar_select %p565, %s562, 1
      %s567 = smul.addr %s564, 2
      %s568 = sadd.s32 %s566, %s567
      %s569 = smul.addr %s568, 4
      %s570 = scalar_lea.vmem %s3, %s569
      // Predicated region
      $region33: #{arfaf_net_forward.11} parent=31 // pred_check
        %p571 = pneg %p126
      $region34: #{arfaf_net_forward.11} parent=31 // pred_check_branch
        %573 = sbr.rel (%p571) target = $region36
      $region35: #{arfaf_net_forward.11} parent=31 // pred_region
        %s574 = smul.u32 2, %s19
      $region36: #{arfaf_net_forward.11} parent=31 // pred_fallthru
        _
    $region32: #{arfaf_net_forward.11} parent=5 // pred_fallthru
      _
    %p575 = scmp.le.s32.totalorder 2, %s9
    // Predicated region
    $region37: #{arfaf_net_forward.11} parent=5 // pred_check
      %p576 = pneg %p575
    $region38: #{arfaf_net_forward.11} parent=5 // pred_check_branch
      %578 = sbr.rel (%p576) target = $region40
    $region39: #{arfaf_net_forward.11} parent=5 // pred_region
      %s579 = ssub.s32 %s9, 2
      // Predicated region
      $region41: #{arfaf_net_forward.11} parent=39 // pred_check
        %p580 = pneg %p132
      $region42: #{arfaf_net_forward.11} parent=39 // pred_check_branch
        %582 = sbr.rel (%p580) target = $region44
      $region43: #{arfaf_net_forward.11} parent=39 // pred_region
        %s583 = smul.u32 2, %s21
        %p584 = scmp.lt.s32.totalorder %s20, 2
        %s585 = scalar_select %p584, %s20, 2
        %p586 = scmp.lt.s32.totalorder %s583, 1
        %s587 = scalar_select %p586, %s583, 1
        %s588 = smul.addr %s585, 2
        %s589 = sadd.s32 %s587, %s588
        %s590 = smul.addr %s589, 4
        %s591 = scalar_lea.vmem %s3, %s590
      $region44: #{arfaf_net_forward.11} parent=39 // pred_fallthru
        _
    $region40: #{arfaf_net_forward.11} parent=5 // pred_fallthru
      _
  $region6: #{arfaf_net_forward.11} parent=0 // loop_footer
    %s13 = sadd.s32 1, %s9
  $region7: #{arfaf_net_forward.11} parent=0 // loop_footer_branch
    %8 = sbr.rel target = $region3
  $region8: #{arfaf_net_forward.11} parent=0 // loop_exit
    _

// kernel: arfaf_net_forward.14
$region0: #{arfaf_net_forward.14}
  #allocation0 [shape = 'u32[]', space=smem, size = 0x4, offset = 0x4, fixed_abs, tag = 'smem constant byte address 0x4 - core index']
  #allocation1 [shape = 'u32[144,128]{1,0:T(1,128)}', space=vmem, size = 0x12000, scoped, tag = 'internal scratch']
  %s0 = inlined_call_operand.vmem [shape: bf16[1,128,256], index: 0, kind: input, shape index: {}]
  %s1 = inlined_call_operand.vmem [shape: bf16[1,256,128], index: 1, kind: input, shape index: {}]
  %s2 = inlined_call_operand.vmem [shape: f32[1,8,128], index: 2, kind: input, shape index: {}]
  %s3 = inlined_call_operand.vmem [shape: bf16[1,128,128], index: 3, kind: output, shape index: {}]
  %s4 = sld [smem:[#allocation0]]
  $region22: #{arfaf_net_forward.14} parent=0
    _
  %s6 = ssub.s32 1, %s4
  %s7 = scalar_select 0, %s6, %s4
  // Predicated region
  $region2: #{arfaf_net_forward.14} parent=0 // pred_check
    _
  $region3: #{arfaf_net_forward.14} parent=0 // pred_check_branch
    %9 = sbr.rel (0) target = $region5
  $region4: #{arfaf_net_forward.14} parent=0 // pred_region
    _
  $region5: #{arfaf_net_forward.14} parent=0 // pred_fallthru
    _
  // Predicated region
  $region6: #{arfaf_net_forward.14} parent=0 // pred_check
    _
  $region7: #{arfaf_net_forward.14} parent=0 // pred_check_branch
    %11 = sbr.rel (0) target = $region9
  $region8: #{arfaf_net_forward.14} parent=0 // pred_region
    _
  $region9: #{arfaf_net_forward.14} parent=0 // pred_fallthru
    _
  // Predicated region
  $region10: #{arfaf_net_forward.14} parent=0 // pred_check
    _
  $region11: #{arfaf_net_forward.14} parent=0 // pred_check_branch
    %13 = sbr.rel (0) target = $region13
  $region12: #{arfaf_net_forward.14} parent=0 // pred_region
    _
  $region13: #{arfaf_net_forward.14} parent=0 // pred_fallthru
    _
  %v15 = vld [vmem:[%s0] sm:$0xff]
  %v16 = vld [vmem:[%s0 + $0x8] sm:$0xff]
  %v17 = vld [vmem:[%s0 + $0x10] sm:$0xff]
  %v18 = vld [vmem:[%s0 + $0x18] sm:$0xff]
  %v19 = vld [vmem:[%s0 + $0x20] sm:$0xff]
  %v20 = vld [vmem:[%s0 + $0x28] sm:$0xff]
  %v21 = vld [vmem:[%s0 + $0x30] sm:$0xff]
  %v22 = vld [vmem:[%s0 + $0x38] sm:$0xff]
  %v23 = vld [vmem:[%s0 + $0x40] sm:$0xff]
  %v24 = vld [vmem:[%s0 + $0x48] sm:$0xff]
  %v25 = vld [vmem:[%s0 + $0x50] sm:$0xff]
  %v26 = vld [vmem:[%s0 + $0x58] sm:$0xff]
  %v27 = vld [vmem:[%s0 + $0x60] sm:$0xff]
  %v28 = vld [vmem:[%s0 + $0x68] sm:$0xff]
  %v29 = vld [vmem:[%s0 + $0x70] sm:$0xff]
  %v30 = vld [vmem:[%s0 + $0x78] sm:$0xff]
  %v31 = vld [vmem:[%s1] sm:$0xf]
  %v32 = vld [vmem:[%s1 + $0x4] sm:$0xf]
  %v33 = vld [vmem:[%s1 + $0x8] sm:$0xf]
  %v34 = vld [vmem:[%s1 + $0xc] sm:$0xf]
  %v35 = vld [vmem:[%s1 + $0x10] sm:$0xf]
  %v36 = vld [vmem:[%s1 + $0x14] sm:$0xf]
  %v37 = vld [vmem:[%s1 + $0x18] sm:$0xf]
  %v38 = vld [vmem:[%s1 + $0x1c] sm:$0xf]
  %v39 = vld [vmem:[%s1 + $0x20] sm:$0xf]
  %v40 = vld [vmem:[%s1 + $0x24] sm:$0xf]
  %v41 = vld [vmem:[%s1 + $0x28] sm:$0xf]
  %v42 = vld [vmem:[%s1 + $0x2c] sm:$0xf]
  %v43 = vld [vmem:[%s1 + $0x30] sm:$0xf]
  %v44 = vld [vmem:[%s1 + $0x34] sm:$0xf]
  %v45 = vld [vmem:[%s1 + $0x38] sm:$0xf]
  %v46 = vld [vmem:[%s1 + $0x3c] sm:$0xf]
  %v47 = vld [vmem:[%s1 + $0x40] sm:$0xf]
  %v48 = vld [vmem:[%s1 + $0x44] sm:$0xf]
  %v49 = vld [vmem:[%s1 + $0x48] sm:$0xf]
  %v50 = vld [vmem:[%s1 + $0x4c] sm:$0xf]
  %v51 = vld [vmem:[%s1 + $0x50] sm:$0xf]
  %v52 = vld [vmem:[%s1 + $0x54] sm:$0xf]
  %v53 = vld [vmem:[%s1 + $0x58] sm:$0xf]
  %v54 = vld [vmem:[%s1 + $0x5c] sm:$0xf]
  %v55 = vld [vmem:[%s1 + $0x60] sm:$0xf]
  %v56 = vld [vmem:[%s1 + $0x64] sm:$0xf]
  %v57 = vld [vmem:[%s1 + $0x68] sm:$0xf]
  %v58 = vld [vmem:[%s1 + $0x6c] sm:$0xf]
  %v59 = vld [vmem:[%s1 + $0x70] sm:$0xf]
  %v60 = vld [vmem:[%s1 + $0x74] sm:$0xf]
  %v61 = vld [vmem:[%s1 + $0x78] sm:$0xf]
  %v62 = vld [vmem:[%s1 + $0x7c] sm:$0xf]
  %v63 = vld [vmem:[%s2] sm:$0x1]
  %v64 = vlaneseq
  %v65 = vshrl.u32 %v64, 7
  %v66 = vsub.s32 0, %v65
  %v67 = vrot.slane %v63, %v66
  %v84 = vunpack.c.l.b16 %v15
  %v85 = vunpack.c.h.b16 %v15
  %v86 = vunpack.c.l.b16 %v16
  %v87 = vunpack.c.h.b16 %v16
  %v88 = vunpack.c.l.b16 %v17
  %v89 = vunpack.c.h.b16 %v17
  %v90 = vunpack.c.l.b16 %v18
  %v91 = vunpack.c.h.b16 %v18
  %v92 = vunpack.c.l.b16 %v19
  %v93 = vunpack.c.h.b16 %v19
  %v94 = vunpack.c.l.b16 %v20
  %v95 = vunpack.c.h.b16 %v20
  %v96 = vunpack.c.l.b16 %v21
  %v97 = vunpack.c.h.b16 %v21
  %v98 = vunpack.c.l.b16 %v22
  %v99 = vunpack.c.h.b16 %v22
  %v100 = vunpack.c.l.b16 %v23
  %v101 = vunpack.c.h.b16 %v23
  %v102 = vunpack.c.l.b16 %v24
  %v103 = vunpack.c.h.b16 %v24
  %v104 = vunpack.c.l.b16 %v25
  %v105 = vunpack.c.h.b16 %v25
  %v106 = vunpack.c.l.b16 %v26
  %v107 = vunpack.c.h.b16 %v26
  %v108 = vunpack.c.l.b16 %v27
  %v109 = vunpack.c.h.b16 %v27
  %v110 = vunpack.c.l.b16 %v28
  %v111 = vunpack.c.h.b16 %v28
  %v112 = vunpack.c.l.b16 %v29
  %v113 = vunpack.c.h.b16 %v29
  %v114 = vunpack.c.l.b16 %v30
  %v115 = vunpack.c.h.b16 %v30
  %v116 = vpack.c.b16 %v86, %v84
  %v117 = vpack.c.b16 %v87, %v85
  %v118 = vpack.c.b16 %v90, %v88
  %v119 = vpack.c.b16 %v91, %v89
  %v120 = vpack.c.b16 %v94, %v92
  %v121 = vpack.c.b16 %v95, %v93
  %v122 = vpack.c.b16 %v98, %v96
  %v123 = vpack.c.b16 %v99, %v97
  %v124 = vpack.c.b16 %v102, %v100
  %v125 = vpack.c.b16 %v103, %v101
  %v126 = vpack.c.b16 %v106, %v104
  %v127 = vpack.c.b16 %v107, %v105
  %v128 = vpack.c.b16 %v110, %v108
  %v129 = vpack.c.b16 %v111, %v109
  %v130 = vpack.c.b16 %v114, %v112
  %v131 = vpack.c.b16 %v115, %v113
  %v180 = vunpack.c.l.b16 %v31
  %v181 = vunpack.c.l.b16 %v32
  %v182 = vunpack.c.l.b16 %v33
  %v183 = vunpack.c.l.b16 %v34
  %v184 = vunpack.c.l.b16 %v35
  %v185 = vunpack.c.l.b16 %v36
  %v186 = vunpack.c.l.b16 %v37
  %v187 = vunpack.c.l.b16 %v38
  %v188 = vunpack.c.l.b16 %v39
  %v189 = vunpack.c.l.b16 %v40
  %v190 = vunpack.c.l.b16 %v41
  %v191 = vunpack.c.l.b16 %v42
  %v192 = vunpack.c.l.b16 %v43
  %v193 = vunpack.c.l.b16 %v44
  %v194 = vunpack.c.l.b16 %v45
  %v195 = vunpack.c.l.b16 %v46
  %v196 = vunpack.c.l.b16 %v47
  %v197 = vunpack.c.l.b16 %v48
  %v198 = vunpack.c.l.b16 %v49
  %v199 = vunpack.c.l.b16 %v50
  %v200 = vunpack.c.l.b16 %v51
  %v201 = vunpack.c.l.b16 %v52
  %v202 = vunpack.c.l.b16 %v53
  %v203 = vunpack.c.l.b16 %v54
  %v204 = vunpack.c.l.b16 %v55
  %v205 = vunpack.c.l.b16 %v56
  %v206 = vunpack.c.l.b16 %v57
  %v207 = vunpack.c.l.b16 %v58
  %v208 = vunpack.c.l.b16 %v59
  %v209 = vunpack.c.l.b16 %v60
  %v210 = vunpack.c.l.b16 %v61
  %v211 = vunpack.c.l.b16 %v62
  %v212 = vpack.c.b16 %v181, %v180
  %v213 = vpack.c.b16 %v183, %v182
  %v214 = vpack.c.b16 %v185, %v184
  %v215 = vpack.c.b16 %v187, %v186
  %v216 = vpack.c.b16 %v189, %v188
  %v217 = vpack.c.b16 %v191, %v190
  %v218 = vpack.c.b16 %v193, %v192
  %v219 = vpack.c.b16 %v195, %v194
  %v220 = vpack.c.b16 %v197, %v196
  %v221 = vpack.c.b16 %v199, %v198
  %v222 = vpack.c.b16 %v201, %v200
  %v223 = vpack.c.b16 %v203, %v202
  %v224 = vpack.c.b16 %v205, %v204
  %v225 = vpack.c.b16 %v207, %v206
  %v226 = vpack.c.b16 %v209, %v208
  %v227 = vpack.c.b16 %v211, %v210
  %244 = vmatprep.subr.bf16.mxu0 0
  %245 = vmatpush1.bf16.msra.mxu0 %v212
  %246 = vmatprep.subr.bf16.mxu0 0
  %247 = vmatpush1.bf16.msra.mxu0 %v213
  %248 = vmatprep.subr.bf16.mxu0 0
  %249 = vmatpush1.bf16.msra.mxu0 %v214
  %250 = vmatprep.subr.bf16.mxu0 0
  %251 = vmatpush1.bf16.msra.mxu0 %v215
  %252 = vmatprep.subr.bf16.mxu0 0
  %253 = vmatpush1.bf16.msra.mxu0 %v216
  %254 = vmatprep.subr.bf16.mxu0 0
  %255 = vmatpush1.bf16.msra.mxu0 %v217
  %256 = vmatprep.subr.bf16.mxu0 0
  %257 = vmatpush1.bf16.msra.mxu0 %v218
  %258 = vmatprep.subr.bf16.mxu0 0
  %259 = vmatpush1.bf16.msra.mxu0 %v219
  %260 = vmatprep.subr.bf16.mxu0 0
  %261 = vmatpush1.bf16.msra.mxu0 %v220
  %262 = vmatprep.subr.bf16.mxu0 0
  %263 = vmatpush1.bf16.msra.mxu0 %v221
  %264 = vmatprep.subr.bf16.mxu0 0
  %265 = vmatpush1.bf16.msra.mxu0 %v222
  %266 = vmatprep.subr.bf16.mxu0 0
  %267 = vmatpush1.bf16.msra.mxu0 %v223
  %268 = vmatprep.subr.bf16.mxu0 0
  %269 = vmatpush1.bf16.msra.mxu0 %v224
  %270 = vmatprep.subr.bf16.mxu0 0
  %271 = vmatpush1.bf16.msra.mxu0 %v225
  %272 = vmatprep.subr.bf16.mxu0 0
  %273 = vmatpush1.bf16.msra.mxu0 %v226
  %274 = vmatprep.subr.bf16.mxu0 0
  %275 = vmatpush1.bf16.msra.mxu0 %v227
  %276 = vmatprep.mubr.bf16.mxu0 %v117
  %277 = vmatmul.mubr.bf16.gmra.mrb[0].mxu0 %v116
  %v278 = vpop.f32.mrb[0].mxu0
  %v279 = vadd.f32 %v67, %v278
  %v280 = vpop.f32.mrb[0].mxu0
  %v281 = vpop.f32.mrb[0].mxu0
  %v282 = vadd.f32 %v67, %v281
  %v283 = vpop.f32.mrb[0].mxu0
  %284 = vmatprep.mubr.bf16.mxu0 %v119
  %285 = vmatmul.mubr.bf16.gmra.mrb[0].mxu0 %v118
  %v286 = vpop.f32.mrb[0].mxu0
  %v287 = vadd.f32 %v67, %v286
  %v288 = vpop.f32.mrb[0].mxu0
  %v289 = vpop.f32.mrb[0].mxu0
  %v290 = vadd.f32 %v67, %v289
  %v291 = vpop.f32.mrb[0].mxu0
  %292 = vmatprep.mubr.bf16.mxu0 %v121
  %293 = vmatmul.mubr.bf16.gmra.mrb[0].mxu0 %v120
  %v294 = vpop.f32.mrb[0].mxu0
  %v295 = vadd.f32 %v67, %v294
  %v296 = vpop.f32.mrb[0].mxu0
  %v297 = vpop.f32.mrb[0].mxu0
  %v298 = vadd.f32 %v67, %v297
  %v299 = vpop.f32.mrb[0].mxu0
  %300 = vmatprep.mubr.bf16.mxu0 %v123
  %301 = vmatmul.mubr.bf16.gmra.mrb[0].mxu0 %v122
  %v302 = vpop.f32.mrb[0].mxu0
  %v303 = vadd.f32 %v67, %v302
  %v304 = vpop.f32.mrb[0].mxu0
  %v305 = vpop.f32.mrb[0].mxu0
  %v306 = vadd.f32 %v67, %v305
  %v307 = vpop.f32.mrb[0].mxu0
  %308 = vmatprep.mubr.bf16.mxu0 %v125
  %309 = vmatmul.mubr.bf16.gmra.mrb[0].mxu0 %v124
  %v310 = vpop.f32.mrb[0].mxu0
  %v311 = vadd.f32 %v67, %v310
  %v312 = vpop.f32.mrb[0].mxu0
  %v313 = vpop.f32.mrb[0].mxu0
  %v314 = vadd.f32 %v67, %v313
  %v315 = vpop.f32.mrb[0].mxu0
  %316 = vmatprep.mubr.bf16.mxu0 %v127
  %317 = vmatmul.mubr.bf16.gmra.mrb[0].mxu0 %v126
  %v318 = vpop.f32.mrb[0].mxu0
  %v319 = vadd.f32 %v67, %v318
  %v320 = vpop.f32.mrb[0].mxu0
  %v321 = vpop.f32.mrb[0].mxu0
  %v322 = vadd.f32 %v67, %v321
  %v323 = vpop.f32.mrb[0].mxu0
  %324 = vmatprep.mubr.bf16.mxu0 %v129
  %325 = vmatmul.mubr.bf16.gmra.mrb[0].mxu0 %v128
  %v326 = vpop.f32.mrb[0].mxu0
  %v327 = vadd.f32 %v67, %v326
  %v328 = vpop.f32.mrb[0].mxu0
  %v329 = vpop.f32.mrb[0].mxu0
  %v330 = vadd.f32 %v67, %v329
  %v331 = vpop.f32.mrb[0].mxu0
  %332 = vmatprep.mubr.bf16.mxu0 %v131
  %333 = vmatmul.mubr.bf16.gmra.mrb[0].mxu0 %v130
  %v334 = vpop.f32.mrb[0].mxu0
  %v335 = vadd.f32 %v67, %v334
  %v336 = vpop.f32.mrb[0].mxu0
  %v337 = vpop.f32.mrb[0].mxu0
  %v338 = vadd.f32 %v67, %v337
  %v339 = vpop.f32.mrb[0].mxu0
  %340 = vdwg.mxu0
  %v341 = vmax.f32 %v279, 0.0
  %v342 = vmax.f32 %v282, 0.0
  %v343 = vmax.f32 %v287, 0.0
  %v344 = vmax.f32 %v290, 0.0
  %v345 = vmax.f32 %v295, 0.0
  %v346 = vmax.f32 %v298, 0.0
  %v347 = vmax.f32 %v303, 0.0
  %v348 = vmax.f32 %v306, 0.0
  %v349 = vmax.f32 %v311, 0.0
  %v350 = vmax.f32 %v314, 0.0
  %v351 = vmax.f32 %v319, 0.0
  %v352 = vmax.f32 %v322, 0.0
  %v353 = vmax.f32 %v327, 0.0
  %v354 = vmax.f32 %v330, 0.0
  %v355 = vmax.f32 %v335, 0.0
  %v356 = vmax.f32 %v338, 0.0
  %v357 = vpack.c.bf16 %v342, %v341
  %v358 = vpack.c.bf16 %v344, %v343
  %v359 = vpack.c.bf16 %v346, %v345
  %v360 = vpack.c.bf16 %v348, %v347
  %v361 = vpack.c.bf16 %v350, %v349
  %v362 = vpack.c.bf16 %v352, %v351
  %v363 = vpack.c.bf16 %v354, %v353
  %v364 = vpack.c.bf16 %v356, %v355
  %v373 = vunpack.c.l.b16 %v357
  %v374 = vunpack.c.h.b16 %v357
  %v375 = vunpack.c.l.b16 %v358
  %v376 = vunpack.c.h.b16 %v358
  %v377 = vunpack.c.l.b16 %v359
  %v378 = vunpack.c.h.b16 %v359
  %v379 = vunpack.c.l.b16 %v360
  %v380 = vunpack.c.h.b16 %v360
  %v381 = vunpack.c.l.b16 %v361
  %v382 = vunpack.c.h.b16 %v361
  %v383 = vunpack.c.l.b16 %v362
  %v384 = vunpack.c.h.b16 %v362
  %v385 = vunpack.c.l.b16 %v363
  %v386 = vunpack.c.h.b16 %v363
  %v387 = vunpack.c.l.b16 %v364
  %v388 = vunpack.c.h.b16 %v364
  %v389 = vpack.c.b16 %v373, %v373
  %v390 = vpack.c.b16 %v374, %v374
  %v391 = vpack.c.b16 %v375, %v375
  %v392 = vpack.c.b16 %v376, %v376
  %v393 = vpack.c.b16 %v377, %v377
  %v394 = vpack.c.b16 %v378, %v378
  %v395 = vpack.c.b16 %v379, %v379
  %v396 = vpack.c.b16 %v380, %v380
  %v397 = vpack.c.b16 %v381, %v381
  %v398 = vpack.c.b16 %v382, %v382
  %v399 = vpack.c.b16 %v383, %v383
  %v400 = vpack.c.b16 %v384, %v384
  %v401 = vpack.c.b16 %v385, %v385
  %v402 = vpack.c.b16 %v386, %v386
  %v403 = vpack.c.b16 %v387, %v387
  %v404 = vpack.c.b16 %v388, %v388
  %421 = vst [vmem:[%s3] sm:$0xf] %v389
  %422 = vst [vmem:[%s3 + $0x4] sm:$0xf] %v390
  %423 = vst [vmem:[%s3 + $0x8] sm:$0xf] %v391
  %424 = vst [vmem:[%s3 + $0xc] sm:$0xf] %v392
  %425 = vst [vmem:[%s3 + $0x10] sm:$0xf] %v393
  %426 = vst [vmem:[%s3 + $0x14] sm:$0xf] %v394
  %427 = vst [vmem:[%s3 + $0x18] sm:$0xf] %v395
  %428 = vst [vmem:[%s3 + $0x1c] sm:$0xf] %v396
  %429 = vst [vmem:[%s3 + $0x20] sm:$0xf] %v397
  %430 = vst [vmem:[%s3 + $0x24] sm:$0xf] %v398
  %431 = vst [vmem:[%s3 + $0x28] sm:$0xf] %v399
  %432 = vst [vmem:[%s3 + $0x2c] sm:$0xf] %v400
  %433 = vst [vmem:[%s3 + $0x30] sm:$0xf] %v401
  %434 = vst [vmem:[%s3 + $0x34] sm:$0xf] %v402
  %435 = vst [vmem:[%s3 + $0x38] sm:$0xf] %v403
  %436 = vst [vmem:[%s3 + $0x3c] sm:$0xf] %v404
  // Predicated region
  $region14: #{arfaf_net_forward.14} parent=0 // pred_check
    _
  $region15: #{arfaf_net_forward.14} parent=0 // pred_check_branch
    %438 = sbr.rel (0) target = $region17
  $region16: #{arfaf_net_forward.14} parent=0 // pred_region
    _
  $region17: #{arfaf_net_forward.14} parent=0 // pred_fallthru
    _
  // Predicated region
  $region18: #{arfaf_net_forward.14} parent=0 // pred_check
    _
  $region19: #{arfaf_net_forward.14} parent=0 // pred_check_branch
    %440 = sbr.rel (0) target = $region21
  $region20: #{arfaf_net_forward.14} parent=0 // pred_region
    _
  $region21: #{arfaf_net_forward.14} parent=0 // pred_fallthru
    _

// kernel: arfaf_net_forward.15
$region0: #{arfaf_net_forward.15}
  #allocation0 [shape = 'u32[]', space=smem, size = 0x4, offset = 0x4, fixed_abs, tag = 'smem constant byte address 0x4 - core index']
  #allocation1 [shape = 'u32[144,128]{1,0:T(1,128)}', space=vmem, size = 0x12000, scoped, tag = 'internal scratch']
  %s0 = inlined_call_operand.vmem [shape: bf16[1,128,128], index: 0, kind: input, shape index: {}]
  %s1 = inlined_call_operand.vmem [shape: bf16[1,128,128], index: 1, kind: input, shape index: {}]
  %s2 = inlined_call_operand.vmem [shape: f32[1,8,128], index: 2, kind: input, shape index: {}]
  %s3 = inlined_call_operand.vmem [shape: f32[1,128,128], index: 3, kind: output, shape index: {}]
  %s4 = sld [smem:[#allocation0]]
  $region22: #{arfaf_net_forward.15} parent=0
    _
  %s6 = ssub.s32 1, %s4
  %s7 = scalar_select 0, %s6, %s4
  // Predicated region
  $region2: #{arfaf_net_forward.15} parent=0 // pred_check
    _
  $region3: #{arfaf_net_forward.15} parent=0 // pred_check_branch
    %9 = sbr.rel (0) target = $region5
  $region4: #{arfaf_net_forward.15} parent=0 // pred_region
    _
  $region5: #{arfaf_net_forward.15} parent=0 // pred_fallthru
    _
  // Predicated region
  $region6: #{arfaf_net_forward.15} parent=0 // pred_check
    _
  $region7: #{arfaf_net_forward.15} parent=0 // pred_check_branch
    %11 = sbr.rel (0) target = $region9
  $region8: #{arfaf_net_forward.15} parent=0 // pred_region
    _
  $region9: #{arfaf_net_forward.15} parent=0 // pred_fallthru
    _
  // Predicated region
  $region10: #{arfaf_net_forward.15} parent=0 // pred_check
    _
  $region11: #{arfaf_net_forward.15} parent=0 // pred_check_branch
    %13 = sbr.rel (0) target = $region13
  $region12: #{arfaf_net_forward.15} parent=0 // pred_region
    _
  $region13: #{arfaf_net_forward.15} parent=0 // pred_fallthru
    _
  %v15 = vld [vmem:[%s0] sm:$0xf]
  %v16 = vld [vmem:[%s0 + $0x4] sm:$0xf]
  %v17 = vld [vmem:[%s0 + $0x8] sm:$0xf]
  %v18 = vld [vmem:[%s0 + $0xc] sm:$0xf]
  %v19 = vld [vmem:[%s0 + $0x10] sm:$0xf]
  %v20 = vld [vmem:[%s0 + $0x14] sm:$0xf]
  %v21 = vld [vmem:[%s0 + $0x18] sm:$0xf]
  %v22 = vld [vmem:[%s0 + $0x1c] sm:$0xf]
  %v23 = vld [vmem:[%s0 + $0x20] sm:$0xf]
  %v24 = vld [vmem:[%s0 + $0x24] sm:$0xf]
  %v25 = vld [vmem:[%s0 + $0x28] sm:$0xf]
  %v26 = vld [vmem:[%s0 + $0x2c] sm:$0xf]
  %v27 = vld [vmem:[%s0 + $0x30] sm:$0xf]
  %v28 = vld [vmem:[%s0 + $0x34] sm:$0xf]
  %v29 = vld [vmem:[%s0 + $0x38] sm:$0xf]
  %v30 = vld [vmem:[%s0 + $0x3c] sm:$0xf]
  %v31 = vld [vmem:[%s1] sm:$0xf]
  %v32 = vld [vmem:[%s1 + $0x4] sm:$0xf]
  %v33 = vld [vmem:[%s1 + $0x8] sm:$0xf]
  %v34 = vld [vmem:[%s1 + $0xc] sm:$0xf]
  %v35 = vld [vmem:[%s1 + $0x10] sm:$0xf]
  %v36 = vld [vmem:[%s1 + $0x14] sm:$0xf]
  %v37 = vld [vmem:[%s1 + $0x18] sm:$0xf]
  %v38 = vld [vmem:[%s1 + $0x1c] sm:$0xf]
  %v39 = vld [vmem:[%s1 + $0x20] sm:$0xf]
  %v40 = vld [vmem:[%s1 + $0x24] sm:$0xf]
  %v41 = vld [vmem:[%s1 + $0x28] sm:$0xf]
  %v42 = vld [vmem:[%s1 + $0x2c] sm:$0xf]
  %v43 = vld [vmem:[%s1 + $0x30] sm:$0xf]
  %v44 = vld [vmem:[%s1 + $0x34] sm:$0xf]
  %v45 = vld [vmem:[%s1 + $0x38] sm:$0xf]
  %v46 = vld [vmem:[%s1 + $0x3c] sm:$0xf]
  %v47 = vld [vmem:[%s2] sm:$0x1]
  %v48 = vlaneseq
  %v49 = vshrl.u32 %v48, 7
  %v50 = vsub.s32 0, %v49
  %v51 = vrot.slane %v47, %v50
  %v68 = vunpack.c.l.b16 %v15
  %v69 = vunpack.c.l.b16 %v16
  %v70 = vunpack.c.l.b16 %v17
  %v71 = vunpack.c.l.b16 %v18
  %v72 = vunpack.c.l.b16 %v19
  %v73 = vunpack.c.l.b16 %v20
  %v74 = vunpack.c.l.b16 %v21
  %v75 = vunpack.c.l.b16 %v22
  %v76 = vunpack.c.l.b16 %v23
  %v77 = vunpack.c.l.b16 %v24
  %v78 = vunpack.c.l.b16 %v25
  %v79 = vunpack.c.l.b16 %v26
  %v80 = vunpack.c.l.b16 %v27
  %v81 = vunpack.c.l.b16 %v28
  %v82 = vunpack.c.l.b16 %v29
  %v83 = vunpack.c.l.b16 %v30
  %v84 = vpack.c.b16 %v69, %v68
  %v85 = vpack.c.b16 %v71, %v70
  %v86 = vpack.c.b16 %v73, %v72
  %v87 = vpack.c.b16 %v75, %v74
  %v88 = vpack.c.b16 %v77, %v76
  %v89 = vpack.c.b16 %v79, %v78
  %v90 = vpack.c.b16 %v81, %v80
  %v91 = vpack.c.b16 %v83, %v82
  %v116 = vunpack.c.l.b16 %v31
  %v117 = vunpack.c.l.b16 %v32
  %v118 = vunpack.c.l.b16 %v33
  %v119 = vunpack.c.l.b16 %v34
  %v120 = vunpack.c.l.b16 %v35
  %v121 = vunpack.c.l.b16 %v36
  %v122 = vunpack.c.l.b16 %v37
  %v123 = vunpack.c.l.b16 %v38
  %v124 = vunpack.c.l.b16 %v39
  %v125 = vunpack.c.l.b16 %v40
  %v126 = vunpack.c.l.b16 %v41
  %v127 = vunpack.c.l.b16 %v42
  %v128 = vunpack.c.l.b16 %v43
  %v129 = vunpack.c.l.b16 %v44
  %v130 = vunpack.c.l.b16 %v45
  %v131 = vunpack.c.l.b16 %v46
  %v132 = vpack.c.b16 %v117, %v116
  %v133 = vpack.c.b16 %v119, %v118
  %v134 = vpack.c.b16 %v121, %v120
  %v135 = vpack.c.b16 %v123, %v122
  %v136 = vpack.c.b16 %v125, %v124
  %v137 = vpack.c.b16 %v127, %v126
  %v138 = vpack.c.b16 %v129, %v128
  %v139 = vpack.c.b16 %v131, %v130
  %148 = vmatprep.subr.bf16.mxu0 0
  %149 = vmatpush1.bf16.msra.mxu0 %v132
  %150 = vmatprep.subr.bf16.mxu0 0
  %151 = vmatpush1.bf16.msra.mxu0 %v133
  %152 = vmatprep.subr.bf16.mxu0 0
  %153 = vmatpush1.bf16.msra.mxu0 %v134
  %154 = vmatprep.subr.bf16.mxu0 0
  %155 = vmatpush1.bf16.msra.mxu0 %v135
  %156 = vmatprep.subr.bf16.mxu0 0
  %157 = vmatpush1.bf16.msra.mxu0 %v136
  %158 = vmatprep.subr.bf16.mxu0 0
  %159 = vmatpush1.bf16.msra.mxu0 %v137
  %160 = vmatprep.subr.bf16.mxu0 0
  %161 = vmatpush1.bf16.msra.mxu0 %v138
  %162 = vmatprep.subr.bf16.mxu0 0
  %163 = vmatpush1.bf16.msra.mxu0 %v139
  %164 = vmatprep.subr.bf16.mxu0 0
  %165 = vmatpush1.bf16.msra.mxu0 0
  %166 = vmatprep.subr.bf16.mxu0 0
  %167 = vmatpush1.bf16.msra.mxu0 0
  %168 = vmatprep.subr.bf16.mxu0 0
  %169 = vmatpush1.bf16.msra.mxu0 0
  %170 = vmatprep.subr.bf16.mxu0 0
  %171 = vmatpush1.bf16.msra.mxu0 0
  %172 = vmatprep.subr.bf16.mxu0 0
  %173 = vmatpush1.bf16.msra.mxu0 0
  %174 = vmatprep.subr.bf16.mxu0 0
  %175 = vmatpush1.bf16.msra.mxu0 0
  %176 = vmatprep.subr.bf16.mxu0 0
  %177 = vmatpush1.bf16.msra.mxu0 0
  %178 = vmatprep.subr.bf16.mxu0 0
  %179 = vmatpush1.bf16.msra.mxu0 0
  %180 = vmatprep.mubr.bf16.mxu0 0
  %181 = vmatmul.mubr.bf16.gmra.mrb[0].mxu0 %v84
  %v182 = vpop.f32.mrb[0].mxu0
  %v183 = vadd.f32 %v51, %v182
  %v184 = vpop.f32.mrb[0].mxu0
  %v185 = vpop.f32.mrb[0].mxu0
  %v186 = vadd.f32 %v51, %v185
  %v187 = vpop.f32.mrb[0].mxu0
  %188 = vmatprep.mubr.bf16.mxu0 0
  %189 = vmatmul.mubr.bf16.gmra.mrb[0].mxu0 %v85
  %v190 = vpop.f32.mrb[0].mxu0
  %v191 = vadd.f32 %v51, %v190
  %v192 = vpop.f32.mrb[0].mxu0
  %v193 = vpop.f32.mrb[0].mxu0
  %v194 = vadd.f32 %v51, %v193
  %v195 = vpop.f32.mrb[0].mxu0
  %196 = vmatprep.mubr.bf16.mxu0 0
  %197 = vmatmul.mubr.bf16.gmra.mrb[0].mxu0 %v86
  %v198 = vpop.f32.mrb[0].mxu0
  %v199 = vadd.f32 %v51, %v198
  %v200 = vpop.f32.mrb[0].mxu0
  %v201 = vpop.f32.mrb[0].mxu0
  %v202 = vadd.f32 %v51, %v201
  %v203 = vpop.f32.mrb[0].mxu0
  %204 = vmatprep.mubr.bf16.mxu0 0
  %205 = vmatmul.mubr.bf16.gmra.mrb[0].mxu0 %v87
  %v206 = vpop.f32.mrb[0].mxu0
  %v207 = vadd.f32 %v51, %v206
  %v208 = vpop.f32.mrb[0].mxu0
  %v209 = vpop.f32.mrb[0].mxu0
  %v210 = vadd.f32 %v51, %v209
  %v211 = vpop.f32.mrb[0].mxu0
  %212 = vmatprep.mubr.bf16.mxu0 0
  %213 = vmatmul.mubr.bf16.gmra.mrb[0].mxu0 %v88
  %v214 = vpop.f32.mrb[0].mxu0
  %v215 = vadd.f32 %v51, %v214
  %v216 = vpop.f32.mrb[0].mxu0
  %v217 = vpop.f32.mrb[0].mxu0
  %v218 = vadd.f32 %v51, %v217
  %v219 = vpop.f32.mrb[0].mxu0
  %220 = vmatprep.mubr.bf16.mxu0 0
  %221 = vmatmul.mubr.bf16.gmra.mrb[0].mxu0 %v89
  %v222 = vpop.f32.mrb[0].mxu0
  %v223 = vadd.f32 %v51, %v222
  %v224 = vpop.f32.mrb[0].mxu0
  %v225 = vpop.f32.mrb[0].mxu0
  %v226 = vadd.f32 %v51, %v225
  %v227 = vpop.f32.mrb[0].mxu0
  %228 = vmatprep.mubr.bf16.mxu0 0
  %229 = vmatmul.mubr.bf16.gmra.mrb[0].mxu0 %v90
  %v230 = vpop.f32.mrb[0].mxu0
  %v231 = vadd.f32 %v51, %v230
  %v232 = vpop.f32.mrb[0].mxu0
  %v233 = vpop.f32.mrb[0].mxu0
  %v234 = vadd.f32 %v51, %v233
  %v235 = vpop.f32.mrb[0].mxu0
  %236 = vmatprep.mubr.bf16.mxu0 0
  %237 = vmatmul.mubr.bf16.gmra.mrb[0].mxu0 %v91
  %v238 = vpop.f32.mrb[0].mxu0
  %v239 = vadd.f32 %v51, %v238
  %v240 = vpop.f32.mrb[0].mxu0
  %v241 = vpop.f32.mrb[0].mxu0
  %v242 = vadd.f32 %v51, %v241
  %v243 = vpop.f32.mrb[0].mxu0
  %244 = vdwg.mxu0
  %v245 = vxor.u32 %v183, 2147483648
  %v246 = vxor.u32 %v186, 2147483648
  %v247 = vxor.u32 %v191, 2147483648
  %v248 = vxor.u32 %v194, 2147483648
  %v249 = vxor.u32 %v199, 2147483648
  %v250 = vxor.u32 %v202, 2147483648
  %v251 = vxor.u32 %v207, 2147483648
  %v252 = vxor.u32 %v210, 2147483648
  %v253 = vxor.u32 %v215, 2147483648
  %v254 = vxor.u32 %v218, 2147483648
  %v255 = vxor.u32 %v223, 2147483648
  %v256 = vxor.u32 %v226, 2147483648
  %v257 = vxor.u32 %v231, 2147483648
  %v258 = vxor.u32 %v234, 2147483648
  %v259 = vxor.u32 %v239, 2147483648
  %v260 = vxor.u32 %v242, 2147483648
  %v261 = vmul.f32 %v245, 1.442695
  %v262 = vpow.pop %v261
  %v263 = vmul.f32 %v246, 1.442695
  %v264 = vpow.pop %v263
  %v265 = vmul.f32 %v247, 1.442695
  %v266 = vpow.pop %v265
  %v267 = vmul.f32 %v248, 1.442695
  %v268 = vpow.pop %v267
  %v269 = vmul.f32 %v249, 1.442695
  %v270 = vpow.pop %v269
  %v271 = vmul.f32 %v250, 1.442695
  %v272 = vpow.pop %v271
  %v273 = vmul.f32 %v251, 1.442695
  %v274 = vpow.pop %v273
  %v275 = vmul.f32 %v252, 1.442695
  %v276 = vpow.pop %v275
  %v277 = vmul.f32 %v253, 1.442695
  %v278 = vpow.pop %v277
  %v279 = vmul.f32 %v254, 1.442695
  %v280 = vpow.pop %v279
  %v281 = vmul.f32 %v255, 1.442695
  %v282 = vpow.pop %v281
  %v283 = vmul.f32 %v256, 1.442695
  %v284 = vpow.pop %v283
  %v285 = vmul.f32 %v257, 1.442695
  %v286 = vpow.pop %v285
  %v287 = vmul.f32 %v258, 1.442695
  %v288 = vpow.pop %v287
  %v289 = vmul.f32 %v259, 1.442695
  %v290 = vpow.pop %v289
  %v291 = vmul.f32 %v260, 1.442695
  %v292 = vpow.pop %v291
  %v293 = vadd.f32 %v262, 1.0
  %v294 = vadd.f32 %v264, 1.0
  %v295 = vadd.f32 %v266, 1.0
  %v296 = vadd.f32 %v268, 1.0
  %v297 = vadd.f32 %v270, 1.0
  %v298 = vadd.f32 %v272, 1.0
  %v299 = vadd.f32 %v274, 1.0
  %v300 = vadd.f32 %v276, 1.0
  %v301 = vadd.f32 %v278, 1.0
  %v302 = vadd.f32 %v280, 1.0
  %v303 = vadd.f32 %v282, 1.0
  %v304 = vadd.f32 %v284, 1.0
  %v305 = vadd.f32 %v286, 1.0
  %v306 = vadd.f32 %v288, 1.0
  %v307 = vadd.f32 %v290, 1.0
  %v308 = vadd.f32 %v292, 1.0
  %v309 = vrcp.pop %v293
  %v310 = vmul.f32 1.0, %v309
  %v311 = vrcp.pop %v294
  %v312 = vmul.f32 1.0, %v311
  %v313 = vrcp.pop %v295
  %v314 = vmul.f32 1.0, %v313
  %v315 = vrcp.pop %v296
  %v316 = vmul.f32 1.0, %v315
  %v317 = vrcp.pop %v297
  %v318 = vmul.f32 1.0, %v317
  %v319 = vrcp.pop %v298
  %v320 = vmul.f32 1.0, %v319
  %v321 = vrcp.pop %v299
  %v322 = vmul.f32 1.0, %v321
  %v323 = vrcp.pop %v300
  %v324 = vmul.f32 1.0, %v323
  %v325 = vrcp.pop %v301
  %v326 = vmul.f32 1.0, %v325
  %v327 = vrcp.pop %v302
  %v328 = vmul.f32 1.0, %v327
  %v329 = vrcp.pop %v303
  %v330 = vmul.f32 1.0, %v329
  %v331 = vrcp.pop %v304
  %v332 = vmul.f32 1.0, %v331
  %v333 = vrcp.pop %v305
  %v334 = vmul.f32 1.0, %v333
  %v335 = vrcp.pop %v306
  %v336 = vmul.f32 1.0, %v335
  %v337 = vrcp.pop %v307
  %v338 = vmul.f32 1.0, %v337
  %v339 = vrcp.pop %v308
  %v340 = vmul.f32 1.0, %v339
  %341 = vst [vmem:[%s3] sm:$0xff] %v310
  %342 = vst [vmem:[%s3 + $0x8] sm:$0xff] %v312
  %343 = vst [vmem:[%s3 + $0x10] sm:$0xff] %v314
  %344 = vst [vmem:[%s3 + $0x18] sm:$0xff] %v316
  %345 = vst [vmem:[%s3 + $0x20] sm:$0xff] %v318
  %346 = vst [vmem:[%s3 + $0x28] sm:$0xff] %v320
  %347 = vst [vmem:[%s3 + $0x30] sm:$0xff] %v322
  %348 = vst [vmem:[%s3 + $0x38] sm:$0xff] %v324
  %349 = vst [vmem:[%s3 + $0x40] sm:$0xff] %v326
  %350 = vst [vmem:[%s3 + $0x48] sm:$0xff] %v328
  %351 = vst [vmem:[%s3 + $0x50] sm:$0xff] %v330
  %352 = vst [vmem:[%s3 + $0x58] sm:$0xff] %v332
  %353 = vst [vmem:[%s3 + $0x60] sm:$0xff] %v334
  %354 = vst [vmem:[%s3 + $0x68] sm:$0xff] %v336
  %355 = vst [vmem:[%s3 + $0x70] sm:$0xff] %v338
  %356 = vst [vmem:[%s3 + $0x78] sm:$0xff] %v340
  // Predicated region
  $region14: #{arfaf_net_forward.15} parent=0 // pred_check
    _
  $region15: #{arfaf_net_forward.15} parent=0 // pred_check_branch
    %358 = sbr.rel (0) target = $region17
  $region16: #{arfaf_net_forward.15} parent=0 // pred_region
    _
  $region17: #{arfaf_net_forward.15} parent=0 // pred_fallthru
    _
  // Predicated region
  $region18: #{arfaf_net_forward.15} parent=0 // pred_check
    _
  $region19: #{arfaf_net_forward.15} parent=0 // pred_check_branch
    %360 = sbr.rel (0) target = $region21
  $region20: #{arfaf_net_forward.15} parent=0 // pred_region
    _
  $region21: #{arfaf_net_forward.15} parent=0 // pred_fallthru
    _

// kernel: arfaf_net_forward.13
$region0: #{arfaf_net_forward.13}
  #allocation0 [shape = 'u32[]', space=smem, size = 0x4, offset = 0x4, fixed_abs, tag = 'smem constant byte address 0x4 - core index']
  #allocation1 [shape = 'u32[144,128]{1,0:T(1,128)}', space=vmem, size = 0x12000, scoped, tag = 'internal scratch']
  %s0 = inlined_call_operand.vmem [shape: bf16[8,128,128], index: 0, kind: input, shape index: {}]
  %s1 = inlined_call_operand.vmem [shape: bf16[8,128,128], index: 1, kind: input, shape index: {}]
  %s2 = inlined_call_operand.vmem [shape: f32[8,8,128], index: 2, kind: input, shape index: {}]
  %s3 = inlined_call_operand.vmem [shape: bf16[128,128], index: 3, kind: output, shape index: {}]
  %s4 = sld [smem:[#allocation0]]
  $region22: #{arfaf_net_forward.13} parent=0
    _
  %s6 = ssub.s32 1, %s4
  %s7 = scalar_select 0, %s6, %s4
  // Predicated region
  $region2: #{arfaf_net_forward.13} parent=0 // pred_check
    _
  $region3: #{arfaf_net_forward.13} parent=0 // pred_check_branch
    %9 = sbr.rel (0) target = $region5
  $region4: #{arfaf_net_forward.13} parent=0 // pred_region
    _
  $region5: #{arfaf_net_forward.13} parent=0 // pred_fallthru
    _
  // Predicated region
  $region6: #{arfaf_net_forward.13} parent=0 // pred_check
    _
  $region7: #{arfaf_net_forward.13} parent=0 // pred_check_branch
    %11 = sbr.rel (0) target = $region9
  $region8: #{arfaf_net_forward.13} parent=0 // pred_region
    _
  $region9: #{arfaf_net_forward.13} parent=0 // pred_fallthru
    _
  // Predicated region
  $region10: #{arfaf_net_forward.13} parent=0 // pred_check
    _
  $region11: #{arfaf_net_forward.13} parent=0 // pred_check_branch
    %13 = sbr.rel (0) target = $region13
  $region12: #{arfaf_net_forward.13} parent=0 // pred_region
    _
  $region13: #{arfaf_net_forward.13} parent=0 // pred_fallthru
    _
  %v15 = vld [vmem:[%s0] sm:$0xf]
  %v16 = vld [vmem:[%s0 + $0x4] sm:$0xf]
  %v17 = vld [vmem:[%s0 + $0x8] sm:$0xf]
  %v18 = vld [vmem:[%s0 + $0xc] sm:$0xf]
  %v19 = vld [vmem:[%s0 + $0x10] sm:$0xf]
  %v20 = vld [vmem:[%s0 + $0x14] sm:$0xf]
  %v21 = vld [vmem:[%s0 + $0x18] sm:$0xf]
  %v22 = vld [vmem:[%s0 + $0x1c] sm:$0xf]
  %v23 = vld [vmem:[%s0 + $0x20] sm:$0xf]
  %v24 = vld [vmem:[%s0 + $0x24] sm:$0xf]
  %v25 = vld [vmem:[%s0 + $0x28] sm:$0xf]
  %v26 = vld [vmem:[%s0 + $0x2c] sm:$0xf]
  %v27 = vld [vmem:[%s0 + $0x30] sm:$0xf]
  %v28 = vld [vmem:[%s0 + $0x34] sm:$0xf]
  %v29 = vld [vmem:[%s0 + $0x38] sm:$0xf]
  %v30 = vld [vmem:[%s0 + $0x3c] sm:$0xf]
  %v31 = vld [vmem:[%s1] sm:$0xf]
  %v32 = vld [vmem:[%s1 + $0x4] sm:$0xf]
  %v33 = vld [vmem:[%s1 + $0x8] sm:$0xf]
  %v34 = vld [vmem:[%s1 + $0xc] sm:$0xf]
  %v35 = vld [vmem:[%s1 + $0x10] sm:$0xf]
  %v36 = vld [vmem:[%s1 + $0x14] sm:$0xf]
  %v37 = vld [vmem:[%s1 + $0x18] sm:$0xf]
  %v38 = vld [vmem:[%s1 + $0x1c] sm:$0xf]
  %v39 = vld [vmem:[%s1 + $0x20] sm:$0xf]
  %v40 = vld [vmem:[%s1 + $0x24] sm:$0xf]
  %v41 = vld [vmem:[%s1 + $0x28] sm:$0xf]
  %v42 = vld [vmem:[%s1 + $0x2c] sm:$0xf]
  %v43 = vld [vmem:[%s1 + $0x30] sm:$0xf]
  %v44 = vld [vmem:[%s1 + $0x34] sm:$0xf]
  %v45 = vld [vmem:[%s1 + $0x38] sm:$0xf]
  %v46 = vld [vmem:[%s1 + $0x3c] sm:$0xf]
  %v47 = vld [vmem:[%s2] sm:$0xff]
  %v48 = vlaneseq
  %v49 = vshrl.u32 %v48, 7
  %v50 = vsub.s32 0, %v49
  %v51 = vrot.slane %v47, %v50
  %v68 = vunpack.c.l.b16 %v15
  %v69 = vunpack.c.l.b16 %v16
  %v70 = vunpack.c.l.b16 %v17
  %v71 = vunpack.c.l.b16 %v18
  %v72 = vunpack.c.l.b16 %v19
  %v73 = vunpack.c.l.b16 %v20
  %v74 = vunpack.c.l.b16 %v21
  %v75 = vunpack.c.l.b16 %v22
  %v76 = vunpack.c.l.b16 %v23
  %v77 = vunpack.c.l.b16 %v24
  %v78 = vunpack.c.l.b16 %v25
  %v79 = vunpack.c.l.b16 %v26
  %v80 = vunpack.c.l.b16 %v27
  %v81 = vunpack.c.l.b16 %v28
  %v82 = vunpack.c.l.b16 %v29
  %v83 = vunpack.c.l.b16 %v30
  %v84 = vpack.c.b16 %v69, %v68
  %v85 = vpack.c.b16 %v71, %v70
  %v86 = vpack.c.b16 %v73, %v72
  %v87 = vpack.c.b16 %v75, %v74
  %v88 = vpack.c.b16 %v77, %v76
  %v89 = vpack.c.b16 %v79, %v78
  %v90 = vpack.c.b16 %v81, %v80
  %v91 = vpack.c.b16 %v83, %v82
  %v116 = vunpack.c.l.b16 %v31
  %v117 = vunpack.c.l.b16 %v32
  %v118 = vunpack.c.l.b16 %v33
  %v119 = vunpack.c.l.b16 %v34
  %v120 = vunpack.c.l.b16 %v35
  %v121 = vunpack.c.l.b16 %v36
  %v122 = vunpack.c.l.b16 %v37
  %v123 = vunpack.c.l.b16 %v38
  %v124 = vunpack.c.l.b16 %v39
  %v125 = vunpack.c.l.b16 %v40
  %v126 = vunpack.c.l.b16 %v41
  %v127 = vunpack.c.l.b16 %v42
  %v128 = vunpack.c.l.b16 %v43
  %v129 = vunpack.c.l.b16 %v44
  %v130 = vunpack.c.l.b16 %v45
  %v131 = vunpack.c.l.b16 %v46
  %v132 = vpack.c.b16 %v117, %v116
  %v133 = vpack.c.b16 %v119, %v118
  %v134 = vpack.c.b16 %v121, %v120
  %v135 = vpack.c.b16 %v123, %v122
  %v136 = vpack.c.b16 %v125, %v124
  %v137 = vpack.c.b16 %v127, %v126
  %v138 = vpack.c.b16 %v129, %v128
  %v139 = vpack.c.b16 %v131, %v130
  %148 = vmatprep.subr.bf16.mxu0 0
  %149 = vmatpush1.bf16.msra.mxu0 %v132
  %150 = vmatprep.subr.bf16.mxu0 0
  %151 = vmatpush1.bf16.msra.mxu0 %v133
  %152 = vmatprep.subr.bf16.mxu0 0
  %153 = vmatpush1.bf16.msra.mxu0 %v134
  %154 = vmatprep.subr.bf16.mxu0 0
  %155 = vmatpush1.bf16.msra.mxu0 %v135
  %156 = vmatprep.subr.bf16.mxu0 0
  %157 = vmatpush1.bf16.msra.mxu0 %v136
  %158 = vmatprep.subr.bf16.mxu0 0
  %159 = vmatpush1.bf16.msra.mxu0 %v137
  %160 = vmatprep.subr.bf16.mxu0 0
  %161 = vmatpush1.bf16.msra.mxu0 %v138
  %162 = vmatprep.subr.bf16.mxu0 0
  %163 = vmatpush1.bf16.msra.mxu0 %v139
  %164 = vmatprep.subr.bf16.mxu0 0
  %165 = vmatpush1.bf16.msra.mxu0 0
  %166 = vmatprep.subr.bf16.mxu0 0
  %167 = vmatpush1.bf16.msra.mxu0 0
  %168 = vmatprep.subr.bf16.mxu0 0
  %169 = vmatpush1.bf16.msra.mxu0 0
  %170 = vmatprep.subr.bf16.mxu0 0
  %171 = vmatpush1.bf16.msra.mxu0 0
  %172 = vmatprep.subr.bf16.mxu0 0
  %173 = vmatpush1.bf16.msra.mxu0 0
  %174 = vmatprep.subr.bf16.mxu0 0
  %175 = vmatpush1.bf16.msra.mxu0 0
  %176 = vmatprep.subr.bf16.mxu0 0
  %177 = vmatpush1.bf16.msra.mxu0 0
  %178 = vmatprep.subr.bf16.mxu0 0
  %179 = vmatpush1.bf16.msra.mxu0 0
  %180 = vmatprep.mubr.bf16.mxu0 0
  %181 = vmatmul.mubr.bf16.gmra.mrb[0].mxu0 %v84
  %v182 = vpop.f32.mrb[0].mxu0
  %v183 = vadd.f32 %v51, %v182
  %v184 = vpop.f32.mrb[0].mxu0
  %v185 = vpop.f32.mrb[0].mxu0
  %v186 = vadd.f32 %v51, %v185
  %v187 = vpop.f32.mrb[0].mxu0
  %188 = vmatprep.mubr.bf16.mxu0 0
  %189 = vmatmul.mubr.bf16.gmra.mrb[0].mxu0 %v85
  %v190 = vpop.f32.mrb[0].mxu0
  %v191 = vadd.f32 %v51, %v190
  %v192 = vpop.f32.mrb[0].mxu0
  %v193 = vpop.f32.mrb[0].mxu0
  %v194 = vadd.f32 %v51, %v193
  %v195 = vpop.f32.mrb[0].mxu0
  %196 = vmatprep.mubr.bf16.mxu0 0
  %197 = vmatmul.mubr.bf16.gmra.mrb[0].mxu0 %v86
  %v198 = vpop.f32.mrb[0].mxu0
  %v199 = vadd.f32 %v51, %v198
  %v200 = vpop.f32.mrb[0].mxu0
  %v201 = vpop.f32.mrb[0].mxu0
  %v202 = vadd.f32 %v51, %v201
  %v203 = vpop.f32.mrb[0].mxu0
  %204 = vmatprep.mubr.bf16.mxu0 0
  %205 = vmatmul.mubr.bf16.gmra.mrb[0].mxu0 %v87
  %v206 = vpop.f32.mrb[0].mxu0
  %v207 = vadd.f32 %v51, %v206
  %v208 = vpop.f32.mrb[0].mxu0
  %v209 = vpop.f32.mrb[0].mxu0
  %v210 = vadd.f32 %v51, %v209
  %v211 = vpop.f32.mrb[0].mxu0
  %212 = vmatprep.mubr.bf16.mxu0 0
  %213 = vmatmul.mubr.bf16.gmra.mrb[0].mxu0 %v88
  %v214 = vpop.f32.mrb[0].mxu0
  %v215 = vadd.f32 %v51, %v214
  %v216 = vpop.f32.mrb[0].mxu0
  %v217 = vpop.f32.mrb[0].mxu0
  %v218 = vadd.f32 %v51, %v217
  %v219 = vpop.f32.mrb[0].mxu0
  %220 = vmatprep.mubr.bf16.mxu0 0
  %221 = vmatmul.mubr.bf16.gmra.mrb[0].mxu0 %v89
  %v222 = vpop.f32.mrb[0].mxu0
  %v223 = vadd.f32 %v51, %v222
  %v224 = vpop.f32.mrb[0].mxu0
  %v225 = vpop.f32.mrb[0].mxu0
  %v226 = vadd.f32 %v51, %v225
  %v227 = vpop.f32.mrb[0].mxu0
  %228 = vmatprep.mubr.bf16.mxu0 0
  %229 = vmatmul.mubr.bf16.gmra.mrb[0].mxu0 %v90
  %v230 = vpop.f32.mrb[0].mxu0
  %v231 = vadd.f32 %v51, %v230
  %v232 = vpop.f32.mrb[0].mxu0
  %v233 = vpop.f32.mrb[0].mxu0
  %v234 = vadd.f32 %v51, %v233
  %v235 = vpop.f32.mrb[0].mxu0
  %236 = vmatprep.mubr.bf16.mxu0 0
  %237 = vmatmul.mubr.bf16.gmra.mrb[0].mxu0 %v91
  %v238 = vpop.f32.mrb[0].mxu0
  %v239 = vadd.f32 %v51, %v238
  %v240 = vpop.f32.mrb[0].mxu0
  %v241 = vpop.f32.mrb[0].mxu0
  %v242 = vadd.f32 %v51, %v241
  %v243 = vpop.f32.mrb[0].mxu0
  %244 = vdwg.mxu0
  %v245 = vmax.f32 %v183, 0.0
  %v246 = vmax.f32 %v186, 0.0
  %v247 = vmax.f32 %v191, 0.0
  %v248 = vmax.f32 %v194, 0.0
  %v249 = vmax.f32 %v199, 0.0
  %v250 = vmax.f32 %v202, 0.0
  %v251 = vmax.f32 %v207, 0.0
  %v252 = vmax.f32 %v210, 0.0
  %v253 = vmax.f32 %v215, 0.0
  %v254 = vmax.f32 %v218, 0.0
  %v255 = vmax.f32 %v223, 0.0
  %v256 = vmax.f32 %v226, 0.0
  %v257 = vmax.f32 %v231, 0.0
  %v258 = vmax.f32 %v234, 0.0
  %v259 = vmax.f32 %v239, 0.0
  %v260 = vmax.f32 %v242, 0.0
  %v261 = vadd.f32 %v245, 0.0
  %v262 = vadd.f32 %v246, 0.0
  %v263 = vadd.f32 %v247, 0.0
  %v264 = vadd.f32 %v248, 0.0
  %v265 = vadd.f32 %v249, 0.0
  %v266 = vadd.f32 %v250, 0.0
  %v267 = vadd.f32 %v251, 0.0
  %v268 = vadd.f32 %v252, 0.0
  %v269 = vadd.f32 %v253, 0.0
  %v270 = vadd.f32 %v254, 0.0
  %v271 = vadd.f32 %v255, 0.0
  %v272 = vadd.f32 %v256, 0.0
  %v273 = vadd.f32 %v257, 0.0
  %v274 = vadd.f32 %v258, 0.0
  %v275 = vadd.f32 %v259, 0.0
  %v276 = vadd.f32 %v260, 0.0
  %s277 = scalar_lea.vmem %s0, 64
  %v278 = vld [vmem:[%s277] sm:$0xf]
  %v279 = vld [vmem:[%s277 + $0x4] sm:$0xf]
  %v280 = vld [vmem:[%s277 + $0x8] sm:$0xf]
  %v281 = vld [vmem:[%s277 + $0xc] sm:$0xf]
  %v282 = vld [vmem:[%s277 + $0x10] sm:$0xf]
  %v283 = vld [vmem:[%s277 + $0x14] sm:$0xf]
  %v284 = vld [vmem:[%s277 + $0x18] sm:$0xf]
  %v285 = vld [vmem:[%s277 + $0x1c] sm:$0xf]
  %v286 = vld [vmem:[%s277 + $0x20] sm:$0xf]
  %v287 = vld [vmem:[%s277 + $0x24] sm:$0xf]
  %v288 = vld [vmem:[%s277 + $0x28] sm:$0xf]
  %v289 = vld [vmem:[%s277 + $0x2c] sm:$0xf]
  %v290 = vld [vmem:[%s277 + $0x30] sm:$0xf]
  %v291 = vld [vmem:[%s277 + $0x34] sm:$0xf]
  %v292 = vld [vmem:[%s277 + $0x38] sm:$0xf]
  %v293 = vld [vmem:[%s277 + $0x3c] sm:$0xf]
  %s294 = scalar_lea.vmem %s1, 64
  %v295 = vld [vmem:[%s294] sm:$0xf]
  %v296 = vld [vmem:[%s294 + $0x4] sm:$0xf]
  %v297 = vld [vmem:[%s294 + $0x8] sm:$0xf]
  %v298 = vld [vmem:[%s294 + $0xc] sm:$0xf]
  %v299 = vld [vmem:[%s294 + $0x10] sm:$0xf]
  %v300 = vld [vmem:[%s294 + $0x14] sm:$0xf]
  %v301 = vld [vmem:[%s294 + $0x18] sm:$0xf]
  %v302 = vld [vmem:[%s294 + $0x1c] sm:$0xf]
  %v303 = vld [vmem:[%s294 + $0x20] sm:$0xf]
  %v304 = vld [vmem:[%s294 + $0x24] sm:$0xf]
  %v305 = vld [vmem:[%s294 + $0x28] sm:$0xf]
  %v306 = vld [vmem:[%s294 + $0x2c] sm:$0xf]
  %v307 = vld [vmem:[%s294 + $0x30] sm:$0xf]
  %v308 = vld [vmem:[%s294 + $0x34] sm:$0xf]
  %v309 = vld [vmem:[%s294 + $0x38] sm:$0xf]
  %v310 = vld [vmem:[%s294 + $0x3c] sm:$0xf]
  %s311 = scalar_lea.vmem %s2, 8
  %v312 = vld [vmem:[%s311] sm:$0xff]
  %v313 = vlaneseq
  %v314 = vshrl.u32 %v313, 7
  %v315 = vsub.s32 0, %v314
  %v316 = vrot.slane %v312, %v315
  %v333 = vunpack.c.l.b16 %v278
  %v334 = vunpack.c.l.b16 %v279
  %v335 = vunpack.c.l.b16 %v280
  %v336 = vunpack.c.l.b16 %v281
  %v337 = vunpack.c.l.b16 %v282
  %v338 = vunpack.c.l.b16 %v283
  %v339 = vunpack.c.l.b16 %v284
  %v340 = vunpack.c.l.b16 %v285
  %v341 = vunpack.c.l.b16 %v286
  %v342 = vunpack.c.l.b16 %v287
  %v343 = vunpack.c.l.b16 %v288
  %v344 = vunpack.c.l.b16 %v289
  %v345 = vunpack.c.l.b16 %v290
  %v346 = vunpack.c.l.b16 %v291
  %v347 = vunpack.c.l.b16 %v292
  %v348 = vunpack.c.l.b16 %v293
  %v349 = vpack.c.b16 %v334, %v333
  %v350 = vpack.c.b16 %v336, %v335
  %v351 = vpack.c.b16 %v338, %v337
  %v352 = vpack.c.b16 %v340, %v339
  %v353 = vpack.c.b16 %v342, %v341
  %v354 = vpack.c.b16 %v344, %v343
  %v355 = vpack.c.b16 %v346, %v345
  %v356 = vpack.c.b16 %v348, %v347
  %v381 = vunpack.c.l.b16 %v295
  %v382 = vunpack.c.l.b16 %v296
  %v383 = vunpack.c.l.b16 %v297
  %v384 = vunpack.c.l.b16 %v298
  %v385 = vunpack.c.l.b16 %v299
  %v386 = vunpack.c.l.b16 %v300
  %v387 = vunpack.c.l.b16 %v301
  %v388 = vunpack.c.l.b16 %v302
  %v389 = vunpack.c.l.b16 %v303
  %v390 = vunpack.c.l.b16 %v304
  %v391 = vunpack.c.l.b16 %v305
  %v392 = vunpack.c.l.b16 %v306
  %v393 = vunpack.c.l.b16 %v307
  %v394 = vunpack.c.l.b16 %v308
  %v395 = vunpack.c.l.b16 %v309
  %v396 = vunpack.c.l.b16 %v310
  %v397 = vpack.c.b16 %v382, %v381
  %v398 = vpack.c.b16 %v384, %v383
  %v399 = vpack.c.b16 %v386, %v385
  %v400 = vpack.c.b16 %v388, %v387
  %v401 = vpack.c.b16 %v390, %v389
  %v402 = vpack.c.b16 %v392, %v391
  %v403 = vpack.c.b16 %v394, %v393
  %v404 = vpack.c.b16 %v396, %v395
  %413 = vmatprep.subr.bf16.mxu0 0
  %414 = vmatpush1.bf16.msra.mxu0 %v397
  %415 = vmatprep.subr.bf16.mxu0 0
  %416 = vmatpush1.bf16.msra.mxu0 %v398
  %417 = vmatprep.subr.bf16.mxu0 0
  %418 = vmatpush1.bf16.msra.mxu0 %v399
  %419 = vmatprep.subr.bf16.mxu0 0
  %420 = vmatpush1.bf16.msra.mxu0 %v400
  %421 = vmatprep.subr.bf16.mxu0 0
  %422 = vmatpush1.bf16.msra.mxu0 %v401
  %423 = vmatprep.subr.bf16.mxu0 0
  %424 = vmatpush1.bf16.msra.mxu0 %v402
  %425 = vmatprep.subr.bf16.mxu0 0
  %426 = vmatpush1.bf16.msra.mxu0 %v403
  %427 = vmatprep.subr.bf16.mxu0 0
  %428 = vmatpush1.bf16.msra.mxu0 %v404
  %429 = vmatprep.subr.bf16.mxu0 0
  %430 = vmatpush1.bf16.msra.mxu0 0
  %431 = vmatprep.subr.bf16.mxu0 0
  %432 = vmatpush1.bf16.msra.mxu0 0
  %433 = vmatprep.subr.bf16.mxu0 0
  %434 = vmatpush1.bf16.msra.mxu0 0
  %435 = vmatprep.subr.bf16.mxu0 0
  %436 = vmatpush1.bf16.msra.mxu0 0
  %437 = vmatprep.subr.bf16.mxu0 0
  %438 = vmatpush1.bf16.msra.mxu0 0
  %439 = vmatprep.subr.bf16.mxu0 0
  %440 = vmatpush1.bf16.msra.mxu0 0
  %441 = vmatprep.subr.bf16.mxu0 0
  %442 = vmatpush1.bf16.msra.mxu0 0
  %443 = vmatprep.subr.bf16.mxu0 0
  %444 = vmatpush1.bf16.msra.mxu0 0
  %445 = vmatprep.mubr.bf16.mxu0 0
  %446 = vmatmul.mubr.bf16.gmra.mrb[0].mxu0 %v349
  %v447 = vpop.f32.mrb[0].mxu0
  %v448 = vadd.f32 %v316, %v447
  %v449 = vpop.f32.mrb[0].mxu0
  %v450 = vpop.f32.mrb[0].mxu0
  %v451 = vadd.f32 %v316, %v450
  %v452 = vpop.f32.mrb[0].mxu0
  %453 = vmatprep.mubr.bf16.mxu0 0
  %454 = vmatmul.mubr.bf16.gmra.mrb[0].mxu0 %v350
  %v455 = vpop.f32.mrb[0].mxu0
  %v456 = vadd.f32 %v316, %v455
  %v457 = vpop.f32.mrb[0].mxu0
  %v458 = vpop.f32.mrb[0].mxu0
  %v459 = vadd.f32 %v316, %v458
  %v460 = vpop.f32.mrb[0].mxu0
  %461 = vmatprep.mubr.bf16.mxu0 0
  %462 = vmatmul.mubr.bf16.gmra.mrb[0].mxu0 %v351
  %v463 = vpop.f32.mrb[0].mxu0
  %v464 = vadd.f32 %v316, %v463
  %v465 = vpop.f32.mrb[0].mxu0
  %v466 = vpop.f32.mrb[0].mxu0
  %v467 = vadd.f32 %v316, %v466
  %v468 = vpop.f32.mrb[0].mxu0
  %469 = vmatprep.mubr.bf16.mxu0 0
  %470 = vmatmul.mubr.bf16.gmra.mrb[0].mxu0 %v352
  %v471 = vpop.f32.mrb[0].mxu0
  %v472 = vadd.f32 %v316, %v471
  %v473 = vpop.f32.mrb[0].mxu0
  %v474 = vpop.f32.mrb[0].mxu0
  %v475 = vadd.f32 %v316, %v474
  %v476 = vpop.f32.mrb[0].mxu0
  %477 = vmatprep.mubr.bf16.mxu0 0
  %478 = vmatmul.mubr.bf16.gmra.mrb[0].mxu0 %v353
  %v479 = vpop.f32.mrb[0].mxu0
  %v480 = vadd.f32 %v316, %v479
  %v481 = vpop.f32.mrb[0].mxu0
  %v482 = vpop.f32.mrb[0].mxu0
  %v483 = vadd.f32 %v316, %v482
  %v484 = vpop.f32.mrb[0].mxu0
  %485 = vmatprep.mubr.bf16.mxu0 0
  %486 = vmatmul.mubr.bf16.gmra.mrb[0].mxu0 %v354
  %v487 = vpop.f32.mrb[0].mxu0
  %v488 = vadd.f32 %v316, %v487
  %v489 = vpop.f32.mrb[0].mxu0
  %v490 = vpop.f32.mrb[0].mxu0
  %v491 = vadd.f32 %v316, %v490
  %v492 = vpop.f32.mrb[0].mxu0
  %493 = vmatprep.mubr.bf16.mxu0 0
  %494 = vmatmul.mubr.bf16.gmra.mrb[0].mxu0 %v355
  %v495 = vpop.f32.mrb[0].mxu0
  %v496 = vadd.f32 %v316, %v495
  %v497 = vpop.f32.mrb[0].mxu0
  %v498 = vpop.f32.mrb[0].mxu0
  %v499 = vadd.f32 %v316, %v498
  %v500 = vpop.f32.mrb[0].mxu0
  %501 = vmatprep.mubr.bf16.mxu0 0
  %502 = vmatmul.mubr.bf16.gmra.mrb[0].mxu0 %v356
  %v503 = vpop.f32.mrb[0].mxu0
  %v504 = vadd.f32 %v316, %v503
  %v505 = vpop.f32.mrb[0].mxu0
  %v506 = vpop.f32.mrb[0].mxu0
  %v507 = vadd.f32 %v316, %v506
  %v508 = vpop.f32.mrb[0].mxu0
  %509 = vdwg.mxu0
  %v510 = vmax.f32 %v448, 0.0
  %v511 = vmax.f32 %v451, 0.0
  %v512 = vmax.f32 %v456, 0.0
  %v513 = vmax.f32 %v459, 0.0
  %v514 = vmax.f32 %v464, 0.0
  %v515 = vmax.f32 %v467, 0.0
  %v516 = vmax.f32 %v472, 0.0
  %v517 = vmax.f32 %v475, 0.0
  %v518 = vmax.f32 %v480, 0.0
  %v519 = vmax.f32 %v483, 0.0
  %v520 = vmax.f32 %v488, 0.0
  %v521 = vmax.f32 %v491, 0.0
  %v522 = vmax.f32 %v496, 0.0
  %v523 = vmax.f32 %v499, 0.0
  %v524 = vmax.f32 %v504, 0.0
  %v525 = vmax.f32 %v507, 0.0
  %v526 = vadd.f32 %v261, %v510
  %v527 = vadd.f32 %v262, %v511
  %v528 = vadd.f32 %v263, %v512
  %v529 = vadd.f32 %v264, %v513
  %v530 = vadd.f32 %v265, %v514
  %v531 = vadd.f32 %v266, %v515
  %v532 = vadd.f32 %v267, %v516
  %v533 = vadd.f32 %v268, %v517
  %v534 = vadd.f32 %v269, %v518
  %v535 = vadd.f32 %v270, %v519
  %v536 = vadd.f32 %v271, %v520
  %v537 = vadd.f32 %v272, %v521
  %v538 = vadd.f32 %v273, %v522
  %v539 = vadd.f32 %v274, %v523
  %v540 = vadd.f32 %v275, %v524
  %v541 = vadd.f32 %v276, %v525
  %s542 = scalar_lea.vmem %s0, 128
  %v543 = vld [vmem:[%s542] sm:$0xf]
  %v544 = vld [vmem:[%s542 + $0x4] sm:$0xf]
  %v545 = vld [vmem:[%s542 + $0x8] sm:$0xf]
  %v546 = vld [vmem:[%s542 + $0xc] sm:$0xf]
  %v547 = vld [vmem:[%s542 + $0x10] sm:$0xf]
  %v548 = vld [vmem:[%s542 + $0x14] sm:$0xf]
  %v549 = vld [vmem:[%s542 + $0x18] sm:$0xf]
  %v550 = vld [vmem:[%s542 + $0x1c] sm:$0xf]
  %v551 = vld [vmem:[%s542 + $0x20] sm:$0xf]
  %v552 = vld [vmem:[%s542 + $0x24] sm:$0xf]
  %v553 = vld [vmem:[%s542 + $0x28] sm:$0xf]
  %v554 = vld [vmem:[%s542 + $0x2c] sm:$0xf]
  %v555 = vld [vmem:[%s542 + $0x30] sm:$0xf]
  %v556 = vld [vmem:[%s542 + $0x34] sm:$0xf]
  %v557 = vld [vmem:[%s542 + $0x38] sm:$0xf]
  %v558 = vld [vmem:[%s542 + $0x3c] sm:$0xf]
  %s559 = scalar_lea.vmem %s1, 128
  %v560 = vld [vmem:[%s559] sm:$0xf]
  %v561 = vld [vmem:[%s559 + $0x4] sm:$0xf]
  %v562 = vld [vmem:[%s559 + $0x8] sm:$0xf]
  %v563 = vld [vmem:[%s559 + $0xc] sm:$0xf]
  %v564 = vld [vmem:[%s559 + $0x10] sm:$0xf]
  %v565 = vld [vmem:[%s559 + $0x14] sm:$0xf]
  %v566 = vld [vmem:[%s559 + $0x18] sm:$0xf]
  %v567 = vld [vmem:[%s559 + $0x1c] sm:$0xf]
  %v568 = vld [vmem:[%s559 + $0x20] sm:$0xf]
  %v569 = vld [vmem:[%s559 + $0x24] sm:$0xf]
  %v570 = vld [vmem:[%s559 + $0x28] sm:$0xf]
  %v571 = vld [vmem:[%s559 + $0x2c] sm:$0xf]
  %v572 = vld [vmem:[%s559 + $0x30] sm:$0xf]
  %v573 = vld [vmem:[%s559 + $0x34] sm:$0xf]
  %v574 = vld [vmem:[%s559 + $0x38] sm:$0xf]
  %v575 = vld [vmem:[%s559 + $0x3c] sm:$0xf]
  %s576 = scalar_lea.vmem %s2, 16
  %v577 = vld [vmem:[%s576] sm:$0xff]
  %v578 = vlaneseq
  %v579 = vshrl.u32 %v578, 7
  %v580 = vsub.s32 0, %v579
  %v581 = vrot.slane %v577, %v580
  %v598 = vunpack.c.l.b16 %v543
  %v599 = vunpack.c.l.b16 %v544
  %v600 = vunpack.c.l.b16 %v545
  %v601 = vunpack.c.l.b16 %v546
  %v602 = vunpack.c.l.b16 %v547
  %v603 = vunpack.c.l.b16 %v548
  %v604 = vunpack.c.l.b16 %v549
  %v605 = vunpack.c.l.b16 %v550
  %v606 = vunpack.c.l.b16 %v551
  %v607 = vunpack.c.l.b16 %v552
  %v608 = vunpack.c.l.b16 %v553
  %v609 = vunpack.c.l.b16 %v554
  %v610 = vunpack.c.l.b16 %v555
  %v611 = vunpack.c.l.b16 %v556
  %v612 = vunpack.c.l.b16 %v557
  %v613 = vunpack.c.l.b16 %v558
  %v614 = vpack.c.b16 %v599, %v598
  %v615 = vpack.c.b16 %v601, %v600
  %v616 = vpack.c.b16 %v603, %v602
  %v617 = vpack.c.b16 %v605, %v604
  %v618 = vpack.c.b16 %v607, %v606
  %v619 = vpack.c.b16 %v609, %v608
  %v620 = vpack.c.b16 %v611, %v610
  %v621 = vpack.c.b16 %v613, %v612
  %v646 = vunpack.c.l.b16 %v560
  %v647 = vunpack.c.l.b16 %v561
  %v648 = vunpack.c.l.b16 %v562
  %v649 = vunpack.c.l.b16 %v563
  %v650 = vunpack.c.l.b16 %v564
  %v651 = vunpack.c.l.b16 %v565
  %v652 = vunpack.c.l.b16 %v566
  %v653 = vunpack.c.l.b16 %v567
  %v654 = vunpack.c.l.b16 %v568
  %v655 = vunpack.c.l.b16 %v569
  %v656 = vunpack.c.l.b16 %v570
  %v657 = vunpack.c.l.b16 %v571
  %v658 = vunpack.c.l.b16 %v572
  %v659 = vunpack.c.l.b16 %v573
  %v660 = vunpack.c.l.b16 %v574
  %v661 = vunpack.c.l.b16 %v575
  %v662 = vpack.c.b16 %v647, %v646
  %v663 = vpack.c.b16 %v649, %v648
  %v664 = vpack.c.b16 %v651, %v650
  %v665 = vpack.c.b16 %v653, %v652
  %v666 = vpack.c.b16 %v655, %v654
  %v667 = vpack.c.b16 %v657, %v656
  %v668 = vpack.c.b16 %v659, %v658
  %v669 = vpack.c.b16 %v661, %v660
  %678 = vmatprep.subr.bf16.mxu0 0
  %679 = vmatpush1.bf16.msra.mxu0 %v662
  %680 = vmatprep.subr.bf16.mxu0 0
  %681 = vmatpush1.bf16.msra.mxu0 %v663
  %682 = vmatprep.subr.bf16.mxu0 0
  %683 = vmatpush1.bf16.msra.mxu0 %v664
  %684 = vmatprep.subr.bf16.mxu0 0
  %685 = vmatpush1.bf16.msra.mxu0 %v665
  %686 = vmatprep.subr.bf16.mxu0 0
  %687 = vmatpush1.bf16.msra.mxu0 %v666
  %688 = vmatprep.subr.bf16.mxu0 0
  %689 = vmatpush1.bf16.msra.mxu0 %v667
  %690 = vmatprep.subr.bf16.mxu0 0
  %691 = vmatpush1.bf16.msra.mxu0 %v668
  %692 = vmatprep.subr.bf16.mxu0 0
  %693 = vmatpush1.bf16.msra.mxu0 %v669
  %694 = vmatprep.subr.bf16.mxu0 0
  %695 = vmatpush1.bf16.msra.mxu0 0
  %696 = vmatprep.subr.bf16.mxu0 0
  %697 = vmatpush1.bf16.msra.mxu0 0
  %698 = vmatprep.subr.bf16.mxu0 0
  %699 = vmatpush1.bf16.msra.mxu0 0
  %700 = vmatprep.subr.bf16.mxu0 0
  %701 = vmatpush1.bf16.msra.mxu0 0
  %702 = vmatprep.subr.bf16.mxu0 0
  %703 = vmatpush1.bf16.msra.mxu0 0
  %704 = vmatprep.subr.bf16.mxu0 0
  %705 = vmatpush1.bf16.msra.mxu0 0
  %706 = vmatprep.subr.bf16.mxu0 0
  %707 = vmatpush1.bf16.msra.mxu0 0
  %708 = vmatprep.subr.bf16.mxu0 0
  %709 = vmatpush1.bf16.msra.mxu0 0
  %710 = vmatprep.mubr.bf16.mxu0 0
  %711 = vmatmul.mubr.bf16.gmra.mrb[0].mxu0 %v614
  %v712 = vpop.f32.mrb[0].mxu0
  %v713 = vadd.f32 %v581, %v712
  %v714 = vpop.f32.mrb[0].mxu0
  %v715 = vpop.f32.mrb[0].mxu0
  %v716 = vadd.f32 %v581, %v715
  %v717 = vpop.f32.mrb[0].mxu0
  %718 = vmatprep.mubr.bf16.mxu0 0
  %719 = vmatmul.mubr.bf16.gmra.mrb[0].mxu0 %v615
  %v720 = vpop.f32.mrb[0].mxu0
  %v721 = vadd.f32 %v581, %v720
  %v722 = vpop.f32.mrb[0].mxu0
  %v723 = vpop.f32.mrb[0].mxu0
  %v724 = vadd.f32 %v581, %v723
  %v725 = vpop.f32.mrb[0].mxu0
  %726 = vmatprep.mubr.bf16.mxu0 0
  %727 = vmatmul.mubr.bf16.gmra.mrb[0].mxu0 %v616
  %v728 = vpop.f32.mrb[0].mxu0
  %v729 = vadd.f32 %v581, %v728
  %v730 = vpop.f32.mrb[0].mxu0
  %v731 = vpop.f32.mrb[0].mxu0
  %v732 = vadd.f32 %v581, %v731
  %v733 = vpop.f32.mrb[0].mxu0
  %734 = vmatprep.mubr.bf16.mxu0 0
  %735 = vmatmul.mubr.bf16.gmra.mrb[0].mxu0 %v617
  %v736 = vpop.f32.mrb[0].mxu0
  %v737 = vadd.f32 %v581, %v736
  %v738 = vpop.f32.mrb[0].mxu0
  %v739 = vpop.f32.mrb[0].mxu0
  %v740 = vadd.f32 %v581, %v739
  %v741 = vpop.f32.mrb[0].mxu0
  %742 = vmatprep.mubr.bf16.mxu0 0
  %743 = vmatmul.mubr.bf16.gmra.mrb[0].mxu0 %v618
  %v744 = vpop.f32.mrb[0].mxu0
  %v745 = vadd.f32 %v581, %v744
  %v746 = vpop.f32.mrb[0].mxu0
  %v747 = vpop.f32.mrb[0].mxu0
  %v748 = vadd.f32 %v581, %v747
  %v749 = vpop.f32.mrb[0].mxu0
  %750 = vmatprep.mubr.bf16.mxu0 0
  %751 = vmatmul.mubr.bf16.gmra.mrb[0].mxu0 %v619
  %v752 = vpop.f32.mrb[0].mxu0
  %v753 = vadd.f32 %v581, %v752
  %v754 = vpop.f32.mrb[0].mxu0
  %v755 = vpop.f32.mrb[0].mxu0
  %v756 = vadd.f32 %v581, %v755
  %v757 = vpop.f32.mrb[0].mxu0
  %758 = vmatprep.mubr.bf16.mxu0 0
  %759 = vmatmul.mubr.bf16.gmra.mrb[0].mxu0 %v620
  %v760 = vpop.f32.mrb[0].mxu0
  %v761 = vadd.f32 %v581, %v760
  %v762 = vpop.f32.mrb[0].mxu0
  %v763 = vpop.f32.mrb[0].mxu0
  %v764 = vadd.f32 %v581, %v763
  %v765 = vpop.f32.mrb[0].mxu0
  %766 = vmatprep.mubr.bf16.mxu0 0
  %767 = vmatmul.mubr.bf16.gmra.mrb[0].mxu0 %v621
  %v768 = vpop.f32.mrb[0].mxu0
  %v769 = vadd.f32 %v581, %v768
  %v770 = vpop.f32.mrb[0].mxu0
  %v771 = vpop.f32.mrb[0].mxu0
  %v772 = vadd.f32 %v581, %v771
  %v773 = vpop.f32.mrb[0].mxu0
  %774 = vdwg.mxu0
  %v775 = vmax.f32 %v713, 0.0
  %v776 = vmax.f32 %v716, 0.0
  %v777 = vmax.f32 %v721, 0.0
  %v778 = vmax.f32 %v724, 0.0
  %v779 = vmax.f32 %v729, 0.0
  %v780 = vmax.f32 %v732, 0.0
  %v781 = vmax.f32 %v737, 0.0
  %v782 = vmax.f32 %v740, 0.0
  %v783 = vmax.f32 %v745, 0.0
  %v784 = vmax.f32 %v748, 0.0
  %v785 = vmax.f32 %v753, 0.0
  %v786 = vmax.f32 %v756, 0.0
  %v787 = vmax.f32 %v761, 0.0
  %v788 = vmax.f32 %v764, 0.0
  %v789 = vmax.f32 %v769, 0.0
  %v790 = vmax.f32 %v772, 0.0
  %v791 = vadd.f32 %v526, %v775
  %v792 = vadd.f32 %v527, %v776
  %v793 = vadd.f32 %v528, %v777
  %v794 = vadd.f32 %v529, %v778
  %v795 = vadd.f32 %v530, %v779
  %v796 = vadd.f32 %v531, %v780
  %v797 = vadd.f32 %v532, %v781
  %v798 = vadd.f32 %v533, %v782
  %v799 = vadd.f32 %v534, %v783
  %v800 = vadd.f32 %v535, %v784
  %v801 = vadd.f32 %v536, %v785
  %v802 = vadd.f32 %v537, %v786
  %v803 = vadd.f32 %v538, %v787
  %v804 = vadd.f32 %v539, %v788
  %v805 = vadd.f32 %v540, %v789
  %v806 = vadd.f32 %v541, %v790
  %s807 = scalar_lea.vmem %s0, 192
  %v808 = vld [vmem:[%s807] sm:$0xf]
  %v809 = vld [vmem:[%s807 + $0x4] sm:$0xf]
  %v810 = vld [vmem:[%s807 + $0x8] sm:$0xf]
  %v811 = vld [vmem:[%s807 + $0xc] sm:$0xf]
  %v812 = vld [vmem:[%s807 + $0x10] sm:$0xf]
  %v813 = vld [vmem:[%s807 + $0x14] sm:$0xf]
  %v814 = vld [vmem:[%s807 + $0x18] sm:$0xf]
  %v815 = vld [vmem:[%s807 + $0x1c] sm:$0xf]
  %v816 = vld [vmem:[%s807 + $0x20] sm:$0xf]
  %v817 = vld [vmem:[%s807 + $0x24] sm:$0xf]
  %v818 = vld [vmem:[%s807 + $0x28] sm:$0xf]
  %v819 = vld [vmem:[%s807 + $0x2c] sm:$0xf]
  %v820 = vld [vmem:[%s807 + $0x30] sm:$0xf]
  %v821 = vld [vmem:[%s807 + $0x34] sm:$0xf]
  %v822 = vld [vmem:[%s807 + $0x38] sm:$0xf]
  %v823 = vld [vmem:[%s807 + $0x3c] sm:$0xf]
  %s824 = scalar_lea.vmem %s1, 192
  %v825 = vld [vmem:[%s824] sm:$0xf]
  %v826 = vld [vmem:[%s824 + $0x4] sm:$0xf]
  %v827 = vld [vmem:[%s824 + $0x8] sm:$0xf]
  %v828 = vld [vmem:[%s824 + $0xc] sm:$0xf]
  %v829 = vld [vmem:[%s824 + $0x10] sm:$0xf]
  %v830 = vld [vmem:[%s824 + $0x14] sm:$0xf]
  %v831 = vld [vmem:[%s824 + $0x18] sm:$0xf]
  %v832 = vld [vmem:[%s824 + $0x1c] sm:$0xf]
  %v833 = vld [vmem:[%s824 + $0x20] sm:$0xf]
  %v834 = vld [vmem:[%s824 + $0x24] sm:$0xf]
  %v835 = vld [vmem:[%s824 + $0x28] sm:$0xf]
  %v836 = vld [vmem:[%s824 + $0x2c] sm:$0xf]
  %v837 = vld [vmem:[%s824 + $0x30] sm:$0xf]
  %v838 = vld [vmem:[%s824 + $0x34] sm:$0xf]
  %v839 = vld [vmem:[%s824 + $0x38] sm:$0xf]
  %v840 = vld [vmem:[%s824 + $0x3c] sm:$0xf]
  %s841 = scalar_lea.vmem %s2, 24
  %v842 = vld [vmem:[%s841] sm:$0xff]
  %v843 = vlaneseq
  %v844 = vshrl.u32 %v843, 7
  %v845 = vsub.s32 0, %v844
  %v846 = vrot.slane %v842, %v845
  %v863 = vunpack.c.l.b16 %v808
  %v864 = vunpack.c.l.b16 %v809
  %v865 = vunpack.c.l.b16 %v810
  %v866 = vunpack.c.l.b16 %v811
  %v867 = vunpack.c.l.b16 %v812
  %v868 = vunpack.c.l.b16 %v813
  %v869 = vunpack.c.l.b16 %v814
  %v870 = vunpack.c.l.b16 %v815
  %v871 = vunpack.c.l.b16 %v816
  %v872 = vunpack.c.l.b16 %v817
  %v873 = vunpack.c.l.b16 %v818
  %v874 = vunpack.c.l.b16 %v819
  %v875 = vunpack.c.l.b16 %v820
  %v876 = vunpack.c.l.b16 %v821
  %v877 = vunpack.c.l.b16 %v822
  %v878 = vunpack.c.l.b16 %v823
  %v879 = vpack.c.b16 %v864, %v863
  %v880 = vpack.c.b16 %v866, %v865
  %v881 = vpack.c.b16 %v868, %v867
  %v882 = vpack.c.b16 %v870, %v869
  %v883 = vpack.c.b16 %v872, %v871
  %v884 = vpack.c.b16 %v874, %v873
  %v885 = vpack.c.b16 %v876, %v875
  %v886 = vpack.c.b16 %v878, %v877
  %v911 = vunpack.c.l.b16 %v825
  %v912 = vunpack.c.l.b16 %v826
  %v913 = vunpack.c.l.b16 %v827
  %v914 = vunpack.c.l.b16 %v828
  %v915 = vunpack.c.l.b16 %v829
  %v916 = vunpack.c.l.b16 %v830
  %v917 = vunpack.c.l.b16 %v831
  %v918 = vunpack.c.l.b16 %v832
  %v919 = vunpack.c.l.b16 %v833
  %v920 = vunpack.c.l.b16 %v834
  %v921 = vunpack.c.l.b16 %v835
  %v922 = vunpack.c.l.b16 %v836
  %v923 = vunpack.c.l.b16 %v837
  %v924 = vunpack.c.l.b16 %v838
  %v925 = vunpack.c.l.b16 %v839
  %v926 = vunpack.c.l.b16 %v840
  %v927 = vpack.c.b16 %v912, %v911
  %v928 = vpack.c.b16 %v914, %v913
  %v929 = vpack.c.b16 %v916, %v915
  %v930 = vpack.c.b16 %v918, %v917
  %v931 = vpack.c.b16 %v920, %v919
  %v932 = vpack.c.b16 %v922, %v921
  %v933 = vpack.c.b16 %v924, %v923
  %v934 = vpack.c.b16 %v926, %v925
  %943 = vmatprep.subr.bf16.mxu0 0
  %944 = vmatpush1.bf16.msra.mxu0 %v927
  %945 = vmatprep.subr.bf16.mxu0 0
  %946 = vmatpush1.bf16.msra.mxu0 %v928
  %947 = vmatprep.subr.bf16.mxu0 0
  %948 = vmatpush1.bf16.msra.mxu0 %v929
  %949 = vmatprep.subr.bf16.mxu0 0
  %950 = vmatpush1.bf16.msra.mxu0 %v930
  %951 = vmatprep.subr.bf16.mxu0 0
  %952 = vmatpush1.bf16.msra.mxu0 %v931
  %953 = vmatprep.subr.bf16.mxu0 0
  %954 = vmatpush1.bf16.msra.mxu0 %v932
  %955 = vmatprep.subr.bf16.mxu0 0
  %956 = vmatpush1.bf16.msra.mxu0 %v933
  %957 = vmatprep.subr.bf16.mxu0 0
  %958 = vmatpush1.bf16.msra.mxu0 %v934
  %959 = vmatprep.subr.bf16.mxu0 0
  %960 = vmatpush1.bf16.msra.mxu0 0
  %961 = vmatprep.subr.bf16.mxu0 0
  %962 = vmatpush1.bf16.msra.mxu0 0
  %963 = vmatprep.subr.bf16.mxu0 0
  %964 = vmatpush1.bf16.msra.mxu0 0
  %965 = vmatprep.subr.bf16.mxu0 0
  %966 = vmatpush1.bf16.msra.mxu0 0
  %967 = vmatprep.subr.bf16.mxu0 0
  %968 = vmatpush1.bf16.msra.mxu0 0
  %969 = vmatprep.subr.bf16.mxu0 0
  %970 = vmatpush1.bf16.msra.mxu0 0
  %971 = vmatprep.subr.bf16.mxu0 0
  %972 = vmatpush1.bf16.msra.mxu0 0
  %973 = vmatprep.subr.bf16.mxu0 0
  %974 = vmatpush1.bf16.msra.mxu0 0
  %975 = vmatprep.mubr.bf16.mxu0 0
  %976 = vmatmul.mubr.bf16.gmra.mrb[0].mxu0 %v879
  %v977 = vpop.f32.mrb[0].mxu0
  %v978 = vadd.f32 %v846, %v977
  %v979 = vpop.f32.mrb[0].mxu0
  %v980 = vpop.f32.mrb[0].mxu0
  %v981 = vadd.f32 %v846, %v980
  %v982 = vpop.f32.mrb[0].mxu0
  %983 = vmatprep.mubr.bf16.mxu0 0
  %984 = vmatmul.mubr.bf16.gmra.mrb[0].mxu0 %v880
  %v985 = vpop.f32.mrb[0].mxu0
  %v986 = vadd.f32 %v846, %v985
  %v987 = vpop.f32.mrb[0].mxu0
  %v988 = vpop.f32.mrb[0].mxu0
  %v989 = vadd.f32 %v846, %v988
  %v990 = vpop.f32.mrb[0].mxu0
  %991 = vmatprep.mubr.bf16.mxu0 0
  %992 = vmatmul.mubr.bf16.gmra.mrb[0].mxu0 %v881
  %v993 = vpop.f32.mrb[0].mxu0
  %v994 = vadd.f32 %v846, %v993
  %v995 = vpop.f32.mrb[0].mxu0
  %v996 = vpop.f32.mrb[0].mxu0
  %v997 = vadd.f32 %v846, %v996
  %v998 = vpop.f32.mrb[0].mxu0
  %999 = vmatprep.mubr.bf16.mxu0 0
  %1000 = vmatmul.mubr.bf16.gmra.mrb[0].mxu0 %v882
  %v1001 = vpop.f32.mrb[0].mxu0
  %v1002 = vadd.f32 %v846, %v1001
  %v1003 = vpop.f32.mrb[0].mxu0
  %v1004 = vpop.f32.mrb[0].mxu0
  %v1005 = vadd.f32 %v846, %v1004
  %v1006 = vpop.f32.mrb[0].mxu0
  %1007 = vmatprep.mubr.bf16.mxu0 0
  %1008 = vmatmul.mubr.bf16.gmra.mrb[0].mxu0 %v883
  %v1009 = vpop.f32.mrb[0].mxu0
  %v1010 = vadd.f32 %v846, %v1009
  %v1011 = vpop.f32.mrb[0].mxu0
  %v1012 = vpop.f32.mrb[0].mxu0
  %v1013 = vadd.f32 %v846, %v1012
  %v1014 = vpop.f32.mrb[0].mxu0
  %1015 = vmatprep.mubr.bf16.mxu0 0
  %1016 = vmatmul.mubr.bf16.gmra.mrb[0].mxu0 %v884
  %v1017 = vpop.f32.mrb[0].mxu0
  %v1018 = vadd.f32 %v846, %v1017
  %v1019 = vpop.f32.mrb[0].mxu0
  %v1020 = vpop.f32.mrb[0].mxu0
  %v1021 = vadd.f32 %v846, %v1020
  %v1022 = vpop.f32.mrb[0].mxu0
  %1023 = vmatprep.mubr.bf16.mxu0 0
  %1024 = vmatmul.mubr.bf16.gmra.mrb[0].mxu0 %v885
  %v1025 = vpop.f32.mrb[0].mxu0
  %v1026 = vadd.f32 %v846, %v1025
  %v1027 = vpop.f32.mrb[0].mxu0
  %v1028 = vpop.f32.mrb[0].mxu0
  %v1029 = vadd.f32 %v846, %v1028
  %v1030 = vpop.f32.mrb[0].mxu0
  %1031 = vmatprep.mubr.bf16.mxu0 0
  %1032 = vmatmul.mubr.bf16.gmra.mrb[0].mxu0 %v886
  %v1033 = vpop.f32.mrb[0].mxu0
  %v1034 = vadd.f32 %v846, %v1033
  %v1035 = vpop.f32.mrb[0].mxu0
  %v1036 = vpop.f32.mrb[0].mxu0
  %v1037 = vadd.f32 %v846, %v1036
  %v1038 = vpop.f32.mrb[0].mxu0
  %1039 = vdwg.mxu0
  %v1040 = vmax.f32 %v978, 0.0
  %v1041 = vmax.f32 %v981, 0.0
  %v1042 = vmax.f32 %v986, 0.0
  %v1043 = vmax.f32 %v989, 0.0
  %v1044 = vmax.f32 %v994, 0.0
  %v1045 = vmax.f32 %v997, 0.0
  %v1046 = vmax.f32 %v1002, 0.0
  %v1047 = vmax.f32 %v1005, 0.0
  %v1048 = vmax.f32 %v1010, 0.0
  %v1049 = vmax.f32 %v1013, 0.0
  %v1050 = vmax.f32 %v1018, 0.0
  %v1051 = vmax.f32 %v1021, 0.0
  %v1052 = vmax.f32 %v1026, 0.0
  %v1053 = vmax.f32 %v1029, 0.0
  %v1054 = vmax.f32 %v1034, 0.0
  %v1055 = vmax.f32 %v1037, 0.0
  %v1056 = vadd.f32 %v791, %v1040
  %v1057 = vadd.f32 %v792, %v1041
  %v1058 = vadd.f32 %v793, %v1042
  %v1059 = vadd.f32 %v794, %v1043
  %v1060 = vadd.f32 %v795, %v1044
  %v1061 = vadd.f32 %v796, %v1045
  %v1062 = vadd.f32 %v797, %v1046
  %v1063 = vadd.f32 %v798, %v1047
  %v1064 = vadd.f32 %v799, %v1048
  %v1065 = vadd.f32 %v800, %v1049
  %v1066 = vadd.f32 %v801, %v1050
  %v1067 = vadd.f32 %v802, %v1051
  %v1068 = vadd.f32 %v803, %v1052
  %v1069 = vadd.f32 %v804, %v1053
  %v1070 = vadd.f32 %v805, %v1054
  %v1071 = vadd.f32 %v806, %v1055
  %s1072 = scalar_lea.vmem %s0, 256
  %v1073 = vld [vmem:[%s1072] sm:$0xf]
  %v1074 = vld [vmem:[%s1072 + $0x4] sm:$0xf]
  %v1075 = vld [vmem:[%s1072 + $0x8] sm:$0xf]
  %v1076 = vld [vmem:[%s1072 + $0xc] sm:$0xf]
  %v1077 = vld [vmem:[%s1072 + $0x10] sm:$0xf]
  %v1078 = vld [vmem:[%s1072 + $0x14] sm:$0xf]
  %v1079 = vld [vmem:[%s1072 + $0x18] sm:$0xf]
  %v1080 = vld [vmem:[%s1072 + $0x1c] sm:$0xf]
  %v1081 = vld [vmem:[%s1072 + $0x20] sm:$0xf]
  %v1082 = vld [vmem:[%s1072 + $0x24] sm:$0xf]
  %v1083 = vld [vmem:[%s1072 + $0x28] sm:$0xf]
  %v1084 = vld [vmem:[%s1072 + $0x2c] sm:$0xf]
  %v1085 = vld [vmem:[%s1072 + $0x30] sm:$0xf]
  %v1086 = vld [vmem:[%s1072 + $0x34] sm:$0xf]
  %v1087 = vld [vmem:[%s1072 + $0x38] sm:$0xf]
  %v1088 = vld [vmem:[%s1072 + $0x3c] sm:$0xf]
  %s1089 = scalar_lea.vmem %s1, 256
  %v1090 = vld [vmem:[%s1089] sm:$0xf]
  %v1091 = vld [vmem:[%s1089 + $0x4] sm:$0xf]
  %v1092 = vld [vmem:[%s1089 + $0x8] sm:$0xf]
  %v1093 = vld [vmem:[%s1089 + $0xc] sm:$0xf]
  %v1094 = vld [vmem:[%s1089 + $0x10] sm:$0xf]
  %v1095 = vld [vmem:[%s1089 + $0x14] sm:$0xf]
  %v1096 = vld [vmem:[%s1089 + $0x18] sm:$0xf]
  %v1097 = vld [vmem:[%s1089 + $0x1c] sm:$0xf]
  %v1098 = vld [vmem:[%s1089 + $0x20] sm:$0xf]
  %v1099 = vld [vmem:[%s1089 + $0x24] sm:$0xf]
  %v1100 = vld [vmem:[%s1089 + $0x28] sm:$0xf]
  %v1101 = vld [vmem:[%s1089 + $0x2c] sm:$0xf]
  %v1102 = vld [vmem:[%s1089 + $0x30] sm:$0xf]
  %v1103 = vld [vmem:[%s1089 + $0x34] sm:$0xf]
  %v1104 = vld [vmem:[%s1089 + $0x38] sm:$0xf]
  %v1105 = vld [vmem:[%s1089 + $0x3c] sm:$0xf]
  %s1106 = scalar_lea.vmem %s2, 32
  %v1107 = vld [vmem:[%s1106] sm:$0xff]
  %v1108 = vlaneseq
  %v1109 = vshrl.u32 %v1108, 7
  %v1110 = vsub.s32 0, %v1109
  %v1111 = vrot.slane %v1107, %v1110
  %v1128 = vunpack.c.l.b16 %v1073
  %v1129 = vunpack.c.l.b16 %v1074
  %v1130 = vunpack.c.l.b16 %v1075
  %v1131 = vunpack.c.l.b16 %v1076
  %v1132 = vunpack.c.l.b16 %v1077
  %v1133 = vunpack.c.l.b16 %v1078
  %v1134 = vunpack.c.l.b16 %v1079
  %v1135 = vunpack.c.l.b16 %v1080
  %v1136 = vunpack.c.l.b16 %v1081
  %v1137 = vunpack.c.l.b16 %v1082
  %v1138 = vunpack.c.l.b16 %v1083
  %v1139 = vunpack.c.l.b16 %v1084
  %v1140 = vunpack.c.l.b16 %v1085
  %v1141 = vunpack.c.l.b16 %v1086
  %v1142 = vunpack.c.l.b16 %v1087
  %v1143 = vunpack.c.l.b16 %v1088
  %v1144 = vpack.c.b16 %v1129, %v1128
  %v1145 = vpack.c.b16 %v1131, %v1130
  %v1146 = vpack.c.b16 %v1133, %v1132
  %v1147 = vpack.c.b16 %v1135, %v1134
  %v1148 = vpack.c.b16 %v1137, %v1136
  %v1149 = vpack.c.b16 %v1139, %v1138
  %v1150 = vpack.c.b16 %v1141, %v1140
  %v1151 = vpack.c.b16 %v1143, %v1142
  %v1176 = vunpack.c.l.b16 %v1090
  %v1177 = vunpack.c.l.b16 %v1091
  %v1178 = vunpack.c.l.b16 %v1092
  %v1179 = vunpack.c.l.b16 %v1093
  %v1180 = vunpack.c.l.b16 %v1094
  %v1181 = vunpack.c.l.b16 %v1095
  %v1182 = vunpack.c.l.b16 %v1096
  %v1183 = vunpack.c.l.b16 %v1097
  %v1184 = vunpack.c.l.b16 %v1098
  %v1185 = vunpack.c.l.b16 %v1099
  %v1186 = vunpack.c.l.b16 %v1100
  %v1187 = vunpack.c.l.b16 %v1101
  %v1188 = vunpack.c.l.b16 %v1102
  %v1189 = vunpack.c.l.b16 %v1103
  %v1190 = vunpack.c.l.b16 %v1104
  %v1191 = vunpack.c.l.b16 %v1105
  %v1192 = vpack.c.b16 %v1177, %v1176
  %v1193 = vpack.c.b16 %v1179, %v1178
  %v1194 = vpack.c.b16 %v1181, %v1180
  %v1195 = vpack.c.b16 %v1183, %v1182
  %v1196 = vpack.c.b16 %v1185, %v1184
  %v1197 = vpack.c.b16 %v1187, %v1186
  %v1198 = vpack.c.b16 %v1189, %v1188
  %v1199 = vpack.c.b16 %v1191, %v1190
  %1208 = vmatprep.subr.bf16.mxu0 0
  %1209 = vmatpush1.bf16.msra.mxu0 %v1192
  %1210 = vmatprep.subr.bf16.mxu0 0
  %1211 = vmatpush1.bf16.msra.mxu0 %v1193
  %1212 = vmatprep.subr.bf16.mxu0 0
  %1213 = vmatpush1.bf16.msra.mxu0 %v1194
  %1214 = vmatprep.subr.bf16.mxu0 0
  %1215 = vmatpush1.bf16.msra.mxu0 %v1195
  %1216 = vmatprep.subr.bf16.mxu0 0
  %1217 = vmatpush1.bf16.msra.mxu0 %v1196
  %1218 = vmatprep.subr.bf16.mxu0 0
  %1219 = vmatpush1.bf16.msra.mxu0 %v1197
  %1220 = vmatprep.subr.bf16.mxu0 0
  %1221 = vmatpush1.bf16.msra.mxu0 %v1198
  %1222 = vmatprep.subr.bf16.mxu0 0
  %1223 = vmatpush1.bf16.msra.mxu0 %v1199
  %1224 = vmatprep.subr.bf16.mxu0 0
  %1225 = vmatpush1.bf16.msra.mxu0 0
  %1226 = vmatprep.subr.bf16.mxu0 0
  %1227 = vmatpush1.bf16.msra.mxu0 0
  %1228 = vmatprep.subr.bf16.mxu0 0
  %1229 = vmatpush1.bf16.msra.mxu0 0
  %1230 = vmatprep.subr.bf16.mxu0 0
  %1231 = vmatpush1.bf16.msra.mxu0 0
  %1232 = vmatprep.subr.bf16.mxu0 0
  %1233 = vmatpush1.bf16.msra.mxu0 0
  %1234 = vmatprep.subr.bf16.mxu0 0
  %1235 = vmatpush1.bf16.msra.mxu0 0
  %1236 = vmatprep.subr.bf16.mxu0 0
  %1237 = vmatpush1.bf16.msra.mxu0 0
  %1238 = vmatprep.subr.bf16.mxu0 0
  %1239 = vmatpush1.bf16.msra.mxu0 0
  %1240 = vmatprep.mubr.bf16.mxu0 0
  %1241 = vmatmul.mubr.bf16.gmra.mrb[0].mxu0 %v1144
  %v1242 = vpop.f32.mrb[0].mxu0
  %v1243 = vadd.f32 %v1111, %v1242
  %v1244 = vpop.f32.mrb[0].mxu0
  %v1245 = vpop.f32.mrb[0].mxu0
  %v1246 = vadd.f32 %v1111, %v1245
  %v1247 = vpop.f32.mrb[0].mxu0
  %1248 = vmatprep.mubr.bf16.mxu0 0
  %1249 = vmatmul.mubr.bf16.gmra.mrb[0].mxu0 %v1145
  %v1250 = vpop.f32.mrb[0].mxu0
  %v1251 = vadd.f32 %v1111, %v1250
  %v1252 = vpop.f32.mrb[0].mxu0
  %v1253 = vpop.f32.mrb[0].mxu0
  %v1254 = vadd.f32 %v1111, %v1253
  %v1255 = vpop.f32.mrb[0].mxu0
  %1256 = vmatprep.mubr.bf16.mxu0 0
  %1257 = vmatmul.mubr.bf16.gmra.mrb[0].mxu0 %v1146
  %v1258 = vpop.f32.mrb[0].mxu0
  %v1259 = vadd.f32 %v1111, %v1258
  %v1260 = vpop.f32.mrb[0].mxu0
  %v1261 = vpop.f32.mrb[0].mxu0
  %v1262 = vadd.f32 %v1111, %v1261
  %v1263 = vpop.f32.mrb[0].mxu0
  %1264 = vmatprep.mubr.bf16.mxu0 0
  %1265 = vmatmul.mubr.bf16.gmra.mrb[0].mxu0 %v1147
  %v1266 = vpop.f32.mrb[0].mxu0
  %v1267 = vadd.f32 %v1111, %v1266
  %v1268 = vpop.f32.mrb[0].mxu0
  %v1269 = vpop.f32.mrb[0].mxu0
  %v1270 = vadd.f32 %v1111, %v1269
  %v1271 = vpop.f32.mrb[0].mxu0
  %1272 = vmatprep.mubr.bf16.mxu0 0
  %1273 = vmatmul.mubr.bf16.gmra.mrb[0].mxu0 %v1148
  %v1274 = vpop.f32.mrb[0].mxu0
  %v1275 = vadd.f32 %v1111, %v1274
  %v1276 = vpop.f32.mrb[0].mxu0
  %v1277 = vpop.f32.mrb[0].mxu0
  %v1278 = vadd.f32 %v1111, %v1277
  %v1279 = vpop.f32.mrb[0].mxu0
  %1280 = vmatprep.mubr.bf16.mxu0 0
  %1281 = vmatmul.mubr.bf16.gmra.mrb[0].mxu0 %v1149
  %v1282 = vpop.f32.mrb[0].mxu0
  %v1283 = vadd.f32 %v1111, %v1282
  %v1284 = vpop.f32.mrb[0].mxu0
  %v1285 = vpop.f32.mrb[0].mxu0
  %v1286 = vadd.f32 %v1111, %v1285
  %v1287 = vpop.f32.mrb[0].mxu0
  %1288 = vmatprep.mubr.bf16.mxu0 0
  %1289 = vmatmul.mubr.bf16.gmra.mrb[0].mxu0 %v1150
  %v1290 = vpop.f32.mrb[0].mxu0
  %v1291 = vadd.f32 %v1111, %v1290
  %v1292 = vpop.f32.mrb[0].mxu0
  %v1293 = vpop.f32.mrb[0].mxu0
  %v1294 = vadd.f32 %v1111, %v1293
  %v1295 = vpop.f32.mrb[0].mxu0
  %1296 = vmatprep.mubr.bf16.mxu0 0
  %1297 = vmatmul.mubr.bf16.gmra.mrb[0].mxu0 %v1151
  %v1298 = vpop.f32.mrb[0].mxu0
  %v1299 = vadd.f32 %v1111, %v1298
  %v1300 = vpop.f32.mrb[0].mxu0
  %v1301 = vpop.f32.mrb[0].mxu0
  %v1302 = vadd.f32 %v1111, %v1301
  %v1303 = vpop.f32.mrb[0].mxu0
  %1304 = vdwg.mxu0
  %v1305 = vmax.f32 %v1243, 0.0
  %v1306 = vmax.f32 %v1246, 0.0
  %v1307 = vmax.f32 %v1251, 0.0
  %v1308 = vmax.f32 %v1254, 0.0
  %v1309 = vmax.f32 %v1259, 0.0
  %v1310 = vmax.f32 %v1262, 0.0
  %v1311 = vmax.f32 %v1267, 0.0
  %v1312 = vmax.f32 %v1270, 0.0
  %v1313 = vmax.f32 %v1275, 0.0
  %v1314 = vmax.f32 %v1278, 0.0
  %v1315 = vmax.f32 %v1283, 0.0
  %v1316 = vmax.f32 %v1286, 0.0
  %v1317 = vmax.f32 %v1291, 0.0
  %v1318 = vmax.f32 %v1294, 0.0
  %v1319 = vmax.f32 %v1299, 0.0
  %v1320 = vmax.f32 %v1302, 0.0
  %v1321 = vadd.f32 %v1056, %v1305
  %v1322 = vadd.f32 %v1057, %v1306
  %v1323 = vadd.f32 %v1058, %v1307
  %v1324 = vadd.f32 %v1059, %v1308
  %v1325 = vadd.f32 %v1060, %v1309
  %v1326 = vadd.f32 %v1061, %v1310
  %v1327 = vadd.f32 %v1062, %v1311
  %v1328 = vadd.f32 %v1063, %v1312
  %v1329 = vadd.f32 %v1064, %v1313
  %v1330 = vadd.f32 %v1065, %v1314
  %v1331 = vadd.f32 %v1066, %v1315
  %v1332 = vadd.f32 %v1067, %v1316
  %v1333 = vadd.f32 %v1068, %v1317
  %v1334 = vadd.f32 %v1069, %v1318
  %v1335 = vadd.f32 %v1070, %v1319
  %v1336 = vadd.f32 %v1071, %v1320
  %s1337 = scalar_lea.vmem %s0, 320
  %v1338 = vld [vmem:[%s1337] sm:$0xf]
  %v1339 = vld [vmem:[%s1337 + $0x4] sm:$0xf]
  %v1340 = vld [vmem:[%s1337 + $0x8] sm:$0xf]
  %v1341 = vld [vmem:[%s1337 + $0xc] sm:$0xf]
  %v1342 = vld [vmem:[%s1337 + $0x10] sm:$0xf]
  %v1343 = vld [vmem:[%s1337 + $0x14] sm:$0xf]
  %v1344 = vld [vmem:[%s1337 + $0x18] sm:$0xf]
  %v1345 = vld [vmem:[%s1337 + $0x1c] sm:$0xf]
  %v1346 = vld [vmem:[%s1337 + $0x20] sm:$0xf]
  %v1347 = vld [vmem:[%s1337 + $0x24] sm:$0xf]
  %v1348 = vld [vmem:[%s1337 + $0x28] sm:$0xf]
  %v1349 = vld [vmem:[%s1337 + $0x2c] sm:$0xf]
  %v1350 = vld [vmem:[%s1337 + $0x30] sm:$0xf]
  %v1351 = vld [vmem:[%s1337 + $0x34] sm:$0xf]
  %v1352 = vld [vmem:[%s1337 + $0x38] sm:$0xf]
  %v1353 = vld [vmem:[%s1337 + $0x3c] sm:$0xf]
  %s1354 = scalar_lea.vmem %s1, 320
  %v1355 = vld [vmem:[%s1354] sm:$0xf]
  %v1356 = vld [vmem:[%s1354 + $0x4] sm:$0xf]
  %v1357 = vld [vmem:[%s1354 + $0x8] sm:$0xf]
  %v1358 = vld [vmem:[%s1354 + $0xc] sm:$0xf]
  %v1359 = vld [vmem:[%s1354 + $0x10] sm:$0xf]
  %v1360 = vld [vmem:[%s1354 + $0x14] sm:$0xf]
  %v1361 = vld [vmem:[%s1354 + $0x18] sm:$0xf]
  %v1362 = vld [vmem:[%s1354 + $0x1c] sm:$0xf]
  %v1363 = vld [vmem:[%s1354 + $0x20] sm:$0xf]
  %v1364 = vld [vmem:[%s1354 + $0x24] sm:$0xf]
  %v1365 = vld [vmem:[%s1354 + $0x28] sm:$0xf]
  %v1366 = vld [vmem:[%s1354 + $0x2c] sm:$0xf]
  %v1367 = vld [vmem:[%s1354 + $0x30] sm:$0xf]
  %v1368 = vld [vmem:[%s1354 + $0x34] sm:$0xf]
  %v1369 = vld [vmem:[%s1354 + $0x38] sm:$0xf]
  %v1370 = vld [vmem:[%s1354 + $0x3c] sm:$0xf]
  %s1371 = scalar_lea.vmem %s2, 40
  %v1372 = vld [vmem:[%s1371] sm:$0xff]
  %v1373 = vlaneseq
  %v1374 = vshrl.u32 %v1373, 7
  %v1375 = vsub.s32 0, %v1374
  %v1376 = vrot.slane %v1372, %v1375
  %v1393 = vunpack.c.l.b16 %v1338
  %v1394 = vunpack.c.l.b16 %v1339
  %v1395 = vunpack.c.l.b16 %v1340
  %v1396 = vunpack.c.l.b16 %v1341
  %v1397 = vunpack.c.l.b16 %v1342
  %v1398 = vunpack.c.l.b16 %v1343
  %v1399 = vunpack.c.l.b16 %v1344
  %v1400 = vunpack.c.l.b16 %v1345
  %v1401 = vunpack.c.l.b16 %v1346
  %v1402 = vunpack.c.l.b16 %v1347
  %v1403 = vunpack.c.l.b16 %v1348
  %v1404 = vunpack.c.l.b16 %v1349
  %v1405 = vunpack.c.l.b16 %v1350
  %v1406 = vunpack.c.l.b16 %v1351
  %v1407 = vunpack.c.l.b16 %v1352
  %v1408 = vunpack.c.l.b16 %v1353
  %v1409 = vpack.c.b16 %v1394, %v1393
  %v1410 = vpack.c.b16 %v1396, %v1395
  %v1411 = vpack.c.b16 %v1398, %v1397
  %v1412 = vpack.c.b16 %v1400, %v1399
  %v1413 = vpack.c.b16 %v1402, %v1401
  %v1414 = vpack.c.b16 %v1404, %v1403
  %v1415 = vpack.c.b16 %v1406, %v1405
  %v1416 = vpack.c.b16 %v1408, %v1407
  %v1441 = vunpack.c.l.b16 %v1355
  %v1442 = vunpack.c.l.b16 %v1356
  %v1443 = vunpack.c.l.b16 %v1357
  %v1444 = vunpack.c.l.b16 %v1358
  %v1445 = vunpack.c.l.b16 %v1359
  %v1446 = vunpack.c.l.b16 %v1360
  %v1447 = vunpack.c.l.b16 %v1361
  %v1448 = vunpack.c.l.b16 %v1362
  %v1449 = vunpack.c.l.b16 %v1363
  %v1450 = vunpack.c.l.b16 %v1364
  %v1451 = vunpack.c.l.b16 %v1365
  %v1452 = vunpack.c.l.b16 %v1366
  %v1453 = vunpack.c.l.b16 %v1367
  %v1454 = vunpack.c.l.b16 %v1368
  %v1455 = vunpack.c.l.b16 %v1369
  %v1456 = vunpack.c.l.b16 %v1370
  %v1457 = vpack.c.b16 %v1442, %v1441
  %v1458 = vpack.c.b16 %v1444, %v1443
  %v1459 = vpack.c.b16 %v1446, %v1445
  %v1460 = vpack.c.b16 %v1448, %v1447
  %v1461 = vpack.c.b16 %v1450, %v1449
  %v1462 = vpack.c.b16 %v1452, %v1451
  %v1463 = vpack.c.b16 %v1454, %v1453
  %v1464 = vpack.c.b16 %v1456, %v1455
  %1473 = vmatprep.subr.bf16.mxu0 0
  %1474 = vmatpush1.bf16.msra.mxu0 %v1457
  %1475 = vmatprep.subr.bf16.mxu0 0
  %1476 = vmatpush1.bf16.msra.mxu0 %v1458
  %1477 = vmatprep.subr.bf16.mxu0 0
  %1478 = vmatpush1.bf16.msra.mxu0 %v1459
  %1479 = vmatprep.subr.bf16.mxu0 0
  %1480 = vmatpush1.bf16.msra.mxu0 %v1460
  %1481 = vmatprep.subr.bf16.mxu0 0
  %1482 = vmatpush1.bf16.msra.mxu0 %v1461
  %1483 = vmatprep.subr.bf16.mxu0 0
  %1484 = vmatpush1.bf16.msra.mxu0 %v1462
  %1485 = vmatprep.subr.bf16.mxu0 0
  %1486 = vmatpush1.bf16.msra.mxu0 %v1463
  %1487 = vmatprep.subr.bf16.mxu0 0
  %1488 = vmatpush1.bf16.msra.mxu0 %v1464
  %1489 = vmatprep.subr.bf16.mxu0 0
  %1490 = vmatpush1.bf16.msra.mxu0 0
  %1491 = vmatprep.subr.bf16.mxu0 0
  %1492 = vmatpush1.bf16.msra.mxu0 0
  %1493 = vmatprep.subr.bf16.mxu0 0
  %1494 = vmatpush1.bf16.msra.mxu0 0
  %1495 = vmatprep.subr.bf16.mxu0 0
  %1496 = vmatpush1.bf16.msra.mxu0 0
  %1497 = vmatprep.subr.bf16.mxu0 0
  %1498 = vmatpush1.bf16.msra.mxu0 0
  %1499 = vmatprep.subr.bf16.mxu0 0
  %1500 = vmatpush1.bf16.msra.mxu0 0
  %1501 = vmatprep.subr.bf16.mxu0 0
  %1502 = vmatpush1.bf16.msra.mxu0 0
  %1503 = vmatprep.subr.bf16.mxu0 0
  %1504 = vmatpush1.bf16.msra.mxu0 0
  %1505 = vmatprep.mubr.bf16.mxu0 0
  %1506 = vmatmul.mubr.bf16.gmra.mrb[0].mxu0 %v1409
  %v1507 = vpop.f32.mrb[0].mxu0
  %v1508 = vadd.f32 %v1376, %v1507
  %v1509 = vpop.f32.mrb[0].mxu0
  %v1510 = vpop.f32.mrb[0].mxu0
  %v1511 = vadd.f32 %v1376, %v1510
  %v1512 = vpop.f32.mrb[0].mxu0
  %1513 = vmatprep.mubr.bf16.mxu0 0
  %1514 = vmatmul.mubr.bf16.gmra.mrb[0].mxu0 %v1410
  %v1515 = vpop.f32.mrb[0].mxu0
  %v1516 = vadd.f32 %v1376, %v1515
  %v1517 = vpop.f32.mrb[0].mxu0
  %v1518 = vpop.f32.mrb[0].mxu0
  %v1519 = vadd.f32 %v1376, %v1518
  %v1520 = vpop.f32.mrb[0].mxu0
  %1521 = vmatprep.mubr.bf16.mxu0 0
  %1522 = vmatmul.mubr.bf16.gmra.mrb[0].mxu0 %v1411
  %v1523 = vpop.f32.mrb[0].mxu0
  %v1524 = vadd.f32 %v1376, %v1523
  %v1525 = vpop.f32.mrb[0].mxu0
  %v1526 = vpop.f32.mrb[0].mxu0
  %v1527 = vadd.f32 %v1376, %v1526
  %v1528 = vpop.f32.mrb[0].mxu0
  %1529 = vmatprep.mubr.bf16.mxu0 0
  %1530 = vmatmul.mubr.bf16.gmra.mrb[0].mxu0 %v1412
  %v1531 = vpop.f32.mrb[0].mxu0
  %v1532 = vadd.f32 %v1376, %v1531
  %v1533 = vpop.f32.mrb[0].mxu0
  %v1534 = vpop.f32.mrb[0].mxu0
  %v1535 = vadd.f32 %v1376, %v1534
  %v1536 = vpop.f32.mrb[0].mxu0
  %1537 = vmatprep.mubr.bf16.mxu0 0
  %1538 = vmatmul.mubr.bf16.gmra.mrb[0].mxu0 %v1413
  %v1539 = vpop.f32.mrb[0].mxu0
  %v1540 = vadd.f32 %v1376, %v1539
  %v1541 = vpop.f32.mrb[0].mxu0
  %v1542 = vpop.f32.mrb[0].mxu0
  %v1543 = vadd.f32 %v1376, %v1542
  %v1544 = vpop.f32.mrb[0].mxu0
  %1545 = vmatprep.mubr.bf16.mxu0 0
  %1546 = vmatmul.mubr.bf16.gmra.mrb[0].mxu0 %v1414
  %v1547 = vpop.f32.mrb[0].mxu0
  %v1548 = vadd.f32 %v1376, %v1547
  %v1549 = vpop.f32.mrb[0].mxu0
  %v1550 = vpop.f32.mrb[0].mxu0
  %v1551 = vadd.f32 %v1376, %v1550
  %v1552 = vpop.f32.mrb[0].mxu0
  %1553 = vmatprep.mubr.bf16.mxu0 0
  %1554 = vmatmul.mubr.bf16.gmra.mrb[0].mxu0 %v1415
  %v1555 = vpop.f32.mrb[0].mxu0
  %v1556 = vadd.f32 %v1376, %v1555
  %v1557 = vpop.f32.mrb[0].mxu0
  %v1558 = vpop.f32.mrb[0].mxu0
  %v1559 = vadd.f32 %v1376, %v1558
  %v1560 = vpop.f32.mrb[0].mxu0
  %1561 = vmatprep.mubr.bf16.mxu0 0
  %1562 = vmatmul.mubr.bf16.gmra.mrb[0].mxu0 %v1416
  %v1563 = vpop.f32.mrb[0].mxu0
  %v1564 = vadd.f32 %v1376, %v1563
  %v1565 = vpop.f32.mrb[0].mxu0
  %v1566 = vpop.f32.mrb[0].mxu0
  %v1567 = vadd.f32 %v1376, %v1566
  %v1568 = vpop.f32.mrb[0].mxu0
  %1569 = vdwg.mxu0
  %v1570 = vmax.f32 %v1508, 0.0
  %v1571 = vmax.f32 %v1511, 0.0
  %v1572 = vmax.f32 %v1516, 0.0
  %v1573 = vmax.f32 %v1519, 0.0
  %v1574 = vmax.f32 %v1524, 0.0
  %v1575 = vmax.f32 %v1527, 0.0
  %v1576 = vmax.f32 %v1532, 0.0
  %v1577 = vmax.f32 %v1535, 0.0
  %v1578 = vmax.f32 %v1540, 0.0
  %v1579 = vmax.f32 %v1543, 0.0
  %v1580 = vmax.f32 %v1548, 0.0
  %v1581 = vmax.f32 %v1551, 0.0
  %v1582 = vmax.f32 %v1556, 0.0
  %v1583 = vmax.f32 %v1559, 0.0
  %v1584 = vmax.f32 %v1564, 0.0
  %v1585 = vmax.f32 %v1567, 0.0
  %v1586 = vadd.f32 %v1321, %v1570
  %v1587 = vadd.f32 %v1322, %v1571
  %v1588 = vadd.f32 %v1323, %v1572
  %v1589 = vadd.f32 %v1324, %v1573
  %v1590 = vadd.f32 %v1325, %v1574
  %v1591 = vadd.f32 %v1326, %v1575
  %v1592 = vadd.f32 %v1327, %v1576
  %v1593 = vadd.f32 %v1328, %v1577
  %v1594 = vadd.f32 %v1329, %v1578
  %v1595 = vadd.f32 %v1330, %v1579
  %v1596 = vadd.f32 %v1331, %v1580
  %v1597 = vadd.f32 %v1332, %v1581
  %v1598 = vadd.f32 %v1333, %v1582
  %v1599 = vadd.f32 %v1334, %v1583
  %v1600 = vadd.f32 %v1335, %v1584
  %v1601 = vadd.f32 %v1336, %v1585
  %s1602 = scalar_lea.vmem %s0, 384
  %v1603 = vld [vmem:[%s1602] sm:$0xf]
  %v1604 = vld [vmem:[%s1602 + $0x4] sm:$0xf]
  %v1605 = vld [vmem:[%s1602 + $0x8] sm:$0xf]
  %v1606 = vld [vmem:[%s1602 + $0xc] sm:$0xf]
  %v1607 = vld [vmem:[%s1602 + $0x10] sm:$0xf]
  %v1608 = vld [vmem:[%s1602 + $0x14] sm:$0xf]
  %v1609 = vld [vmem:[%s1602 + $0x18] sm:$0xf]
  %v1610 = vld [vmem:[%s1602 + $0x1c] sm:$0xf]
  %v1611 = vld [vmem:[%s1602 + $0x20] sm:$0xf]
  %v1612 = vld [vmem:[%s1602 + $0x24] sm:$0xf]
  %v1613 = vld [vmem:[%s1602 + $0x28] sm:$0xf]
  %v1614 = vld [vmem:[%s1602 + $0x2c] sm:$0xf]
  %v1615 = vld [vmem:[%s1602 + $0x30] sm:$0xf]
  %v1616 = vld [vmem:[%s1602 + $0x34] sm:$0xf]
  %v1617 = vld [vmem:[%s1602 + $0x38] sm:$0xf]
  %v1618 = vld [vmem:[%s1602 + $0x3c] sm:$0xf]
  %s1619 = scalar_lea.vmem %s1, 384
  %v1620 = vld [vmem:[%s1619] sm:$0xf]
  %v1621 = vld [vmem:[%s1619 + $0x4] sm:$0xf]
  %v1622 = vld [vmem:[%s1619 + $0x8] sm:$0xf]
  %v1623 = vld [vmem:[%s1619 + $0xc] sm:$0xf]
  %v1624 = vld [vmem:[%s1619 + $0x10] sm:$0xf]
  %v1625 = vld [vmem:[%s1619 + $0x14] sm:$0xf]
  %v1626 = vld [vmem:[%s1619 + $0x18] sm:$0xf]
  %v1627 = vld [vmem:[%s1619 + $0x1c] sm:$0xf]
  %v1628 = vld [vmem:[%s1619 + $0x20] sm:$0xf]
  %v1629 = vld [vmem:[%s1619 + $0x24] sm:$0xf]
  %v1630 = vld [vmem:[%s1619 + $0x28] sm:$0xf]
  %v1631 = vld [vmem:[%s1619 + $0x2c] sm:$0xf]
  %v1632 = vld [vmem:[%s1619 + $0x30] sm:$0xf]
  %v1633 = vld [vmem:[%s1619 + $0x34] sm:$0xf]
  %v1634 = vld [vmem:[%s1619 + $0x38] sm:$0xf]
  %v1635 = vld [vmem:[%s1619 + $0x3c] sm:$0xf]
  %s1636 = scalar_lea.vmem %s2, 48
  %v1637 = vld [vmem:[%s1636] sm:$0xff]
  %v1638 = vlaneseq
  %v1639 = vshrl.u32 %v1638, 7
  %v1640 = vsub.s32 0, %v1639
  %v1641 = vrot.slane %v1637, %v1640
  %v1658 = vunpack.c.l.b16 %v1603
  %v1659 = vunpack.c.l.b16 %v1604
  %v1660 = vunpack.c.l.b16 %v1605
  %v1661 = vunpack.c.l.b16 %v1606
  %v1662 = vunpack.c.l.b16 %v1607
  %v1663 = vunpack.c.l.b16 %v1608
  %v1664 = vunpack.c.l.b16 %v1609
  %v1665 = vunpack.c.l.b16 %v1610
  %v1666 = vunpack.c.l.b16 %v1611
  %v1667 = vunpack.c.l.b16 %v1612
  %v1668 = vunpack.c.l.b16 %v1613
  %v1669 = vunpack.c.l.b16 %v1614
  %v1670 = vunpack.c.l.b16 %v1615
  %v1671 = vunpack.c.l.b16 %v1616
  %v1672 = vunpack.c.l.b16 %v1617
  %v1673 = vunpack.c.l.b16 %v1618
  %v1674 = vpack.c.b16 %v1659, %v1658
  %v1675 = vpack.c.b16 %v1661, %v1660
  %v1676 = vpack.c.b16 %v1663, %v1662
  %v1677 = vpack.c.b16 %v1665, %v1664
  %v1678 = vpack.c.b16 %v1667, %v1666
  %v1679 = vpack.c.b16 %v1669, %v1668
  %v1680 = vpack.c.b16 %v1671, %v1670
  %v1681 = vpack.c.b16 %v1673, %v1672
  %v1706 = vunpack.c.l.b16 %v1620
  %v1707 = vunpack.c.l.b16 %v1621
  %v1708 = vunpack.c.l.b16 %v1622
  %v1709 = vunpack.c.l.b16 %v1623
  %v1710 = vunpack.c.l.b16 %v1624
  %v1711 = vunpack.c.l.b16 %v1625
  %v1712 = vunpack.c.l.b16 %v1626
  %v1713 = vunpack.c.l.b16 %v1627
  %v1714 = vunpack.c.l.b16 %v1628
  %v1715 = vunpack.c.l.b16 %v1629
  %v1716 = vunpack.c.l.b16 %v1630
  %v1717 = vunpack.c.l.b16 %v1631
  %v1718 = vunpack.c.l.b16 %v1632
  %v1719 = vunpack.c.l.b16 %v1633
  %v1720 = vunpack.c.l.b16 %v1634
  %v1721 = vunpack.c.l.b16 %v1635
  %v1722 = vpack.c.b16 %v1707, %v1706
  %v1723 = vpack.c.b16 %v1709, %v1708
  %v1724 = vpack.c.b16 %v1711, %v1710
  %v1725 = vpack.c.b16 %v1713, %v1712
  %v1726 = vpack.c.b16 %v1715, %v1714
  %v1727 = vpack.c.b16 %v1717, %v1716
  %v1728 = vpack.c.b16 %v1719, %v1718
  %v1729 = vpack.c.b16 %v1721, %v1720
  %1738 = vmatprep.subr.bf16.mxu0 0
  %1739 = vmatpush1.bf16.msra.mxu0 %v1722
  %1740 = vmatprep.subr.bf16.mxu0 0
  %1741 = vmatpush1.bf16.msra.mxu0 %v1723
  %1742 = vmatprep.subr.bf16.mxu0 0
  %1743 = vmatpush1.bf16.msra.mxu0 %v1724
  %1744 = vmatprep.subr.bf16.mxu0 0
  %1745 = vmatpush1.bf16.msra.mxu0 %v1725
  %1746 = vmatprep.subr.bf16.mxu0 0
  %1747 = vmatpush1.bf16.msra.mxu0 %v1726
  %1748 = vmatprep.subr.bf16.mxu0 0
  %1749 = vmatpush1.bf16.msra.mxu0 %v1727
  %1750 = vmatprep.subr.bf16.mxu0 0
  %1751 = vmatpush1.bf16.msra.mxu0 %v1728
  %1752 = vmatprep.subr.bf16.mxu0 0
  %1753 = vmatpush1.bf16.msra.mxu0 %v1729
  %1754 = vmatprep.subr.bf16.mxu0 0
  %1755 = vmatpush1.bf16.msra.mxu0 0
  %1756 = vmatprep.subr.bf16.mxu0 0
  %1757 = vmatpush1.bf16.msra.mxu0 0
  %1758 = vmatprep.subr.bf16.mxu0 0
  %1759 = vmatpush1.bf16.msra.mxu0 0
  %1760 = vmatprep.subr.bf16.mxu0 0
  %1761 = vmatpush1.bf16.msra.mxu0 0
  %1762 = vmatprep.subr.bf16.mxu0 0
  %1763 = vmatpush1.bf16.msra.mxu0 0
  %1764 = vmatprep.subr.bf16.mxu0 0
  %1765 = vmatpush1.bf16.msra.mxu0 0
  %1766 = vmatprep.subr.bf16.mxu0 0
  %1767 = vmatpush1.bf16.msra.mxu0 0
  %1768 = vmatprep.subr.bf16.mxu0 0
  %1769 = vmatpush1.bf16.msra.mxu0 0
  %1770 = vmatprep.mubr.bf16.mxu0 0
  %1771 = vmatmul.mubr.bf16.gmra.mrb[0].mxu0 %v1674
  %v1772 = vpop.f32.mrb[0].mxu0
  %v1773 = vadd.f32 %v1641, %v1772
  %v1774 = vpop.f32.mrb[0].mxu0
  %v1775 = vpop.f32.mrb[0].mxu0
  %v1776 = vadd.f32 %v1641, %v1775
  %v1777 = vpop.f32.mrb[0].mxu0
  %1778 = vmatprep.mubr.bf16.mxu0 0
  %1779 = vmatmul.mubr.bf16.gmra.mrb[0].mxu0 %v1675
  %v1780 = vpop.f32.mrb[0].mxu0
  %v1781 = vadd.f32 %v1641, %v1780
  %v1782 = vpop.f32.mrb[0].mxu0
  %v1783 = vpop.f32.mrb[0].mxu0
  %v1784 = vadd.f32 %v1641, %v1783
  %v1785 = vpop.f32.mrb[0].mxu0
  %1786 = vmatprep.mubr.bf16.mxu0 0
  %1787 = vmatmul.mubr.bf16.gmra.mrb[0].mxu0 %v1676
  %v1788 = vpop.f32.mrb[0].mxu0
  %v1789 = vadd.f32 %v1641, %v1788
  %v1790 = vpop.f32.mrb[0].mxu0
  %v1791 = vpop.f32.mrb[0].mxu0
  %v1792 = vadd.f32 %v1641, %v1791
  %v1793 = vpop.f32.mrb[0].mxu0
  %1794 = vmatprep.mubr.bf16.mxu0 0
  %1795 = vmatmul.mubr.bf16.gmra.mrb[0].mxu0 %v1677
  %v1796 = vpop.f32.mrb[0].mxu0
  %v1797 = vadd.f32 %v1641, %v1796
  %v1798 = vpop.f32.mrb[0].mxu0
  %v1799 = vpop.f32.mrb[0].mxu0
  %v1800 = vadd.f32 %v1641, %v1799
  %v1801 = vpop.f32.mrb[0].mxu0
  %1802 = vmatprep.mubr.bf16.mxu0 0
  %1803 = vmatmul.mubr.bf16.gmra.mrb[0].mxu0 %v1678
  %v1804 = vpop.f32.mrb[0].mxu0
  %v1805 = vadd.f32 %v1641, %v1804
  %v1806 = vpop.f32.mrb[0].mxu0
  %v1807 = vpop.f32.mrb[0].mxu0
  %v1808 = vadd.f32 %v1641, %v1807
  %v1809 = vpop.f32.mrb[0].mxu0
  %1810 = vmatprep.mubr.bf16.mxu0 0
  %1811 = vmatmul.mubr.bf16.gmra.mrb[0].mxu0 %v1679
  %v1812 = vpop.f32.mrb[0].mxu0
  %v1813 = vadd.f32 %v1641, %v1812
  %v1814 = vpop.f32.mrb[0].mxu0
  %v1815 = vpop.f32.mrb[0].mxu0
  %v1816 = vadd.f32 %v1641, %v1815
  %v1817 = vpop.f32.mrb[0].mxu0
  %1818 = vmatprep.mubr.bf16.mxu0 0
  %1819 = vmatmul.mubr.bf16.gmra.mrb[0].mxu0 %v1680
  %v1820 = vpop.f32.mrb[0].mxu0
  %v1821 = vadd.f32 %v1641, %v1820
  %v1822 = vpop.f32.mrb[0].mxu0
  %v1823 = vpop.f32.mrb[0].mxu0
  %v1824 = vadd.f32 %v1641, %v1823
  %v1825 = vpop.f32.mrb[0].mxu0
  %1826 = vmatprep.mubr.bf16.mxu0 0
  %1827 = vmatmul.mubr.bf16.gmra.mrb[0].mxu0 %v1681
  %v1828 = vpop.f32.mrb[0].mxu0
  %v1829 = vadd.f32 %v1641, %v1828
  %v1830 = vpop.f32.mrb[0].mxu0
  %v1831 = vpop.f32.mrb[0].mxu0
  %v1832 = vadd.f32 %v1641, %v1831
  %v1833 = vpop.f32.mrb[0].mxu0
  %1834 = vdwg.mxu0
  %v1835 = vmax.f32 %v1773, 0.0
  %v1836 = vmax.f32 %v1776, 0.0
  %v1837 = vmax.f32 %v1781, 0.0
  %v1838 = vmax.f32 %v1784, 0.0
  %v1839 = vmax.f32 %v1789, 0.0
  %v1840 = vmax.f32 %v1792, 0.0
  %v1841 = vmax.f32 %v1797, 0.0
  %v1842 = vmax.f32 %v1800, 0.0
  %v1843 = vmax.f32 %v1805, 0.0
  %v1844 = vmax.f32 %v1808, 0.0
  %v1845 = vmax.f32 %v1813, 0.0
  %v1846 = vmax.f32 %v1816, 0.0
  %v1847 = vmax.f32 %v1821, 0.0
  %v1848 = vmax.f32 %v1824, 0.0
  %v1849 = vmax.f32 %v1829, 0.0
  %v1850 = vmax.f32 %v1832, 0.0
  %v1851 = vadd.f32 %v1586, %v1835
  %v1852 = vadd.f32 %v1587, %v1836
  %v1853 = vadd.f32 %v1588, %v1837
  %v1854 = vadd.f32 %v1589, %v1838
  %v1855 = vadd.f32 %v1590, %v1839
  %v1856 = vadd.f32 %v1591, %v1840
  %v1857 = vadd.f32 %v1592, %v1841
  %v1858 = vadd.f32 %v1593, %v1842
  %v1859 = vadd.f32 %v1594, %v1843
  %v1860 = vadd.f32 %v1595, %v1844
  %v1861 = vadd.f32 %v1596, %v1845
  %v1862 = vadd.f32 %v1597, %v1846
  %v1863 = vadd.f32 %v1598, %v1847
  %v1864 = vadd.f32 %v1599, %v1848
  %v1865 = vadd.f32 %v1600, %v1849
  %v1866 = vadd.f32 %v1601, %v1850
  %s1867 = scalar_lea.vmem %s0, 448
  %v1868 = vld [vmem:[%s1867] sm:$0xf]
  %v1869 = vld [vmem:[%s1867 + $0x4] sm:$0xf]
  %v1870 = vld [vmem:[%s1867 + $0x8] sm:$0xf]
  %v1871 = vld [vmem:[%s1867 + $0xc] sm:$0xf]
  %v1872 = vld [vmem:[%s1867 + $0x10] sm:$0xf]
  %v1873 = vld [vmem:[%s1867 + $0x14] sm:$0xf]
  %v1874 = vld [vmem:[%s1867 + $0x18] sm:$0xf]
  %v1875 = vld [vmem:[%s1867 + $0x1c] sm:$0xf]
  %v1876 = vld [vmem:[%s1867 + $0x20] sm:$0xf]
  %v1877 = vld [vmem:[%s1867 + $0x24] sm:$0xf]
  %v1878 = vld [vmem:[%s1867 + $0x28] sm:$0xf]
  %v1879 = vld [vmem:[%s1867 + $0x2c] sm:$0xf]
  %v1880 = vld [vmem:[%s1867 + $0x30] sm:$0xf]
  %v1881 = vld [vmem:[%s1867 + $0x34] sm:$0xf]
  %v1882 = vld [vmem:[%s1867 + $0x38] sm:$0xf]
  %v1883 = vld [vmem:[%s1867 + $0x3c] sm:$0xf]
  %s1884 = scalar_lea.vmem %s1, 448
  %v1885 = vld [vmem:[%s1884] sm:$0xf]
  %v1886 = vld [vmem:[%s1884 + $0x4] sm:$0xf]
  %v1887 = vld [vmem:[%s1884 + $0x8] sm:$0xf]
  %v1888 = vld [vmem:[%s1884 + $0xc] sm:$0xf]
  %v1889 = vld [vmem:[%s1884 + $0x10] sm:$0xf]
  %v1890 = vld [vmem:[%s1884 + $0x14] sm:$0xf]
  %v1891 = vld [vmem:[%s1884 + $0x18] sm:$0xf]
  %v1892 = vld [vmem:[%s1884 + $0x1c] sm:$0xf]
  %v1893 = vld [vmem:[%s1884 + $0x20] sm:$0xf]
  %v1894 = vld [vmem:[%s1884 + $0x24] sm:$0xf]
  %v1895 = vld [vmem:[%s1884 + $0x28] sm:$0xf]
  %v1896 = vld [vmem:[%s1884 + $0x2c] sm:$0xf]
  %v1897 = vld [vmem:[%s1884 + $0x30] sm:$0xf]
  %v1898 = vld [vmem:[%s1884 + $0x34] sm:$0xf]
  %v1899 = vld [vmem:[%s1884 + $0x38] sm:$0xf]
  %v1900 = vld [vmem:[%s1884 + $0x3c] sm:$0xf]
  %s1901 = scalar_lea.vmem %s2, 56
  %v1902 = vld [vmem:[%s1901] sm:$0xff]
  %v1903 = vlaneseq
  %v1904 = vshrl.u32 %v1903, 7
  %v1905 = vsub.s32 0, %v1904
  %v1906 = vrot.slane %v1902, %v1905
  %v1923 = vunpack.c.l.b16 %v1868
  %v1924 = vunpack.c.l.b16 %v1869
  %v1925 = vunpack.c.l.b16 %v1870
  %v1926 = vunpack.c.l.b16 %v1871
  %v1927 = vunpack.c.l.b16 %v1872
  %v1928 = vunpack.c.l.b16 %v1873
  %v1929 = vunpack.c.l.b16 %v1874
  %v1930 = vunpack.c.l.b16 %v1875
  %v1931 = vunpack.c.l.b16 %v1876
  %v1932 = vunpack.c.l.b16 %v1877
  %v1933 = vunpack.c.l.b16 %v1878
  %v1934 = vunpack.c.l.b16 %v1879
  %v1935 = vunpack.c.l.b16 %v1880
  %v1936 = vunpack.c.l.b16 %v1881
  %v1937 = vunpack.c.l.b16 %v1882
  %v1938 = vunpack.c.l.b16 %v1883
  %v1939 = vpack.c.b16 %v1924, %v1923
  %v1940 = vpack.c.b16 %v1926, %v1925
  %v1941 = vpack.c.b16 %v1928, %v1927
  %v1942 = vpack.c.b16 %v1930, %v1929
  %v1943 = vpack.c.b16 %v1932, %v1931
  %v1944 = vpack.c.b16 %v1934, %v1933
  %v1945 = vpack.c.b16 %v1936, %v1935
  %v1946 = vpack.c.b16 %v1938, %v1937
  %v1971 = vunpack.c.l.b16 %v1885
  %v1972 = vunpack.c.l.b16 %v1886
  %v1973 = vunpack.c.l.b16 %v1887
  %v1974 = vunpack.c.l.b16 %v1888
  %v1975 = vunpack.c.l.b16 %v1889
  %v1976 = vunpack.c.l.b16 %v1890
  %v1977 = vunpack.c.l.b16 %v1891
  %v1978 = vunpack.c.l.b16 %v1892
  %v1979 = vunpack.c.l.b16 %v1893
  %v1980 = vunpack.c.l.b16 %v1894
  %v1981 = vunpack.c.l.b16 %v1895
  %v1982 = vunpack.c.l.b16 %v1896
  %v1983 = vunpack.c.l.b16 %v1897
  %v1984 = vunpack.c.l.b16 %v1898
  %v1985 = vunpack.c.l.b16 %v1899
  %v1986 = vunpack.c.l.b16 %v1900
  %v1987 = vpack.c.b16 %v1972, %v1971
  %v1988 = vpack.c.b16 %v1974, %v1973
  %v1989 = vpack.c.b16 %v1976, %v1975
  %v1990 = vpack.c.b16 %v1978, %v1977
  %v1991 = vpack.c.b16 %v1980, %v1979
  %v1992 = vpack.c.b16 %v1982, %v1981
  %v1993 = vpack.c.b16 %v1984, %v1983
  %v1994 = vpack.c.b16 %v1986, %v1985
  %2003 = vmatprep.subr.bf16.mxu0 0
  %2004 = vmatpush1.bf16.msra.mxu0 %v1987
  %2005 = vmatprep.subr.bf16.mxu0 0
  %2006 = vmatpush1.bf16.msra.mxu0 %v1988
  %2007 = vmatprep.subr.bf16.mxu0 0
  %2008 = vmatpush1.bf16.msra.mxu0 %v1989
  %2009 = vmatprep.subr.bf16.mxu0 0
  %2010 = vmatpush1.bf16.msra.mxu0 %v1990
  %2011 = vmatprep.subr.bf16.mxu0 0
  %2012 = vmatpush1.bf16.msra.mxu0 %v1991
  %2013 = vmatprep.subr.bf16.mxu0 0
  %2014 = vmatpush1.bf16.msra.mxu0 %v1992
  %2015 = vmatprep.subr.bf16.mxu0 0
  %2016 = vmatpush1.bf16.msra.mxu0 %v1993
  %2017 = vmatprep.subr.bf16.mxu0 0
  %2018 = vmatpush1.bf16.msra.mxu0 %v1994
  %2019 = vmatprep.subr.bf16.mxu0 0
  %2020 = vmatpush1.bf16.msra.mxu0 0
  %2021 = vmatprep.subr.bf16.mxu0 0
  %2022 = vmatpush1.bf16.msra.mxu0 0
  %2023 = vmatprep.subr.bf16.mxu0 0
  %2024 = vmatpush1.bf16.msra.mxu0 0
  %2025 = vmatprep.subr.bf16.mxu0 0
  %2026 = vmatpush1.bf16.msra.mxu0 0
  %2027 = vmatprep.subr.bf16.mxu0 0
  %2028 = vmatpush1.bf16.msra.mxu0 0
  %2029 = vmatprep.subr.bf16.mxu0 0
  %2030 = vmatpush1.bf16.msra.mxu0 0
  %2031 = vmatprep.subr.bf16.mxu0 0
  %2032 = vmatpush1.bf16.msra.mxu0 0
  %2033 = vmatprep.subr.bf16.mxu0 0
  %2034 = vmatpush1.bf16.msra.mxu0 0
  %2035 = vmatprep.mubr.bf16.mxu0 0
  %2036 = vmatmul.mubr.bf16.gmra.mrb[0].mxu0 %v1939
  %v2037 = vpop.f32.mrb[0].mxu0
  %v2038 = vadd.f32 %v1906, %v2037
  %v2039 = vpop.f32.mrb[0].mxu0
  %v2040 = vpop.f32.mrb[0].mxu0
  %v2041 = vadd.f32 %v1906, %v2040
  %v2042 = vpop.f32.mrb[0].mxu0
  %2043 = vmatprep.mubr.bf16.mxu0 0
  %2044 = vmatmul.mubr.bf16.gmra.mrb[0].mxu0 %v1940
  %v2045 = vpop.f32.mrb[0].mxu0
  %v2046 = vadd.f32 %v1906, %v2045
  %v2047 = vpop.f32.mrb[0].mxu0
  %v2048 = vpop.f32.mrb[0].mxu0
  %v2049 = vadd.f32 %v1906, %v2048
  %v2050 = vpop.f32.mrb[0].mxu0
  %2051 = vmatprep.mubr.bf16.mxu0 0
  %2052 = vmatmul.mubr.bf16.gmra.mrb[0].mxu0 %v1941
  %v2053 = vpop.f32.mrb[0].mxu0
  %v2054 = vadd.f32 %v1906, %v2053
  %v2055 = vpop.f32.mrb[0].mxu0
  %v2056 = vpop.f32.mrb[0].mxu0
  %v2057 = vadd.f32 %v1906, %v2056
  %v2058 = vpop.f32.mrb[0].mxu0
  %2059 = vmatprep.mubr.bf16.mxu0 0
  %2060 = vmatmul.mubr.bf16.gmra.mrb[0].mxu0 %v1942
  %v2061 = vpop.f32.mrb[0].mxu0
  %v2062 = vadd.f32 %v1906, %v2061
  %v2063 = vpop.f32.mrb[0].mxu0
  %v2064 = vpop.f32.mrb[0].mxu0
  %v2065 = vadd.f32 %v1906, %v2064
  %v2066 = vpop.f32.mrb[0].mxu0
  %2067 = vmatprep.mubr.bf16.mxu0 0
  %2068 = vmatmul.mubr.bf16.gmra.mrb[0].mxu0 %v1943
  %v2069 = vpop.f32.mrb[0].mxu0
  %v2070 = vadd.f32 %v1906, %v2069
  %v2071 = vpop.f32.mrb[0].mxu0
  %v2072 = vpop.f32.mrb[0].mxu0
  %v2073 = vadd.f32 %v1906, %v2072
  %v2074 = vpop.f32.mrb[0].mxu0
  %2075 = vmatprep.mubr.bf16.mxu0 0
  %2076 = vmatmul.mubr.bf16.gmra.mrb[0].mxu0 %v1944
  %v2077 = vpop.f32.mrb[0].mxu0
  %v2078 = vadd.f32 %v1906, %v2077
  %v2079 = vpop.f32.mrb[0].mxu0
  %v2080 = vpop.f32.mrb[0].mxu0
  %v2081 = vadd.f32 %v1906, %v2080
  %v2082 = vpop.f32.mrb[0].mxu0
  %2083 = vmatprep.mubr.bf16.mxu0 0
  %2084 = vmatmul.mubr.bf16.gmra.mrb[0].mxu0 %v1945
  %v2085 = vpop.f32.mrb[0].mxu0
  %v2086 = vadd.f32 %v1906, %v2085
  %v2087 = vpop.f32.mrb[0].mxu0
  %v2088 = vpop.f32.mrb[0].mxu0
  %v2089 = vadd.f32 %v1906, %v2088
  %v2090 = vpop.f32.mrb[0].mxu0
  %2091 = vmatprep.mubr.bf16.mxu0 0
  %2092 = vmatmul.mubr.bf16.gmra.mrb[0].mxu0 %v1946
  %v2093 = vpop.f32.mrb[0].mxu0
  %v2094 = vadd.f32 %v1906, %v2093
  %v2095 = vpop.f32.mrb[0].mxu0
  %v2096 = vpop.f32.mrb[0].mxu0
  %v2097 = vadd.f32 %v1906, %v2096
  %v2098 = vpop.f32.mrb[0].mxu0
  %2099 = vdwg.mxu0
  %v2100 = vmax.f32 %v2038, 0.0
  %v2101 = vmax.f32 %v2041, 0.0
  %v2102 = vmax.f32 %v2046, 0.0
  %v2103 = vmax.f32 %v2049, 0.0
  %v2104 = vmax.f32 %v2054, 0.0
  %v2105 = vmax.f32 %v2057, 0.0
  %v2106 = vmax.f32 %v2062, 0.0
  %v2107 = vmax.f32 %v2065, 0.0
  %v2108 = vmax.f32 %v2070, 0.0
  %v2109 = vmax.f32 %v2073, 0.0
  %v2110 = vmax.f32 %v2078, 0.0
  %v2111 = vmax.f32 %v2081, 0.0
  %v2112 = vmax.f32 %v2086, 0.0
  %v2113 = vmax.f32 %v2089, 0.0
  %v2114 = vmax.f32 %v2094, 0.0
  %v2115 = vmax.f32 %v2097, 0.0
  %v2116 = vadd.f32 %v1851, %v2100
  %v2117 = vadd.f32 %v1852, %v2101
  %v2118 = vadd.f32 %v1853, %v2102
  %v2119 = vadd.f32 %v1854, %v2103
  %v2120 = vadd.f32 %v1855, %v2104
  %v2121 = vadd.f32 %v1856, %v2105
  %v2122 = vadd.f32 %v1857, %v2106
  %v2123 = vadd.f32 %v1858, %v2107
  %v2124 = vadd.f32 %v1859, %v2108
  %v2125 = vadd.f32 %v1860, %v2109
  %v2126 = vadd.f32 %v1861, %v2110
  %v2127 = vadd.f32 %v1862, %v2111
  %v2128 = vadd.f32 %v1863, %v2112
  %v2129 = vadd.f32 %v1864, %v2113
  %v2130 = vadd.f32 %v1865, %v2114
  %v2131 = vadd.f32 %v1866, %v2115
  %v2132 = vpack.c.bf16 %v2117, %v2116
  %v2133 = vpack.c.bf16 %v2119, %v2118
  %v2134 = vpack.c.bf16 %v2121, %v2120
  %v2135 = vpack.c.bf16 %v2123, %v2122
  %v2136 = vpack.c.bf16 %v2125, %v2124
  %v2137 = vpack.c.bf16 %v2127, %v2126
  %v2138 = vpack.c.bf16 %v2129, %v2128
  %v2139 = vpack.c.bf16 %v2131, %v2130
  %v2148 = vunpack.c.l.b16 %v2132
  %v2149 = vunpack.c.h.b16 %v2132
  %v2150 = vunpack.c.l.b16 %v2133
  %v2151 = vunpack.c.h.b16 %v2133
  %v2152 = vunpack.c.l.b16 %v2134
  %v2153 = vunpack.c.h.b16 %v2134
  %v2154 = vunpack.c.l.b16 %v2135
  %v2155 = vunpack.c.h.b16 %v2135
  %v2156 = vunpack.c.l.b16 %v2136
  %v2157 = vunpack.c.h.b16 %v2136
  %v2158 = vunpack.c.l.b16 %v2137
  %v2159 = vunpack.c.h.b16 %v2137
  %v2160 = vunpack.c.l.b16 %v2138
  %v2161 = vunpack.c.h.b16 %v2138
  %v2162 = vunpack.c.l.b16 %v2139
  %v2163 = vunpack.c.h.b16 %v2139
  %v2164 = vpack.c.b16 %v2148, %v2148
  %v2165 = vpack.c.b16 %v2149, %v2149
  %v2166 = vpack.c.b16 %v2150, %v2150
  %v2167 = vpack.c.b16 %v2151, %v2151
  %v2168 = vpack.c.b16 %v2152, %v2152
  %v2169 = vpack.c.b16 %v2153, %v2153
  %v2170 = vpack.c.b16 %v2154, %v2154
  %v2171 = vpack.c.b16 %v2155, %v2155
  %v2172 = vpack.c.b16 %v2156, %v2156
  %v2173 = vpack.c.b16 %v2157, %v2157
  %v2174 = vpack.c.b16 %v2158, %v2158
  %v2175 = vpack.c.b16 %v2159, %v2159
  %v2176 = vpack.c.b16 %v2160, %v2160
  %v2177 = vpack.c.b16 %v2161, %v2161
  %v2178 = vpack.c.b16 %v2162, %v2162
  %v2179 = vpack.c.b16 %v2163, %v2163
  %2196 = vst [vmem:[%s3] sm:$0xf] %v2164
  %2197 = vst [vmem:[%s3 + $0x4] sm:$0xf] %v2165
  %2198 = vst [vmem:[%s3 + $0x8] sm:$0xf] %v2166
  %2199 = vst [vmem:[%s3 + $0xc] sm:$0xf] %v2167
  %2200 = vst [vmem:[%s3 + $0x10] sm:$0xf] %v2168
  %2201 = vst [vmem:[%s3 + $0x14] sm:$0xf] %v2169
  %2202 = vst [vmem:[%s3 + $0x18] sm:$0xf] %v2170
  %2203 = vst [vmem:[%s3 + $0x1c] sm:$0xf] %v2171
  %2204 = vst [vmem:[%s3 + $0x20] sm:$0xf] %v2172
  %2205 = vst [vmem:[%s3 + $0x24] sm:$0xf] %v2173
  %2206 = vst [vmem:[%s3 + $0x28] sm:$0xf] %v2174
  %2207 = vst [vmem:[%s3 + $0x2c] sm:$0xf] %v2175
  %2208 = vst [vmem:[%s3 + $0x30] sm:$0xf] %v2176
  %2209 = vst [vmem:[%s3 + $0x34] sm:$0xf] %v2177
  %2210 = vst [vmem:[%s3 + $0x38] sm:$0xf] %v2178
  %2211 = vst [vmem:[%s3 + $0x3c] sm:$0xf] %v2179
  // Predicated region
  $region14: #{arfaf_net_forward.13} parent=0 // pred_check
    _
  $region15: #{arfaf_net_forward.13} parent=0 // pred_check_branch
    %2213 = sbr.rel (0) target = $region17
  $region16: #{arfaf_net_forward.13} parent=0 // pred_region
    _
  $region17: #{arfaf_net_forward.13} parent=0 // pred_fallthru
    _
  // Predicated region
  $region18: #{arfaf_net_forward.13} parent=0 // pred_check
    _
  $region19: #{arfaf_net_forward.13} parent=0 // pred_check_branch
    %2215 = sbr.rel (0) target = $region21
  $region20: #{arfaf_net_forward.13} parent=0 // pred_region
    _
  $region21: #{arfaf_net_forward.13} parent=0 // pred_fallthru
    _

</llo_original>
